<compile_context>
chip_gen: v5e
topology: v5e:2x2
jax: 0.10.0
libtpu: 0.0.40
codegen_flags: <defaults>
</compile_context>

<pallas_src>
import math

import jax
import jax.numpy as jnp
from jax import lax
from jax.experimental import pallas as pl
from jax.experimental.pallas import tpu as pltpu

# Module hyper-parameters (nn.TransformerEncoderLayer defaults for the rest).
INPUT_DIM = 4
PAD_IN = 8                     # padded input dim (sublane-aligned wi block)
NUM_HEADS = 4
NUM_LAYERS = 2
HIDDEN = 128
FF = 2048                      # default dim_feedforward
NUM_CLASSES = 10
OUT_PAD = 128                  # lane-dense padded classifier width
HEAD_DIM = HIDDEN // NUM_HEADS
LN_EPS = 1e-5                  # default layer_norm_eps
NEG_INF = -1e30


def _layer_norm(x, w, b):
    mu = jnp.mean(x, axis=-1, keepdims=True)
    xc = x - mu
    var = jnp.mean(xc * xc, axis=-1, keepdims=True)
    return xc * lax.rsqrt(var + LN_EPS) * w + b


def transformer_kernel(
    bias_ref, hm_ref, poolw_ref, x_ref, wi_ref, bi_ref,
    inw_ref, inb_ref, outw_ref, outb_ref,
    w1_ref, s1_ref, b1_ref, w2_ref, s2_ref, b2_ref,
    n1w_ref, n1b_ref, n2w_ref, n2b_ref,
    fcw_ref, fcb_ref,
    out_ref,
    h_scratch,
):
    layer = pl.program_id(0)
    BS = x_ref.shape[0]                                   # batch * seq rows

    # ---- layer-0 prologue: input_linear on all B*S rows at once ----
    @pl.when(layer == 0)
    def _():
        h0 = jnp.dot(x_ref[...], wi_ref[...],
                     preferred_element_type=jnp.float32) + bi_ref[...]
        h_scratch[...] = h0

    h = h_scratch[...]                                    # (BS, H) f32

    # Per-layer parameters (leading layer dim sliced away).
    inw = inw_ref[0]                                      # (H, 3H) bf16
    inb = inb_ref[0]                                      # (1, 3H) f32
    outw = outw_ref[0]                                    # (H, H)  bf16
    outb = outb_ref[0]
    n1w = n1w_ref[0]
    n1b = n1b_ref[0]
    n2w = n2w_ref[0]
    n2b = n2b_ref[0]

    # ---- self-attention block (post-norm; dropout identity in eval) ----
    qkv = jnp.dot(h.astype(jnp.bfloat16), inw,
                  preferred_element_type=jnp.float32) + inb          # (BS, 3H) f32
    q = qkv[:, :HIDDEN]                                   # 128-lane aligned slices
    k = qkv[:, HIDDEN:2 * HIDDEN]
    v = qkv[:, 2 * HIDDEN:]

    scale = 1.0 / math.sqrt(HEAD_DIM)
    qs = q * scale
    hm = hm_ref[...]                                      # (NH*BS, H) static head mask
    # Replicate Q per head (row blocks) and zero out other heads' columns so one matmul
    # produces all per-head score blocks (no 32-lane column slices).
    qexp = jnp.concatenate([qs, qs, qs, qs], axis=0) * hm             # (NH*BS, H) f32

    s = lax.dot_general(qexp.astype(jnp.bfloat16), k.astype(jnp.bfloat16),
                        (((1,), (1,)), ((), ())),
                        preferred_element_type=jnp.float32)           # (NH*BS, BS) f32
    s = s + bias_ref[...].astype(jnp.float32)             # key-padding + same-batch bias
    m = jnp.max(s, axis=-1, keepdims=True)
    p = jnp.exp(s - m)
    p = p * pl.reciprocal(jnp.sum(p, axis=-1, keepdims=True), approx=True)

    c = jnp.dot(p.astype(jnp.bfloat16), v.astype(jnp.bfloat16),
                preferred_element_type=jnp.float32)                   # (NH*BS, H) f32
    # Collapse the per-head row blocks back into the concatenated-head context.
    ctx = jnp.zeros((BS, HIDDEN), jnp.float32)
    for hh in range(NUM_HEADS):                           # static, sublane-aligned slices
        ctx = ctx + c[hh * BS:(hh + 1) * BS, :] * hm[hh * BS:hh * BS + 1, :]

    attn = jnp.dot(ctx.astype(jnp.bfloat16), outw,
                   preferred_element_type=jnp.float32) + outb
    h1 = _layer_norm(h + attn, n1w, n1b)

    # ---- feed-forward block (int8 weights, dequantized to bf16; scale applied to f32 acc) ----
    w1 = w1_ref[0].astype(jnp.bfloat16)                   # int8 -> bf16 (exact)
    ff = jnp.dot(h1.astype(jnp.bfloat16), w1,
                 preferred_element_type=jnp.float32) * s1_ref[0] + b1_ref[0]
    ff = jnp.maximum(ff, 0.0)                                         # relu
    w2 = w2_ref[0].astype(jnp.bfloat16)
    ff = jnp.dot(ff.astype(jnp.bfloat16), w2,
                 preferred_element_type=jnp.float32) * s2_ref[0] + b2_ref[0]
    h2 = _layer_norm(h1 + ff, n2w, n2b)
    h_scratch[...] = h2

    # ---- epilogue: masked mean pooling (as matmul) + classifier ----
    # out_ref's block index is constant across the grid, so HBM writeback happens once, after
    # this final step; skipping the write on step 0 never flushes uninitialized VMEM.
    @pl.when(layer == pl.num_programs(0) - 1)
    def _():
        pooled = jnp.dot(poolw_ref[...], h2.astype(jnp.bfloat16),
                         preferred_element_type=jnp.float32)          # (B, H)
        logits = jnp.dot(pooled.astype(jnp.bfloat16), fcw_ref[...],
                         preferred_element_type=jnp.float32) + fcb_ref[...]
        out_ref[...] = logits.astype(out_ref.dtype)


def _quantize_int8(w):
    """Symmetric per-output-channel int8 quantization of (L, K, N) weights."""
    amax = jnp.max(jnp.abs(w), axis=-2, keepdims=True)                # (L, 1, N)
    scale = jnp.maximum(amax, 1e-8) / 127.0
    wq = jnp.clip(jnp.round(w / scale), -127.0, 127.0).astype(jnp.int8)
    return wq, scale.astype(jnp.float32)


def student_transformer_forward(x, mask, params):
    B, S, _ = x.shape
    BS = B * S
    x_flat = x.reshape(BS, INPUT_DIM).astype(jnp.float32)
    x_flat = jnp.pad(x_flat, ((0, 0), (0, PAD_IN - INPUT_DIM)))       # align input dim
    wi = jnp.pad(params["wi"], ((0, PAD_IN - INPUT_DIM), (0, 0)))
    mask = mask.astype(jnp.float32)

    # bf16 copies of streamed weights; int8 + per-channel scales for the big FF matrices.
    inw = params["inw"].astype(jnp.bfloat16)
    outw = params["outw"].astype(jnp.bfloat16)
    w1q, s1 = _quantize_int8(params["w1"])
    w2q, s2 = _quantize_int8(params["w2"])

    # Lane-dense classifier: pad to 128 output columns, slice after the kernel.
    fcw = jnp.pad(params["fcw"], ((0, 0), (0, OUT_PAD - NUM_CLASSES))).astype(jnp.bfloat16)
    fcb = jnp.pad(params["fcb"], ((0, 0), (0, OUT_PAD - NUM_CLASSES)))

    # Additive attention bias over flattened (B*S) keys, replicated per head block:
    #   0 where the key is a valid token of the same batch element, NEG_INF otherwise.
    # (PyTorch key_padding_mask = (mask == 0): nonzero mask entries are valid tokens.)
    rb = jnp.arange(BS, dtype=jnp.int32)[:, None] // S
    cb = jnp.arange(BS, dtype=jnp.int32)[None, :] // S
    attendable = (rb == cb) & (mask.reshape(1, BS) != 0.0)
    attn_bias = jnp.where(attendable, 0.0, NEG_INF)                   # (BS, BS)
    bias_rep = jnp.tile(attn_bias, (NUM_HEADS, 1)).astype(jnp.bfloat16)  # (NH*BS, BS)

    # Static block-diagonal head mask: M[h*BS+q, d] = 1 iff column d belongs to head h.
    row_head = jnp.arange(NUM_HEADS * BS, dtype=jnp.int32)[:, None] // BS
    col_head = jnp.arange(HIDDEN, dtype=jnp.int32)[None, :] // HEAD_DIM
    head_mask = (row_head == col_head).astype(jnp.float32)            # (NH*BS, H)

    # Masked mean pooling as a matmul: pool_w[b, b*S+s] = mask[b, s] / sum(mask[b]).
    # Guard against fully-padded rows (all-zero mask) to avoid NaNs.
    msum = jnp.maximum(jnp.sum(mask, axis=1, keepdims=True), 1.0)     # (B, 1)
    row_b = jnp.arange(B, dtype=jnp.int32)[:, None]                   # (B, 1)
    pool_w = (jnp.where(row_b == cb, mask.reshape(1, BS), 0.0) / msum).astype(jnp.bfloat16)

    args = (bias_rep, head_mask, pool_w, x_flat, wi, params["bi"],
            inw, params["inb"], outw, params["outb"],
            w1q, s1, params["b1"], w2q, s2, params["b2"],
            params["n1w"], params["n1b"], params["n2w"], params["n2b"],
            fcw, fcb)

    def const2(l):
        return (0, 0)

    def per_layer(l):
        return (l, 0, 0)

    in_specs = [
        pl.BlockSpec((NUM_HEADS * BS, BS), const2),          # bias_rep (bf16)
        pl.BlockSpec((NUM_HEADS * BS, HIDDEN), const2),      # head_mask (f32)
        pl.BlockSpec((B, BS), const2),                       # pool_w (bf16)
        pl.BlockSpec((BS, PAD_IN), const2),                  # x_flat
        pl.BlockSpec((PAD_IN, HIDDEN), const2),              # wi
        pl.BlockSpec((1, HIDDEN), const2),                   # bi
        pl.BlockSpec((1, HIDDEN, 3 * HIDDEN), per_layer),    # inw (bf16)
        pl.BlockSpec((1, 1, 3 * HIDDEN), per_layer),         # inb
        pl.BlockSpec((1, HIDDEN, HIDDEN), per_layer),        # outw (bf16)
        pl.BlockSpec((1, 1, HIDDEN), per_layer),             # outb
        pl.BlockSpec((1, HIDDEN, FF), per_layer),            # w1q (int8)
        pl.BlockSpec((1, 1, FF), per_layer),                 # s1
        pl.BlockSpec((1, 1, FF), per_layer),                 # b1
        pl.BlockSpec((1, FF, HIDDEN), per_layer),            # w2q (int8)
        pl.BlockSpec((1, 1, HIDDEN), per_layer),             # s2
        pl.BlockSpec((1, 1, HIDDEN), per_layer),             # b2
        pl.BlockSpec((1, 1, HIDDEN), per_layer),             # n1w
        pl.BlockSpec((1, 1, HIDDEN), per_layer),             # n1b
        pl.BlockSpec((1, 1, HIDDEN), per_layer),             # n2w
        pl.BlockSpec((1, 1, HIDDEN), per_layer),             # n2b
        pl.BlockSpec((HIDDEN, OUT_PAD), const2),             # fcw (bf16)
        pl.BlockSpec((1, OUT_PAD), const2),                  # fcb
    ]

    out_padded = pl.pallas_call(
        transformer_kernel,
        out_shape=jax.ShapeDtypeStruct((B, OUT_PAD), jnp.float32),
        grid=(NUM_LAYERS,),
        in_specs=in_specs,
        out_specs=pl.BlockSpec((B, OUT_PAD), lambda l: (0, 0)),
        scratch_shapes=[pltpu.VMEM((BS, HIDDEN), jnp.float32)],
        compiler_params=pltpu.CompilerParams(
            dimension_semantics=("arbitrary",),
            vmem_limit_bytes=16 * 1024 * 1024),
    )(*args)
    return out_padded[:, :NUM_CLASSES]


def init_params(key):
    """Deterministic synthetic parameters (already transposed to x @ W form)."""
    ks = jax.random.split(key, 16)
    L = NUM_LAYERS
    s = 0.02
    return {
        "wi":  s * jax.random.normal(ks[0], (INPUT_DIM, HIDDEN), jnp.float32),
        "bi":  s * jax.random.normal(ks[1], (1, HIDDEN), jnp.float32),
        "inw": s * jax.random.normal(ks[2], (L, HIDDEN, 3 * HIDDEN), jnp.float32),
        "inb": s * jax.random.normal(ks[3], (L, 1, 3 * HIDDEN), jnp.float32),
        "outw": s * jax.random.normal(ks[4], (L, HIDDEN, HIDDEN), jnp.float32),
        "outb": s * jax.random.normal(ks[5], (L, 1, HIDDEN), jnp.float32),
        "w1":  s * jax.random.normal(ks[6], (L, HIDDEN, FF), jnp.float32),
        "b1":  s * jax.random.normal(ks[7], (L, 1, FF), jnp.float32),
        "w2":  s * jax.random.normal(ks[8], (L, FF, HIDDEN), jnp.float32),
        "b2":  s * jax.random.normal(ks[9], (L, 1, HIDDEN), jnp.float32),
        "n1w": jnp.ones((L, 1, HIDDEN), jnp.float32),
        "n1b": jnp.zeros((L, 1, HIDDEN), jnp.float32),
        "n2w": jnp.ones((L, 1, HIDDEN), jnp.float32),
        "n2b": jnp.zeros((L, 1, HIDDEN), jnp.float32),
        "fcw": s * jax.random.normal(ks[10], (HIDDEN, NUM_CLASSES), jnp.float32),
        "fcb": s * jax.random.normal(ks[11], (1, NUM_CLASSES), jnp.float32),
    }


if __name__ == "__main__":
    key = jax.random.PRNGKey(0)
    kx, kp = jax.random.split(key)

    B, S = 2, 8
    x = jax.random.normal(kx, (B, S, INPUT_DIM), jnp.float32)
    # mask: 1 = valid token, 0 = padding (second sequence has 3 padded positions)
    mask = jnp.array([[1, 1, 1, 1, 1, 1, 1, 1],
                      [1, 1, 1, 1, 1, 0, 0, 0]], dtype=jnp.float32)

    params = init_params(kp)
    out = student_transformer_forward(x, mask, params)
    out = jax.block_until_ready(out)
    assert out.shape == (B, NUM_CLASSES)
    assert bool(jnp.all(jnp.isfinite(out)))
    print("KERNEL_OK")
</pallas_src>

<mosaic_0001>
module attributes {stable_mosaic.version = 11 : i64} {
  func.func @transformer_kernel(%arg0: i32, %arg1: memref<64x16xbf16, #tpu.memory_space<vmem>>, %arg2: memref<64x128xf32, #tpu.memory_space<vmem>>, %arg3: memref<2x16xbf16, #tpu.memory_space<vmem>>, %arg4: memref<16x8xf32, #tpu.memory_space<vmem>>, %arg5: memref<8x128xf32, #tpu.memory_space<vmem>>, %arg6: memref<1x128xf32, #tpu.memory_space<vmem>>, %arg7: memref<1x128x384xbf16, #tpu.memory_space<vmem>>, %arg8: memref<1x1x384xf32, #tpu.memory_space<vmem>>, %arg9: memref<1x128x128xbf16, #tpu.memory_space<vmem>>, %arg10: memref<1x1x128xf32, #tpu.memory_space<vmem>>, %arg11: memref<1x128x2048xi8, #tpu.memory_space<vmem>>, %arg12: memref<1x1x2048xf32, #tpu.memory_space<vmem>>, %arg13: memref<1x1x2048xf32, #tpu.memory_space<vmem>>, %arg14: memref<1x2048x128xi8, #tpu.memory_space<vmem>>, %arg15: memref<1x1x128xf32, #tpu.memory_space<vmem>>, %arg16: memref<1x1x128xf32, #tpu.memory_space<vmem>>, %arg17: memref<1x1x128xf32, #tpu.memory_space<vmem>>, %arg18: memref<1x1x128xf32, #tpu.memory_space<vmem>>, %arg19: memref<1x1x128xf32, #tpu.memory_space<vmem>>, %arg20: memref<1x1x128xf32, #tpu.memory_space<vmem>>, %arg21: memref<128x128xbf16, #tpu.memory_space<vmem>>, %arg22: memref<1x128xf32, #tpu.memory_space<vmem>>, %arg23: memref<2x128xf32, #tpu.memory_space<vmem>>, %arg24: memref<16x128xf32, #tpu.memory_space<vmem>>) attributes {dimension_semantics = [#tpu.dimension_semantics<arbitrary>], iteration_bounds = array<i64: 2>, scalar_prefetch = 0 : i64, scratch_operands = 1 : i64, tpu.core_type = #tpu.core_type<tc>, window_params = [{pipeline_mode = #tpu.pipeline_mode<synchronous>, transform_indices = @transform_0, window_bounds = array<i64: 64, 16>}, {pipeline_mode = #tpu.pipeline_mode<synchronous>, transform_indices = @transform_1, window_bounds = array<i64: 64, 128>}, {pipeline_mode = #tpu.pipeline_mode<synchronous>, transform_indices = @transform_2, window_bounds = array<i64: 2, 16>}, {pipeline_mode = #tpu.pipeline_mode<synchronous>, transform_indices = @transform_3, window_bounds = array<i64: 16, 8>}, {pipeline_mode = #tpu.pipeline_mode<synchronous>, transform_indices = @transform_4, window_bounds = array<i64: 8, 128>}, {pipeline_mode = #tpu.pipeline_mode<synchronous>, transform_indices = @transform_5, window_bounds = array<i64: 1, 128>}, {transform_indices = @transform_6, window_bounds = array<i64: 1, 128, 384>}, {transform_indices = @transform_7, window_bounds = array<i64: 1, 1, 384>}, {transform_indices = @transform_8, window_bounds = array<i64: 1, 128, 128>}, {transform_indices = @transform_9, window_bounds = array<i64: 1, 1, 128>}, {transform_indices = @transform_10, window_bounds = array<i64: 1, 128, 2048>}, {transform_indices = @transform_11, window_bounds = array<i64: 1, 1, 2048>}, {transform_indices = @transform_12, window_bounds = array<i64: 1, 1, 2048>}, {transform_indices = @transform_13, window_bounds = array<i64: 1, 2048, 128>}, {transform_indices = @transform_14, window_bounds = array<i64: 1, 1, 128>}, {transform_indices = @transform_15, window_bounds = array<i64: 1, 1, 128>}, {transform_indices = @transform_16, window_bounds = array<i64: 1, 1, 128>}, {transform_indices = @transform_17, window_bounds = array<i64: 1, 1, 128>}, {transform_indices = @transform_18, window_bounds = array<i64: 1, 1, 128>}, {transform_indices = @transform_19, window_bounds = array<i64: 1, 1, 128>}, {pipeline_mode = #tpu.pipeline_mode<synchronous>, transform_indices = @transform_20, window_bounds = array<i64: 128, 128>}, {pipeline_mode = #tpu.pipeline_mode<synchronous>, transform_indices = @transform_21, window_bounds = array<i64: 1, 128>}, {pipeline_mode = #tpu.pipeline_mode<synchronous>, transform_indices = @transform_22, window_bounds = array<i64: 2, 128>}]} {
    %c0_i32 = arith.constant 0 : i32
    %0 = arith.cmpi eq, %arg0, %c0_i32 : i32
    %1 = arith.extui %0 : i1 to i32
    %c0_i32_0 = arith.constant 0 : i32
    %2 = arith.cmpi ne, %1, %c0_i32_0 : i32
    scf.if %2 {
      %c0_71 = arith.constant 0 : index
      %c0_72 = arith.constant 0 : index
      %150 = vector.load %arg4[%c0_71, %c0_72] : memref<16x8xf32, #tpu.memory_space<vmem>>, vector<16x8xf32>
      %c0_73 = arith.constant 0 : index
      %c0_74 = arith.constant 0 : index
      %151 = vector.load %arg5[%c0_73, %c0_74] : memref<8x128xf32, #tpu.memory_space<vmem>>, vector<8x128xf32>
      %cst_75 = arith.constant dense<0.000000e+00> : vector<16x128xf32>
      %152 = tpu.matmul %150, %151, %cst_75 {dimension_numbers = #tpu.dot_dimension_numbers<[1], [0], [0], [1], [0, 0, 1, 1], [], []>} : vector<16x8xf32>, vector<8x128xf32>, vector<16x128xf32> -> vector<16x128xf32>
      %c0_76 = arith.constant 0 : index
      %c0_77 = arith.constant 0 : index
      %153 = vector.load %arg6[%c0_76, %c0_77] : memref<1x128xf32, #tpu.memory_space<vmem>>, vector<1x128xf32>
      %154 = vector.broadcast %153 : vector<1x128xf32> to vector<16x128xf32>
      %155 = arith.addf %152, %154 : vector<16x128xf32>
      %c0_78 = arith.constant 0 : index
      %c0_79 = arith.constant 0 : index
      %156 = vector.load %arg24[%c0_78, %c0_79] : memref<16x128xf32, #tpu.memory_space<vmem>>, vector<16x128xf32>
      tpu.vector_store %arg24[%c0_78, %c0_79], %155 {strides = array<i32>} : memref<16x128xf32, #tpu.memory_space<vmem>>, vector<16x128xf32>,
    } else {
    }
    %c0 = arith.constant 0 : index
    %c0_1 = arith.constant 0 : index
    %3 = vector.load %arg24[%c0, %c0_1] : memref<16x128xf32, #tpu.memory_space<vmem>>, vector<16x128xf32>
    %c0_2 = arith.constant 0 : index
    %c0_3 = arith.constant 0 : index
    %c0_4 = arith.constant 0 : index
    %4 = vector.load %arg7[%c0_2, %c0_3, %c0_4] : memref<1x128x384xbf16, #tpu.memory_space<vmem>>, vector<1x128x384xbf16>
    %5 = vector.shape_cast %4 : vector<1x128x384xbf16> to vector<128x384xbf16>
    %c0_5 = arith.constant 0 : index
    %c0_6 = arith.constant 0 : index
    %c0_7 = arith.constant 0 : index
    %6 = vector.load %arg8[%c0_5, %c0_6, %c0_7] : memref<1x1x384xf32, #tpu.memory_space<vmem>>, vector<1x1x384xf32>
    %7 = vector.shape_cast %6 : vector<1x1x384xf32> to vector<1x384xf32>
    %c0_8 = arith.constant 0 : index
    %c0_9 = arith.constant 0 : index
    %c0_10 = arith.constant 0 : index
    %8 = vector.load %arg9[%c0_8, %c0_9, %c0_10] : memref<1x128x128xbf16, #tpu.memory_space<vmem>>, vector<1x128x128xbf16>
    %9 = vector.shape_cast %8 : vector<1x128x128xbf16> to vector<128x128xbf16>
    %c0_11 = arith.constant 0 : index
    %c0_12 = arith.constant 0 : index
    %c0_13 = arith.constant 0 : index
    %10 = vector.load %arg10[%c0_11, %c0_12, %c0_13] : memref<1x1x128xf32, #tpu.memory_space<vmem>>, vector<1x1x128xf32>
    %11 = vector.shape_cast %10 : vector<1x1x128xf32> to vector<1x128xf32>
    %c0_14 = arith.constant 0 : index
    %c0_15 = arith.constant 0 : index
    %c0_16 = arith.constant 0 : index
    %12 = vector.load %arg17[%c0_14, %c0_15, %c0_16] : memref<1x1x128xf32, #tpu.memory_space<vmem>>, vector<1x1x128xf32>
    %13 = vector.shape_cast %12 : vector<1x1x128xf32> to vector<1x128xf32>
    %c0_17 = arith.constant 0 : index
    %c0_18 = arith.constant 0 : index
    %c0_19 = arith.constant 0 : index
    %14 = vector.load %arg18[%c0_17, %c0_18, %c0_19] : memref<1x1x128xf32, #tpu.memory_space<vmem>>, vector<1x1x128xf32>
    %15 = vector.shape_cast %14 : vector<1x1x128xf32> to vector<1x128xf32>
    %c0_20 = arith.constant 0 : index
    %c0_21 = arith.constant 0 : index
    %c0_22 = arith.constant 0 : index
    %16 = vector.load %arg19[%c0_20, %c0_21, %c0_22] : memref<1x1x128xf32, #tpu.memory_space<vmem>>, vector<1x1x128xf32>
    %17 = vector.shape_cast %16 : vector<1x1x128xf32> to vector<1x128xf32>
    %c0_23 = arith.constant 0 : index
    %c0_24 = arith.constant 0 : index
    %c0_25 = arith.constant 0 : index
    %18 = vector.load %arg20[%c0_23, %c0_24, %c0_25] : memref<1x1x128xf32, #tpu.memory_space<vmem>>, vector<1x1x128xf32>
    %19 = vector.shape_cast %18 : vector<1x1x128xf32> to vector<1x128xf32>
    %20 = arith.truncf %3 : vector<16x128xf32> to vector<16x128xbf16>
    %cst = arith.constant dense<0.000000e+00> : vector<16x384xf32>
    %21 = tpu.matmul %20, %5, %cst {dimension_numbers = #tpu.dot_dimension_numbers<[1], [0], [0], [1], [0, 0, 1, 1], [], []>} : vector<16x128xbf16>, vector<128x384xbf16>, vector<16x384xf32> -> vector<16x384xf32>
    %22 = vector.broadcast %7 : vector<1x384xf32> to vector<16x384xf32>
    %23 = arith.addf %21, %22 : vector<16x384xf32>
    %24 = vector.extract_strided_slice %23 {offsets = [0, 0], sizes = [16, 128], strides = [1, 1]} : vector<16x384xf32> to vector<16x128xf32>
    %25 = vector.extract_strided_slice %23 {offsets = [0, 128], sizes = [16, 128], strides = [1, 1]} : vector<16x384xf32> to vector<16x128xf32>
    %26 = vector.extract_strided_slice %23 {offsets = [0, 256], sizes = [16, 128], strides = [1, 1]} : vector<16x384xf32> to vector<16x128xf32>
    %cst_26 = arith.constant 0.176776692 : f32
    %27 = vector.broadcast %cst_26 : f32 to vector<16x128xf32>
    %28 = arith.mulf %24, %27 : vector<16x128xf32>
    %c0_27 = arith.constant 0 : index
    %c0_28 = arith.constant 0 : index
    %29 = vector.load %arg2[%c0_27, %c0_28] : memref<64x128xf32, #tpu.memory_space<vmem>>, vector<64x128xf32>
    %30 = tpu.concatenate %28, %28, %28, %28 in 0 : vector<16x128xf32>, vector<16x128xf32>, vector<16x128xf32>, vector<16x128xf32> -> vector<64x128xf32>
    %31 = arith.mulf %30, %29 : vector<64x128xf32>
    %32 = arith.truncf %31 : vector<64x128xf32> to vector<64x128xbf16>
    %33 = arith.truncf %25 : vector<16x128xf32> to vector<16x128xbf16>
    %cst_29 = arith.constant dense<0.000000e+00> : vector<64x16xf32>
    %34 = tpu.matmul %32, %33, %cst_29 {dimension_numbers = #tpu.dot_dimension_numbers<[1], [1], [0], [0], [0, 0, 1, 0], [], []>} : vector<64x128xbf16>, vector<16x128xbf16>, vector<64x16xf32> -> vector<64x16xf32>
    %c0_30 = arith.constant 0 : index
    %c0_31 = arith.constant 0 : index
    %35 = vector.load %arg1[%c0_30, %c0_31] : memref<64x16xbf16, #tpu.memory_space<vmem>>, vector<64x16xbf16>
    %36 = arith.extf %35 : vector<64x16xbf16> to vector<64x16xf32>
    %37 = arith.addf %34, %36 : vector<64x16xf32>
    %cst_32 = arith.constant dense<0xFF800000> : vector<64xf32>
    %38 = vector.multi_reduction <maximumf>, %37, %cst_32 [1] : vector<64x16xf32> to vector<64xf32>
    %39 = vector.shape_cast %38 : vector<64xf32> to vector<64x1xf32>
    %40 = vector.broadcast %39 : vector<64x1xf32> to vector<64x16xf32>
    %41 = arith.subf %37, %40 : vector<64x16xf32>
    %42 = math.exp %41 : vector<64x16xf32>
    %cst_33 = arith.constant dense<0.000000e+00> : vector<64xf32>
    %43 = vector.multi_reduction <add>, %42, %cst_33 [1] : vector<64x16xf32> to vector<64xf32>
    %44 = vector.shape_cast %43 : vector<64xf32> to vector<64x1xf32>
    %45 = tpu.reciprocal %44 {approx = true} : vector<64x1xf32> -> vector<64x1xf32>
    %46 = vector.broadcast %45 : vector<64x1xf32> to vector<64x16xf32>
    %47 = arith.mulf %42, %46 : vector<64x16xf32>
    %48 = arith.truncf %47 : vector<64x16xf32> to vector<64x16xbf16>
    %49 = arith.truncf %26 : vector<16x128xf32> to vector<16x128xbf16>
    %cst_34 = arith.constant dense<0.000000e+00> : vector<64x128xf32>
    %50 = tpu.matmul %48, %49, %cst_34 {dimension_numbers = #tpu.dot_dimension_numbers<[1], [0], [0], [1], [0, 0, 1, 1], [], []>} : vector<64x16xbf16>, vector<16x128xbf16>, vector<64x128xf32> -> vector<64x128xf32>
    %cst_35 = arith.constant 0.000000e+00 : f32
    %51 = vector.broadcast %cst_35 : f32 to vector<16x128xf32>
    %52 = vector.extract_strided_slice %50 {offsets = [0, 0], sizes = [16, 128], strides = [1, 1]} : vector<64x128xf32> to vector<16x128xf32>
    %53 = vector.extract_strided_slice %29 {offsets = [0, 0], sizes = [1, 128], strides = [1, 1]} : vector<64x128xf32> to vector<1x128xf32>
    %54 = vector.broadcast %53 : vector<1x128xf32> to vector<16x128xf32>
    %55 = arith.mulf %52, %54 : vector<16x128xf32>
    %56 = arith.addf %51, %55 : vector<16x128xf32>
    %57 = vector.extract_strided_slice %50 {offsets = [16, 0], sizes = [16, 128], strides = [1, 1]} : vector<64x128xf32> to vector<16x128xf32>
    %58 = vector.extract_strided_slice %29 {offsets = [16, 0], sizes = [1, 128], strides = [1, 1]} : vector<64x128xf32> to vector<1x128xf32>
    %59 = vector.broadcast %58 : vector<1x128xf32> to vector<16x128xf32>
    %60 = arith.mulf %57, %59 : vector<16x128xf32>
    %61 = arith.addf %56, %60 : vector<16x128xf32>
    %62 = vector.extract_strided_slice %50 {offsets = [32, 0], sizes = [16, 128], strides = [1, 1]} : vector<64x128xf32> to vector<16x128xf32>
    %63 = vector.extract_strided_slice %29 {offsets = [32, 0], sizes = [1, 128], strides = [1, 1]} : vector<64x128xf32> to vector<1x128xf32>
    %64 = vector.broadcast %63 : vector<1x128xf32> to vector<16x128xf32>
    %65 = arith.mulf %62, %64 : vector<16x128xf32>
    %66 = arith.addf %61, %65 : vector<16x128xf32>
    %67 = vector.extract_strided_slice %50 {offsets = [48, 0], sizes = [16, 128], strides = [1, 1]} : vector<64x128xf32> to vector<16x128xf32>
    %68 = vector.extract_strided_slice %29 {offsets = [48, 0], sizes = [1, 128], strides = [1, 1]} : vector<64x128xf32> to vector<1x128xf32>
    %69 = vector.broadcast %68 : vector<1x128xf32> to vector<16x128xf32>
    %70 = arith.mulf %67, %69 : vector<16x128xf32>
    %71 = arith.addf %66, %70 : vector<16x128xf32>
    %72 = arith.truncf %71 : vector<16x128xf32> to vector<16x128xbf16>
    %cst_36 = arith.constant dense<0.000000e+00> : vector<16x128xf32>
    %73 = tpu.matmul %72, %9, %cst_36 {dimension_numbers = #tpu.dot_dimension_numbers<[1], [0], [0], [1], [0, 0, 1, 1], [], []>} : vector<16x128xbf16>, vector<128x128xbf16>, vector<16x128xf32> -> vector<16x128xf32>
    %74 = vector.broadcast %11 : vector<1x128xf32> to vector<16x128xf32>
    %75 = arith.addf %73, %74 : vector<16x128xf32>
    %76 = arith.addf %3, %75 : vector<16x128xf32>
    %cst_37 = arith.constant dense<0.000000e+00> : vector<16xf32>
    %77 = vector.multi_reduction <add>, %76, %cst_37 [1] : vector<16x128xf32> to vector<16xf32>
    %78 = vector.shape_cast %77 : vector<16xf32> to vector<16x1xf32>
    %cst_38 = arith.constant 1.280000e+02 : f32
    %79 = vector.broadcast %cst_38 : f32 to vector<16x1xf32>
    %80 = arith.divf %78, %79 : vector<16x1xf32>
    %81 = vector.broadcast %80 : vector<16x1xf32> to vector<16x128xf32>
    %82 = arith.subf %76, %81 : vector<16x128xf32>
    %83 = arith.mulf %82, %82 : vector<16x128xf32>
    %cst_39 = arith.constant dense<0.000000e+00> : vector<16xf32>
    %84 = vector.multi_reduction <add>, %83, %cst_39 [1] : vector<16x128xf32> to vector<16xf32>
    %85 = vector.shape_cast %84 : vector<16xf32> to vector<16x1xf32>
    %cst_40 = arith.constant 1.280000e+02 : f32
    %86 = vector.broadcast %cst_40 : f32 to vector<16x1xf32>
    %87 = arith.divf %85, %86 : vector<16x1xf32>
    %cst_41 = arith.constant 9.99999974E-6 : f32
    %88 = vector.broadcast %cst_41 : f32 to vector<16x1xf32>
    %89 = arith.addf %87, %88 : vector<16x1xf32>
    %90 = math.rsqrt %89 : vector<16x1xf32>
    %91 = vector.broadcast %90 : vector<16x1xf32> to vector<16x128xf32>
    %92 = arith.mulf %82, %91 : vector<16x128xf32>
    %93 = vector.broadcast %13 : vector<1x128xf32> to vector<16x128xf32>
    %94 = arith.mulf %92, %93 : vector<16x128xf32>
    %95 = vector.broadcast %15 : vector<1x128xf32> to vector<16x128xf32>
    %96 = arith.addf %94, %95 : vector<16x128xf32>
    %c0_42 = arith.constant 0 : index
    %c0_43 = arith.constant 0 : index
    %c0_44 = arith.constant 0 : index
    %97 = vector.load %arg11[%c0_42, %c0_43, %c0_44] : memref<1x128x2048xi8, #tpu.memory_space<vmem>>, vector<1x128x2048xi8>
    %98 = vector.shape_cast %97 : vector<1x128x2048xi8> to vector<128x2048xi8>
    %99 = arith.sitofp %98 : vector<128x2048xi8> to vector<128x2048xbf16>
    %100 = arith.truncf %96 : vector<16x128xf32> to vector<16x128xbf16>
    %cst_45 = arith.constant dense<0.000000e+00> : vector<16x2048xf32>
    %101 = tpu.matmul %100, %99, %cst_45 {dimension_numbers = #tpu.dot_dimension_numbers<[1], [0], [0], [1], [0, 0, 1, 1], [], []>} : vector<16x128xbf16>, vector<128x2048xbf16>, vector<16x2048xf32> -> vector<16x2048xf32>
    %c0_46 = arith.constant 0 : index
    %c0_47 = arith.constant 0 : index
    %c0_48 = arith.constant 0 : index
    %102 = vector.load %arg12[%c0_46, %c0_47, %c0_48] : memref<1x1x2048xf32, #tpu.memory_space<vmem>>, vector<1x1x2048xf32>
    %103 = vector.shape_cast %102 : vector<1x1x2048xf32> to vector<1x2048xf32>
    %104 = vector.broadcast %103 : vector<1x2048xf32> to vector<16x2048xf32>
    %105 = arith.mulf %101, %104 : vector<16x2048xf32>
    %c0_49 = arith.constant 0 : index
    %c0_50 = arith.constant 0 : index
    %c0_51 = arith.constant 0 : index
    %106 = vector.load %arg13[%c0_49, %c0_50, %c0_51] : memref<1x1x2048xf32, #tpu.memory_space<vmem>>, vector<1x1x2048xf32>
    %107 = vector.shape_cast %106 : vector<1x1x2048xf32> to vector<1x2048xf32>
    %108 = vector.broadcast %107 : vector<1x2048xf32> to vector<16x2048xf32>
    %109 = arith.addf %105, %108 : vector<16x2048xf32>
    %cst_52 = arith.constant 0.000000e+00 : f32
    %110 = vector.broadcast %cst_52 : f32 to vector<16x2048xf32>
    %111 = arith.maximumf %109, %110 : vector<16x2048xf32>
    %c0_53 = arith.constant 0 : index
    %c0_54 = arith.constant 0 : index
    %c0_55 = arith.constant 0 : index
    %112 = vector.load %arg14[%c0_53, %c0_54, %c0_55] : memref<1x2048x128xi8, #tpu.memory_space<vmem>>, vector<1x2048x128xi8>
    %113 = vector.shape_cast %112 : vector<1x2048x128xi8> to vector<2048x128xi8>
    %114 = arith.sitofp %113 : vector<2048x128xi8> to vector<2048x128xbf16>
    %115 = arith.truncf %111 : vector<16x2048xf32> to vector<16x2048xbf16>
    %cst_56 = arith.constant dense<0.000000e+00> : vector<16x128xf32>
    %116 = tpu.matmul %115, %114, %cst_56 {dimension_numbers = #tpu.dot_dimension_numbers<[1], [0], [0], [1], [0, 0, 1, 1], [], []>} : vector<16x2048xbf16>, vector<2048x128xbf16>, vector<16x128xf32> -> vector<16x128xf32>
    %c0_57 = arith.constant 0 : index
    %c0_58 = arith.constant 0 : index
    %c0_59 = arith.constant 0 : index
    %117 = vector.load %arg15[%c0_57, %c0_58, %c0_59] : memref<1x1x128xf32, #tpu.memory_space<vmem>>, vector<1x1x128xf32>
    %118 = vector.shape_cast %117 : vector<1x1x128xf32> to vector<1x128xf32>
    %119 = vector.broadcast %118 : vector<1x128xf32> to vector<16x128xf32>
    %120 = arith.mulf %116, %119 : vector<16x128xf32>
    %c0_60 = arith.constant 0 : index
    %c0_61 = arith.constant 0 : index
    %c0_62 = arith.constant 0 : index
    %121 = vector.load %arg16[%c0_60, %c0_61, %c0_62] : memref<1x1x128xf32, #tpu.memory_space<vmem>>, vector<1x1x128xf32>
    %122 = vector.shape_cast %121 : vector<1x1x128xf32> to vector<1x128xf32>
    %123 = vector.broadcast %122 : vector<1x128xf32> to vector<16x128xf32>
    %124 = arith.addf %120, %123 : vector<16x128xf32>
    %125 = arith.addf %96, %124 : vector<16x128xf32>
    %cst_63 = arith.constant dense<0.000000e+00> : vector<16xf32>
    %126 = vector.multi_reduction <add>, %125, %cst_63 [1] : vector<16x128xf32> to vector<16xf32>
    %127 = vector.shape_cast %126 : vector<16xf32> to vector<16x1xf32>
    %cst_64 = arith.constant 1.280000e+02 : f32
    %128 = vector.broadcast %cst_64 : f32 to vector<16x1xf32>
    %129 = arith.divf %127, %128 : vector<16x1xf32>
    %130 = vector.broadcast %129 : vector<16x1xf32> to vector<16x128xf32>
    %131 = arith.subf %125, %130 : vector<16x128xf32>
    %132 = arith.mulf %131, %131 : vector<16x128xf32>
    %cst_65 = arith.constant dense<0.000000e+00> : vector<16xf32>
    %133 = vector.multi_reduction <add>, %132, %cst_65 [1] : vector<16x128xf32> to vector<16xf32>
    %134 = vector.shape_cast %133 : vector<16xf32> to vector<16x1xf32>
    %cst_66 = arith.constant 1.280000e+02 : f32
    %135 = vector.broadcast %cst_66 : f32 to vector<16x1xf32>
    %136 = arith.divf %134, %135 : vector<16x1xf32>
    %cst_67 = arith.constant 9.99999974E-6 : f32
    %137 = vector.broadcast %cst_67 : f32 to vector<16x1xf32>
    %138 = arith.addf %136, %137 : vector<16x1xf32>
    %139 = math.rsqrt %138 : vector<16x1xf32>
    %140 = vector.broadcast %139 : vector<16x1xf32> to vector<16x128xf32>
    %141 = arith.mulf %131, %140 : vector<16x128xf32>
    %142 = vector.broadcast %17 : vector<1x128xf32> to vector<16x128xf32>
    %143 = arith.mulf %141, %142 : vector<16x128xf32>
    %144 = vector.broadcast %19 : vector<1x128xf32> to vector<16x128xf32>
    %145 = arith.addf %143, %144 : vector<16x128xf32>
    %c0_68 = arith.constant 0 : index
    %c0_69 = arith.constant 0 : index
    %146 = vector.load %arg24[%c0_68, %c0_69] : memref<16x128xf32, #tpu.memory_space<vmem>>, vector<16x128xf32>
    tpu.vector_store %arg24[%c0_68, %c0_69], %145 {strides = array<i32>} : memref<16x128xf32, #tpu.memory_space<vmem>>, vector<16x128xf32>,
    %c1_i32 = arith.constant 1 : i32
    %147 = arith.cmpi eq, %arg0, %c1_i32 : i32
    %148 = arith.extui %147 : i1 to i32
    %c0_i32_70 = arith.constant 0 : i32
    %149 = arith.cmpi ne, %148, %c0_i32_70 : i32
    scf.if %149 {
      %c0_71 = arith.constant 0 : index
      %c0_72 = arith.constant 0 : index
      %150 = vector.load %arg3[%c0_71, %c0_72] : memref<2x16xbf16, #tpu.memory_space<vmem>>, vector<2x16xbf16>
      %151 = arith.truncf %145 : vector<16x128xf32> to vector<16x128xbf16>
      %cst_73 = arith.constant dense<0.000000e+00> : vector<2x128xf32>
      %152 = tpu.matmul %150, %151, %cst_73 {dimension_numbers = #tpu.dot_dimension_numbers<[1], [0], [0], [1], [0, 0, 1, 1], [], []>} : vector<2x16xbf16>, vector<16x128xbf16>, vector<2x128xf32> -> vector<2x128xf32>
      %153 = arith.truncf %152 : vector<2x128xf32> to vector<2x128xbf16>
      %c0_74 = arith.constant 0 : index
      %c0_75 = arith.constant 0 : index
      %154 = vector.load %arg21[%c0_74, %c0_75] : memref<128x128xbf16, #tpu.memory_space<vmem>>, vector<128x128xbf16>
      %cst_76 = arith.constant dense<0.000000e+00> : vector<2x128xf32>
      %155 = tpu.matmul %153, %154, %cst_76 {dimension_numbers = #tpu.dot_dimension_numbers<[1], [0], [0], [1], [0, 0, 1, 1], [], []>} : vector<2x128xbf16>, vector<128x128xbf16>, vector<2x128xf32> -> vector<2x128xf32>
      %c0_77 = arith.constant 0 : index
      %c0_78 = arith.constant 0 : index
      %156 = vector.load %arg22[%c0_77, %c0_78] : memref<1x128xf32, #tpu.memory_space<vmem>>, vector<1x128xf32>
      %157 = vector.broadcast %156 : vector<1x128xf32> to vector<2x128xf32>
      %158 = arith.addf %155, %157 : vector<2x128xf32>
      %c0_79 = arith.constant 0 : index
      %c0_80 = arith.constant 0 : index
      %159 = vector.load %arg23[%c0_79, %c0_80] : memref<2x128xf32, #tpu.memory_space<vmem>>, vector<2x128xf32>
      tpu.vector_store %arg23[%c0_79, %c0_80], %158 {strides = array<i32>} : memref<2x128xf32, #tpu.memory_space<vmem>>, vector<2x128xf32>,
    } else {
    }
    return
  }
  func.func @transform_0(%arg0: i32) -> (i32, i32) {
    %c0_i32 = arith.constant 0 : i32
    %c0_i32_0 = arith.constant 0 : i32
    %c0_i32_1 = arith.constant 0 : i32
    return %c0_i32, %c0_i32_0 : i32, i32
  }
  func.func @transform_1(%arg0: i32) -> (i32, i32) {
    %c0_i32 = arith.constant 0 : i32
    %c0_i32_0 = arith.constant 0 : i32
    %c0_i32_1 = arith.constant 0 : i32
    return %c0_i32, %c0_i32_0 : i32, i32
  }
  func.func @transform_2(%arg0: i32) -> (i32, i32) {
    %c0_i32 = arith.constant 0 : i32
    %c0_i32_0 = arith.constant 0 : i32
    %c0_i32_1 = arith.constant 0 : i32
    return %c0_i32, %c0_i32_0 : i32, i32
  }
  func.func @transform_3(%arg0: i32) -> (i32, i32) {
    %c0_i32 = arith.constant 0 : i32
    %c0_i32_0 = arith.constant 0 : i32
    %c0_i32_1 = arith.constant 0 : i32
    return %c0_i32, %c0_i32_0 : i32, i32
  }
  func.func @transform_4(%arg0: i32) -> (i32, i32) {
    %c0_i32 = arith.constant 0 : i32
    %c0_i32_0 = arith.constant 0 : i32
    %c0_i32_1 = arith.constant 0 : i32
    return %c0_i32, %c0_i32_0 : i32, i32
  }
  func.func @transform_5(%arg0: i32) -> (i32, i32) {
    %c0_i32 = arith.constant 0 : i32
    %c0_i32_0 = arith.constant 0 : i32
    %c0_i32_1 = arith.constant 0 : i32
    return %c0_i32, %c0_i32_0 : i32, i32
  }
  func.func @transform_6(%arg0: i32) -> (i32, i32, i32) {
    %c0_i32 = arith.constant 0 : i32
    %c0_i32_0 = arith.constant 0 : i32
    %c0_i32_1 = arith.constant 0 : i32
    return %arg0, %c0_i32, %c0_i32_0 : i32, i32, i32
  }
  func.func @transform_7(%arg0: i32) -> (i32, i32, i32) {
    %c0_i32 = arith.constant 0 : i32
    %c0_i32_0 = arith.constant 0 : i32
    %c0_i32_1 = arith.constant 0 : i32
    return %arg0, %c0_i32, %c0_i32_0 : i32, i32, i32
  }
  func.func @transform_8(%arg0: i32) -> (i32, i32, i32) {
    %c0_i32 = arith.constant 0 : i32
    %c0_i32_0 = arith.constant 0 : i32
    %c0_i32_1 = arith.constant 0 : i32
    return %arg0, %c0_i32, %c0_i32_0 : i32, i32, i32
  }
  func.func @transform_9(%arg0: i32) -> (i32, i32, i32) {
    %c0_i32 = arith.constant 0 : i32
    %c0_i32_0 = arith.constant 0 : i32
    %c0_i32_1 = arith.constant 0 : i32
    return %arg0, %c0_i32, %c0_i32_0 : i32, i32, i32
  }
  func.func @transform_10(%arg0: i32) -> (i32, i32, i32) {
    %c0_i32 = arith.constant 0 : i32
    %c0_i32_0 = arith.constant 0 : i32
    %c0_i32_1 = arith.constant 0 : i32
    return %arg0, %c0_i32, %c0_i32_0 : i32, i32, i32
  }
  func.func @transform_11(%arg0: i32) -> (i32, i32, i32) {
    %c0_i32 = arith.constant 0 : i32
    %c0_i32_0 = arith.constant 0 : i32
    %c0_i32_1 = arith.constant 0 : i32
    return %arg0, %c0_i32, %c0_i32_0 : i32, i32, i32
  }
  func.func @transform_12(%arg0: i32) -> (i32, i32, i32) {
    %c0_i32 = arith.constant 0 : i32
    %c0_i32_0 = arith.constant 0 : i32
    %c0_i32_1 = arith.constant 0 : i32
    return %arg0, %c0_i32, %c0_i32_0 : i32, i32, i32
  }
  func.func @transform_13(%arg0: i32) -> (i32, i32, i32) {
    %c0_i32 = arith.constant 0 : i32
    %c0_i32_0 = arith.constant 0 : i32
    %c0_i32_1 = arith.constant 0 : i32
    return %arg0, %c0_i32, %c0_i32_0 : i32, i32, i32
  }
  func.func @transform_14(%arg0: i32) -> (i32, i32, i32) {
    %c0_i32 = arith.constant 0 : i32
    %c0_i32_0 = arith.constant 0 : i32
    %c0_i32_1 = arith.constant 0 : i32
    return %arg0, %c0_i32, %c0_i32_0 : i32, i32, i32
  }
  func.func @transform_15(%arg0: i32) -> (i32, i32, i32) {
    %c0_i32 = arith.constant 0 : i32
    %c0_i32_0 = arith.constant 0 : i32
    %c0_i32_1 = arith.constant 0 : i32
    return %arg0, %c0_i32, %c0_i32_0 : i32, i32, i32
  }
  func.func @transform_16(%arg0: i32) -> (i32, i32, i32) {
    %c0_i32 = arith.constant 0 : i32
    %c0_i32_0 = arith.constant 0 : i32
    %c0_i32_1 = arith.constant 0 : i32
    return %arg0, %c0_i32, %c0_i32_0 : i32, i32, i32
  }
  func.func @transform_17(%arg0: i32) -> (i32, i32, i32) {
    %c0_i32 = arith.constant 0 : i32
    %c0_i32_0 = arith.constant 0 : i32
    %c0_i32_1 = arith.constant 0 : i32
    return %arg0, %c0_i32, %c0_i32_0 : i32, i32, i32
  }
  func.func @transform_18(%arg0: i32) -> (i32, i32, i32) {
    %c0_i32 = arith.constant 0 : i32
    %c0_i32_0 = arith.constant 0 : i32
    %c0_i32_1 = arith.constant 0 : i32
    return %arg0, %c0_i32, %c0_i32_0 : i32, i32, i32
  }
  func.func @transform_19(%arg0: i32) -> (i32, i32, i32) {
    %c0_i32 = arith.constant 0 : i32
    %c0_i32_0 = arith.constant 0 : i32
    %c0_i32_1 = arith.constant 0 : i32
    return %arg0, %c0_i32, %c0_i32_0 : i32, i32, i32
  }
  func.func @transform_20(%arg0: i32) -> (i32, i32) {
    %c0_i32 = arith.constant 0 : i32
    %c0_i32_0 = arith.constant 0 : i32
    %c0_i32_1 = arith.constant 0 : i32
    return %c0_i32, %c0_i32_0 : i32, i32
  }
  func.func @transform_21(%arg0: i32) -> (i32, i32) {
    %c0_i32 = arith.constant 0 : i32
    %c0_i32_0 = arith.constant 0 : i32
    %c0_i32_1 = arith.constant 0 : i32
    return %c0_i32, %c0_i32_0 : i32, i32
  }
  func.func @transform_22(%arg0: i32) -> (i32, i32) {
    %c0_i32 = arith.constant 0 : i32
    %c0_i32_0 = arith.constant 0 : i32
    %c0_i32_1 = arith.constant 0 : i32
    return %c0_i32, %c0_i32_0 : i32, i32
  }
}

</mosaic_0001>

<llo_original>
// kernel: tpu_custom_call.1
$region0: #{tpu_custom_call.1}
  #allocation0 [shape = 'u32[]', space=smem, size = 0x4, offset = 0x4, fixed_abs, tag = 'smem constant byte address 0x4 - core index']
  #allocation1 [shape = 'u32[72,128]{1,0:T(1,128)}', space=vmem, size = 0x9000, scoped, tag = 'internal scratch']
  #allocation2 [shape = 'f32[16,128]{1,0:T(8,128)}', space=vmem, size = 0x2000, scoped, tag = 'scratch operand']
  %s0 = inlined_call_operand.vmem [shape: bf16[64,16], index: 0, kind: input, shape index: {}]
  %s1 = inlined_call_operand.hbm [shape: f32[64,128], index: 1, kind: input, shape index: {}]
  %s2 = inlined_call_operand.hbm [shape: bf16[2,16], index: 2, kind: input, shape index: {}]
  %s3 = inlined_call_operand.vmem [shape: f32[16,8], index: 3, kind: input, shape index: {}]
  %s4 = inlined_call_operand.vmem [shape: f32[8,128], index: 4, kind: input, shape index: {}]
  %s5 = inlined_call_operand.hbm [shape: f32[1,128], index: 5, kind: input, shape index: {}]
  %s6 = inlined_call_operand.hbm [shape: bf16[2,128,384], index: 6, kind: input, shape index: {}]
  %s7 = inlined_call_operand.vmem [shape: f32[2,1,384], index: 7, kind: input, shape index: {}]
  %s8 = inlined_call_operand.hbm [shape: bf16[2,128,128], index: 8, kind: input, shape index: {}]
  %s9 = inlined_call_operand.vmem [shape: f32[2,1,128], index: 9, kind: input, shape index: {}]
  %s10 = inlined_call_operand.hbm [shape: s8[2,128,2048], index: 10, kind: input, shape index: {}]
  %s11 = inlined_call_operand.vmem [shape: f32[2,1,2048], index: 11, kind: input, shape index: {}]
  %s12 = inlined_call_operand.hbm [shape: f32[2,1,2048], index: 12, kind: input, shape index: {}]
  %s13 = inlined_call_operand.hbm [shape: s8[2,2048,128], index: 13, kind: input, shape index: {}]
  %s14 = inlined_call_operand.vmem [shape: f32[2,1,128], index: 14, kind: input, shape index: {}]
  %s15 = inlined_call_operand.vmem [shape: f32[2,1,128], index: 15, kind: input, shape index: {}]
  %s16 = inlined_call_operand.vmem [shape: f32[2,1,128], index: 16, kind: input, shape index: {}]
  %s17 = inlined_call_operand.vmem [shape: f32[2,1,128], index: 17, kind: input, shape index: {}]
  %s18 = inlined_call_operand.vmem [shape: f32[2,1,128], index: 18, kind: input, shape index: {}]
  %s19 = inlined_call_operand.vmem [shape: f32[2,1,128], index: 19, kind: input, shape index: {}]
  %s20 = inlined_call_operand.hbm [shape: bf16[128,128], index: 20, kind: input, shape index: {}]
  %s21 = inlined_call_operand.vmem [shape: f32[1,128], index: 21, kind: input, shape index: {}]
  %s22 = inlined_call_operand.hbm [shape: f32[2,128], index: 22, kind: output, shape index: {}]
  %s23 = sld [smem:[#allocation0]]
  $region165: #{tpu_custom_call.1} parent=0
    _
  %s25 = ssub.s32 1, %s23
  %s26 = scalar_select 0, %s25, %s23
  $region1: #{tpu_custom_call.1} parent=0
    #allocation3 [shape = 'u8[32768]{0}', space=vmem, size = 0x8000, scoped, tag = 'input window, operand 1, single buffered']
    #allocation4 [shape = 's32[2]{0}', space=sflag, size = 0x8, scoped, tag = 'scoped memory for tpu_custom_call.1']
    #allocation5 [shape = 's32[2]{0}', space=sflag, size = 0x8, scoped, tag = 'scoped memory for tpu_custom_call.1']
    #allocation6 [shape = 'u8[512]{0}', space=vmem, size = 0x400, scoped, tag = 'input window, operand 2, single buffered']
    #allocation7 [shape = 's32[1]{0}', space=sflag, size = 0x4, scoped, tag = 'scoped memory for tpu_custom_call.1']
    #allocation8 [shape = 'u8[512]{0}', space=vmem, size = 0x400, scoped, tag = 'input window, operand 5, single buffered']
    #allocation9 [shape = 'u8[196608]{0}', space=vmem, size = 0x30000, scoped, tag = 'input window, operand 6']
    #allocation10 [shape = 's32[2]{0}', space=sflag, size = 0x8, scoped, tag = 'scoped memory for tpu_custom_call.1']
    #allocation11 [shape = 'u8[65536]{0}', space=vmem, size = 0x10000, scoped, tag = 'input window, operand 8']
    #allocation12 [shape = 'u8[524288]{0}', space=vmem, size = 0x80000, scoped, tag = 'input window, operand 10']
    #allocation13 [shape = 's32[2]{0}', space=sflag, size = 0x8, scoped, tag = 'scoped memory for tpu_custom_call.1']
    #allocation14 [shape = 'u8[16384]{0}', space=vmem, size = 0x4000, scoped, tag = 'input window, operand 12']
    #allocation15 [shape = 'u8[524288]{0}', space=vmem, size = 0x80000, scoped, tag = 'input window, operand 13']
    #allocation16 [shape = 's32[2]{0}', space=sflag, size = 0x8, scoped, tag = 'scoped memory for tpu_custom_call.1']
    #allocation17 [shape = 'u8[32768]{0}', space=vmem, size = 0x8000, scoped, tag = 'input window, operand 20, single buffered']
    #allocation18 [shape = 'u8[1024]{0}', space=vmem, size = 0x400, scoped, tag = 'output window, operand 0, single buffered']
    %27 = vsyncpa [#allocation4], 0
    %28 = vsyncpa [#allocation7], 0
    %29 = vsyncpa [#allocation10], 0
    %s30 = scalar_lea.sflag [#allocation10], 1
    %31 = vsyncpa %s30, 0
    %32 = vsyncpa [#allocation13], 0
    %s33 = scalar_lea.sflag [#allocation13], 1
    %34 = vsyncpa %s33, 0
    %35 = vsyncpa [#allocation16], 0
    %s36 = scalar_lea.sflag [#allocation16], 1
    %37 = vsyncpa %s36, 0
    %38 = vsyncpa [#allocation5], 0
    loop: start=0, step=1, limit=4
    $region2: #{tpu_custom_call.1} parent=1 // loop_pre_header
      _
    $region3: #{tpu_custom_call.1} parent=1 // loop_header
      %s40 = sphi 0, %s44
      %p41 = scmp.ge.s32.totalorder %s40, 4
      %s48 = sphi 0, %s48
      %s50 = sphi 0, %s48
      %s51 = sphi 0, %s50
      %s65 = sphi 0, %s51
      %s69 = sphi 0, %s69
      %s71 = sphi 0, %s69
      %s72 = sphi 0, %s71
      %s86 = sphi 0, %s72
      %s90 = sphi 0, %s90
      %s92 = sphi 0, %s90
      %s93 = sphi 0, %s92
      %s107 = sphi 0, %s93
      %s111 = sphi 0, %s111
      %s113 = sphi 0, %s111
      %s114 = sphi 0, %s113
      %s128 = sphi 0, %s114
      %s132 = sphi 0, %s132
      %s134 = sphi 0, %s132
      %s135 = sphi 0, %s134
      %s149 = sphi 0, %s135
      %s153 = sphi 0, %s153
      %s155 = sphi 0, %s153
      %s156 = sphi 0, %s155
      %s170 = sphi 0, %s156
      %s176 = sphi 0, %s178
      %s179 = sphi 0, %s176
      %s180 = sphi 0, %s179
      %s196 = sphi 0, %s180
      %s202 = sphi 0, %s204
      %s205 = sphi 0, %s202
      %s206 = sphi 0, %s205
      %s222 = sphi 0, %s206
      %s228 = sphi 0, %s230
      %s231 = sphi 0, %s228
      %s232 = sphi 0, %s231
      %s248 = sphi 0, %s232
      %s254 = sphi 0, %s256
      %s257 = sphi 0, %s254
      %s258 = sphi 0, %s257
      %s274 = sphi 0, %s258
      %s280 = sphi 0, %s282
      %s283 = sphi 0, %s280
      %s284 = sphi 0, %s283
      %s300 = sphi 0, %s284
      %s306 = sphi 0, %s308
      %s309 = sphi 0, %s306
      %s310 = sphi 0, %s309
      %s326 = sphi 0, %s310
      %s332 = sphi 0, %s334
      %s335 = sphi 0, %s332
      %s336 = sphi 0, %s335
      %s352 = sphi 0, %s336
      %s358 = sphi 0, %s360
      %s361 = sphi 0, %s358
      %s362 = sphi 0, %s361
      %s378 = sphi 0, %s362
      %s384 = sphi 0, %s386
      %s387 = sphi 0, %s384
      %s388 = sphi 0, %s387
      %s404 = sphi 0, %s388
      %s410 = sphi 0, %s412
      %s413 = sphi 0, %s410
      %s414 = sphi 0, %s413
      %s430 = sphi 0, %s414
      %s436 = sphi 0, %s438
      %s439 = sphi 0, %s436
      %s440 = sphi 0, %s439
      %s456 = sphi 0, %s440
      %s462 = sphi 0, %s464
      %s465 = sphi 0, %s462
      %s466 = sphi 0, %s465
      %s482 = sphi 0, %s466
      %s488 = sphi 0, %s490
      %s491 = sphi 0, %s488
      %s492 = sphi 0, %s491
      %s508 = sphi 0, %s492
      %s514 = sphi 0, %s516
      %s517 = sphi 0, %s514
      %s518 = sphi 0, %s517
      %s534 = sphi 0, %s518
      %s538 = sphi 0, %s538
      %s540 = sphi 0, %s538
      %s541 = sphi 0, %s540
      %s555 = sphi 0, %s541
      %s559 = sphi 0, %s559
      %s561 = sphi 0, %s559
      %s562 = sphi 0, %s561
      %s576 = sphi 0, %s562
      %s580 = sphi 0, %s580
      %s582 = sphi 0, %s580
      %s583 = sphi 0, %s582
      %s597 = sphi 0, %s583
    $region4: #{tpu_custom_call.1} parent=1 // loop_header_branch
      %43 = sbr.rel (%p41) target = $region8
    $region5: #{tpu_custom_call.1} parent=1 // loop_body
      %s45 = ssub.s32 %s40, 1
      %s46 = ssub.s32 %s40, 2
      %s47 = sadd.s32 %s40, 1
      %s49 = sadd.s32 %s48, 1
      %p52 = scmp.eq.s32.totalorder %s40, 1
      %p53 = scmp.ne.s32.totalorder %s48, %s50
      %p54 = scmp.eq.s32.totalorder %s40, 0
      %p55 = por %p53, %p54
      %p56 = scmp.ne.s32.totalorder %s48, %s50
      %p57 = scmp.eq.s32.totalorder %s45, 1
      %p58 = por %p56, %p57
      %p59 = scmp.ne.s32.totalorder %s50, %s51
      %p60 = scmp.eq.s32.totalorder %s45, 0
      %p61 = por %p59, %p60
      %p62 = scmp.ne.s32.totalorder %s50, %s51
      %p63 = scmp.eq.s32.totalorder %s46, 1
      %p64 = por %p62, %p63
      %p66 = scmp.ne.s32.totalorder %s51, %s65
      %p67 = scmp.eq.s32.totalorder %s46, 0
      %p68 = por %p66, %p67
      %s70 = sadd.s32 %s69, 1
      %p73 = scmp.eq.s32.totalorder %s40, 1
      %p74 = scmp.ne.s32.totalorder %s69, %s71
      %p75 = scmp.eq.s32.totalorder %s40, 0
      %p76 = por %p74, %p75
      %p77 = scmp.ne.s32.totalorder %s69, %s71
      %p78 = scmp.eq.s32.totalorder %s45, 1
      %p79 = por %p77, %p78
      %p80 = scmp.ne.s32.totalorder %s71, %s72
      %p81 = scmp.eq.s32.totalorder %s45, 0
      %p82 = por %p80, %p81
      %p83 = scmp.ne.s32.totalorder %s71, %s72
      %p84 = scmp.eq.s32.totalorder %s46, 1
      %p85 = por %p83, %p84
      %p87 = scmp.ne.s32.totalorder %s72, %s86
      %p88 = scmp.eq.s32.totalorder %s46, 0
      %p89 = por %p87, %p88
      %s91 = sadd.s32 %s90, 1
      %p94 = scmp.eq.s32.totalorder %s40, 1
      %p95 = scmp.ne.s32.totalorder %s90, %s92
      %p96 = scmp.eq.s32.totalorder %s40, 0
      %p97 = por %p95, %p96
      %p98 = scmp.ne.s32.totalorder %s90, %s92
      %p99 = scmp.eq.s32.totalorder %s45, 1
      %p100 = por %p98, %p99
      %p101 = scmp.ne.s32.totalorder %s92, %s93
      %p102 = scmp.eq.s32.totalorder %s45, 0
      %p103 = por %p101, %p102
      %p104 = scmp.ne.s32.totalorder %s92, %s93
      %p105 = scmp.eq.s32.totalorder %s46, 1
      %p106 = por %p104, %p105
      %p108 = scmp.ne.s32.totalorder %s93, %s107
      %p109 = scmp.eq.s32.totalorder %s46, 0
      %p110 = por %p108, %p109
      %s112 = sadd.s32 %s111, 1
      %p115 = scmp.eq.s32.totalorder %s40, 1
      %p116 = scmp.ne.s32.totalorder %s111, %s113
      %p117 = scmp.eq.s32.totalorder %s40, 0
      %p118 = por %p116, %p117
      %p119 = scmp.ne.s32.totalorder %s111, %s113
      %p120 = scmp.eq.s32.totalorder %s45, 1
      %p121 = por %p119, %p120
      %p122 = scmp.ne.s32.totalorder %s113, %s114
      %p123 = scmp.eq.s32.totalorder %s45, 0
      %p124 = por %p122, %p123
      %p125 = scmp.ne.s32.totalorder %s113, %s114
      %p126 = scmp.eq.s32.totalorder %s46, 1
      %p127 = por %p125, %p126
      %p129 = scmp.ne.s32.totalorder %s114, %s128
      %p130 = scmp.eq.s32.totalorder %s46, 0
      %p131 = por %p129, %p130
      %s133 = sadd.s32 %s132, 1
      %p136 = scmp.eq.s32.totalorder %s40, 1
      %p137 = scmp.ne.s32.totalorder %s132, %s134
      %p138 = scmp.eq.s32.totalorder %s40, 0
      %p139 = por %p137, %p138
      %p140 = scmp.ne.s32.totalorder %s132, %s134
      %p141 = scmp.eq.s32.totalorder %s45, 1
      %p142 = por %p140, %p141
      %p143 = scmp.ne.s32.totalorder %s134, %s135
      %p144 = scmp.eq.s32.totalorder %s45, 0
      %p145 = por %p143, %p144
      %p146 = scmp.ne.s32.totalorder %s134, %s135
      %p147 = scmp.eq.s32.totalorder %s46, 1
      %p148 = por %p146, %p147
      %p150 = scmp.ne.s32.totalorder %s135, %s149
      %p151 = scmp.eq.s32.totalorder %s46, 0
      %p152 = por %p150, %p151
      %s154 = sadd.s32 %s153, 1
      %p157 = scmp.eq.s32.totalorder %s40, 1
      %p158 = scmp.ne.s32.totalorder %s153, %s155
      %p159 = scmp.eq.s32.totalorder %s40, 0
      %p160 = por %p158, %p159
      %p161 = scmp.ne.s32.totalorder %s153, %s155
      %p162 = scmp.eq.s32.totalorder %s45, 1
      %p163 = por %p161, %p162
      %p164 = scmp.ne.s32.totalorder %s155, %s156
      %p165 = scmp.eq.s32.totalorder %s45, 0
      %p166 = por %p164, %p165
      %p167 = scmp.ne.s32.totalorder %s155, %s156
      %p168 = scmp.eq.s32.totalorder %s46, 1
      %p169 = por %p167, %p168
      %p171 = scmp.ne.s32.totalorder %s156, %s170
      %p172 = scmp.eq.s32.totalorder %s46, 0
      %p173 = por %p171, %p172
      %s174 = ssub.s32 %s40, %s47
      %p175 = scmp.eq.s32.totalorder %s174, 0
      %s177 = sadd.s32 %s176, 1
      %s178 = scalar_select %p175, %s176, %s177
      %p181 = pneg %p175
      %p182 = scmp.eq.s32.totalorder %s40, 1
      %p183 = por %p181, %p182
      %p184 = scmp.ne.s32.totalorder %s176, %s179
      %p185 = scmp.eq.s32.totalorder %s40, 0
      %p186 = por %p184, %p185
      %p187 = scmp.ne.s32.totalorder %s176, %s179
      %p188 = scmp.eq.s32.totalorder %s45, 1
      %p189 = por %p187, %p188
      %p190 = scmp.ne.s32.totalorder %s179, %s180
      %p191 = scmp.eq.s32.totalorder %s45, 0
      %p192 = por %p190, %p191
      %p193 = scmp.ne.s32.totalorder %s179, %s180
      %p194 = scmp.eq.s32.totalorder %s46, 1
      %p195 = por %p193, %p194
      %p197 = scmp.ne.s32.totalorder %s180, %s196
      %p198 = scmp.eq.s32.totalorder %s46, 0
      %p199 = por %p197, %p198
      %s200 = ssub.s32 %s40, %s47
      %p201 = scmp.eq.s32.totalorder %s200, 0
      %s203 = sadd.s32 %s202, 1
      %s204 = scalar_select %p201, %s202, %s203
      %p207 = pneg %p201
      %p208 = scmp.eq.s32.totalorder %s40, 1
      %p209 = por %p207, %p208
      %p210 = scmp.ne.s32.totalorder %s202, %s205
      %p211 = scmp.eq.s32.totalorder %s40, 0
      %p212 = por %p210, %p211
      %p213 = scmp.ne.s32.totalorder %s202, %s205
      %p214 = scmp.eq.s32.totalorder %s45, 1
      %p215 = por %p213, %p214
      %p216 = scmp.ne.s32.totalorder %s205, %s206
      %p217 = scmp.eq.s32.totalorder %s45, 0
      %p218 = por %p216, %p217
      %p219 = scmp.ne.s32.totalorder %s205, %s206
      %p220 = scmp.eq.s32.totalorder %s46, 1
      %p221 = por %p219, %p220
      %p223 = scmp.ne.s32.totalorder %s206, %s222
      %p224 = scmp.eq.s32.totalorder %s46, 0
      %p225 = por %p223, %p224
      %s226 = ssub.s32 %s40, %s47
      %p227 = scmp.eq.s32.totalorder %s226, 0
      %s229 = sadd.s32 %s228, 1
      %s230 = scalar_select %p227, %s228, %s229
      %p233 = pneg %p227
      %p234 = scmp.eq.s32.totalorder %s40, 1
      %p235 = por %p233, %p234
      %p236 = scmp.ne.s32.totalorder %s228, %s231
      %p237 = scmp.eq.s32.totalorder %s40, 0
      %p238 = por %p236, %p237
      %p239 = scmp.ne.s32.totalorder %s228, %s231
      %p240 = scmp.eq.s32.totalorder %s45, 1
      %p241 = por %p239, %p240
      %p242 = scmp.ne.s32.totalorder %s231, %s232
      %p243 = scmp.eq.s32.totalorder %s45, 0
      %p244 = por %p242, %p243
      %p245 = scmp.ne.s32.totalorder %s231, %s232
      %p246 = scmp.eq.s32.totalorder %s46, 1
      %p247 = por %p245, %p246
      %p249 = scmp.ne.s32.totalorder %s232, %s248
      %p250 = scmp.eq.s32.totalorder %s46, 0
      %p251 = por %p249, %p250
      %s252 = ssub.s32 %s40, %s47
      %p253 = scmp.eq.s32.totalorder %s252, 0
      %s255 = sadd.s32 %s254, 1
      %s256 = scalar_select %p253, %s254, %s255
      %p259 = pneg %p253
      %p260 = scmp.eq.s32.totalorder %s40, 1
      %p261 = por %p259, %p260
      %p262 = scmp.ne.s32.totalorder %s254, %s257
      %p263 = scmp.eq.s32.totalorder %s40, 0
      %p264 = por %p262, %p263
      %p265 = scmp.ne.s32.totalorder %s254, %s257
      %p266 = scmp.eq.s32.totalorder %s45, 1
      %p267 = por %p265, %p266
      %p268 = scmp.ne.s32.totalorder %s257, %s258
      %p269 = scmp.eq.s32.totalorder %s45, 0
      %p270 = por %p268, %p269
      %p271 = scmp.ne.s32.totalorder %s257, %s258
      %p272 = scmp.eq.s32.totalorder %s46, 1
      %p273 = por %p271, %p272
      %p275 = scmp.ne.s32.totalorder %s258, %s274
      %p276 = scmp.eq.s32.totalorder %s46, 0
      %p277 = por %p275, %p276
      %s278 = ssub.s32 %s40, %s47
      %p279 = scmp.eq.s32.totalorder %s278, 0
      %s281 = sadd.s32 %s280, 1
      %s282 = scalar_select %p279, %s280, %s281
      %p285 = pneg %p279
      %p286 = scmp.eq.s32.totalorder %s40, 1
      %p287 = por %p285, %p286
      %p288 = scmp.ne.s32.totalorder %s280, %s283
      %p289 = scmp.eq.s32.totalorder %s40, 0
      %p290 = por %p288, %p289
      %p291 = scmp.ne.s32.totalorder %s280, %s283
      %p292 = scmp.eq.s32.totalorder %s45, 1
      %p293 = por %p291, %p292
      %p294 = scmp.ne.s32.totalorder %s283, %s284
      %p295 = scmp.eq.s32.totalorder %s45, 0
      %p296 = por %p294, %p295
      %p297 = scmp.ne.s32.totalorder %s283, %s284
      %p298 = scmp.eq.s32.totalorder %s46, 1
      %p299 = por %p297, %p298
      %p301 = scmp.ne.s32.totalorder %s284, %s300
      %p302 = scmp.eq.s32.totalorder %s46, 0
      %p303 = por %p301, %p302
      %s304 = ssub.s32 %s40, %s47
      %p305 = scmp.eq.s32.totalorder %s304, 0
      %s307 = sadd.s32 %s306, 1
      %s308 = scalar_select %p305, %s306, %s307
      %p311 = pneg %p305
      %p312 = scmp.eq.s32.totalorder %s40, 1
      %p313 = por %p311, %p312
      %p314 = scmp.ne.s32.totalorder %s306, %s309
      %p315 = scmp.eq.s32.totalorder %s40, 0
      %p316 = por %p314, %p315
      %p317 = scmp.ne.s32.totalorder %s306, %s309
      %p318 = scmp.eq.s32.totalorder %s45, 1
      %p319 = por %p317, %p318
      %p320 = scmp.ne.s32.totalorder %s309, %s310
      %p321 = scmp.eq.s32.totalorder %s45, 0
      %p322 = por %p320, %p321
      %p323 = scmp.ne.s32.totalorder %s309, %s310
      %p324 = scmp.eq.s32.totalorder %s46, 1
      %p325 = por %p323, %p324
      %p327 = scmp.ne.s32.totalorder %s310, %s326
      %p328 = scmp.eq.s32.totalorder %s46, 0
      %p329 = por %p327, %p328
      %s330 = ssub.s32 %s40, %s47
      %p331 = scmp.eq.s32.totalorder %s330, 0
      %s333 = sadd.s32 %s332, 1
      %s334 = scalar_select %p331, %s332, %s333
      %p337 = pneg %p331
      %p338 = scmp.eq.s32.totalorder %s40, 1
      %p339 = por %p337, %p338
      %p340 = scmp.ne.s32.totalorder %s332, %s335
      %p341 = scmp.eq.s32.totalorder %s40, 0
      %p342 = por %p340, %p341
      %p343 = scmp.ne.s32.totalorder %s332, %s335
      %p344 = scmp.eq.s32.totalorder %s45, 1
      %p345 = por %p343, %p344
      %p346 = scmp.ne.s32.totalorder %s335, %s336
      %p347 = scmp.eq.s32.totalorder %s45, 0
      %p348 = por %p346, %p347
      %p349 = scmp.ne.s32.totalorder %s335, %s336
      %p350 = scmp.eq.s32.totalorder %s46, 1
      %p351 = por %p349, %p350
      %p353 = scmp.ne.s32.totalorder %s336, %s352
      %p354 = scmp.eq.s32.totalorder %s46, 0
      %p355 = por %p353, %p354
      %s356 = ssub.s32 %s40, %s47
      %p357 = scmp.eq.s32.totalorder %s356, 0
      %s359 = sadd.s32 %s358, 1
      %s360 = scalar_select %p357, %s358, %s359
      %p363 = pneg %p357
      %p364 = scmp.eq.s32.totalorder %s40, 1
      %p365 = por %p363, %p364
      %p366 = scmp.ne.s32.totalorder %s358, %s361
      %p367 = scmp.eq.s32.totalorder %s40, 0
      %p368 = por %p366, %p367
      %p369 = scmp.ne.s32.totalorder %s358, %s361
      %p370 = scmp.eq.s32.totalorder %s45, 1
      %p371 = por %p369, %p370
      %p372 = scmp.ne.s32.totalorder %s361, %s362
      %p373 = scmp.eq.s32.totalorder %s45, 0
      %p374 = por %p372, %p373
      %p375 = scmp.ne.s32.totalorder %s361, %s362
      %p376 = scmp.eq.s32.totalorder %s46, 1
      %p377 = por %p375, %p376
      %p379 = scmp.ne.s32.totalorder %s362, %s378
      %p380 = scmp.eq.s32.totalorder %s46, 0
      %p381 = por %p379, %p380
      %s382 = ssub.s32 %s40, %s47
      %p383 = scmp.eq.s32.totalorder %s382, 0
      %s385 = sadd.s32 %s384, 1
      %s386 = scalar_select %p383, %s384, %s385
      %p389 = pneg %p383
      %p390 = scmp.eq.s32.totalorder %s40, 1
      %p391 = por %p389, %p390
      %p392 = scmp.ne.s32.totalorder %s384, %s387
      %p393 = scmp.eq.s32.totalorder %s40, 0
      %p394 = por %p392, %p393
      %p395 = scmp.ne.s32.totalorder %s384, %s387
      %p396 = scmp.eq.s32.totalorder %s45, 1
      %p397 = por %p395, %p396
      %p398 = scmp.ne.s32.totalorder %s387, %s388
      %p399 = scmp.eq.s32.totalorder %s45, 0
      %p400 = por %p398, %p399
      %p401 = scmp.ne.s32.totalorder %s387, %s388
      %p402 = scmp.eq.s32.totalorder %s46, 1
      %p403 = por %p401, %p402
      %p405 = scmp.ne.s32.totalorder %s388, %s404
      %p406 = scmp.eq.s32.totalorder %s46, 0
      %p407 = por %p405, %p406
      %s408 = ssub.s32 %s40, %s47
      %p409 = scmp.eq.s32.totalorder %s408, 0
      %s411 = sadd.s32 %s410, 1
      %s412 = scalar_select %p409, %s410, %s411
      %p415 = pneg %p409
      %p416 = scmp.eq.s32.totalorder %s40, 1
      %p417 = por %p415, %p416
      %p418 = scmp.ne.s32.totalorder %s410, %s413
      %p419 = scmp.eq.s32.totalorder %s40, 0
      %p420 = por %p418, %p419
      %p421 = scmp.ne.s32.totalorder %s410, %s413
      %p422 = scmp.eq.s32.totalorder %s45, 1
      %p423 = por %p421, %p422
      %p424 = scmp.ne.s32.totalorder %s413, %s414
      %p425 = scmp.eq.s32.totalorder %s45, 0
      %p426 = por %p424, %p425
      %p427 = scmp.ne.s32.totalorder %s413, %s414
      %p428 = scmp.eq.s32.totalorder %s46, 1
      %p429 = por %p427, %p428
      %p431 = scmp.ne.s32.totalorder %s414, %s430
      %p432 = scmp.eq.s32.totalorder %s46, 0
      %p433 = por %p431, %p432
      %s434 = ssub.s32 %s40, %s47
      %p435 = scmp.eq.s32.totalorder %s434, 0
      %s437 = sadd.s32 %s436, 1
      %s438 = scalar_select %p435, %s436, %s437
      %p441 = pneg %p435
      %p442 = scmp.eq.s32.totalorder %s40, 1
      %p443 = por %p441, %p442
      %p444 = scmp.ne.s32.totalorder %s436, %s439
      %p445 = scmp.eq.s32.totalorder %s40, 0
      %p446 = por %p444, %p445
      %p447 = scmp.ne.s32.totalorder %s436, %s439
      %p448 = scmp.eq.s32.totalorder %s45, 1
      %p449 = por %p447, %p448
      %p450 = scmp.ne.s32.totalorder %s439, %s440
      %p451 = scmp.eq.s32.totalorder %s45, 0
      %p452 = por %p450, %p451
      %p453 = scmp.ne.s32.totalorder %s439, %s440
      %p454 = scmp.eq.s32.totalorder %s46, 1
      %p455 = por %p453, %p454
      %p457 = scmp.ne.s32.totalorder %s440, %s456
      %p458 = scmp.eq.s32.totalorder %s46, 0
      %p459 = por %p457, %p458
      %s460 = ssub.s32 %s40, %s47
      %p461 = scmp.eq.s32.totalorder %s460, 0
      %s463 = sadd.s32 %s462, 1
      %s464 = scalar_select %p461, %s462, %s463
      %p467 = pneg %p461
      %p468 = scmp.eq.s32.totalorder %s40, 1
      %p469 = por %p467, %p468
      %p470 = scmp.ne.s32.totalorder %s462, %s465
      %p471 = scmp.eq.s32.totalorder %s40, 0
      %p472 = por %p470, %p471
      %p473 = scmp.ne.s32.totalorder %s462, %s465
      %p474 = scmp.eq.s32.totalorder %s45, 1
      %p475 = por %p473, %p474
      %p476 = scmp.ne.s32.totalorder %s465, %s466
      %p477 = scmp.eq.s32.totalorder %s45, 0
      %p478 = por %p476, %p477
      %p479 = scmp.ne.s32.totalorder %s465, %s466
      %p480 = scmp.eq.s32.totalorder %s46, 1
      %p481 = por %p479, %p480
      %p483 = scmp.ne.s32.totalorder %s466, %s482
      %p484 = scmp.eq.s32.totalorder %s46, 0
      %p485 = por %p483, %p484
      %s486 = ssub.s32 %s40, %s47
      %p487 = scmp.eq.s32.totalorder %s486, 0
      %s489 = sadd.s32 %s488, 1
      %s490 = scalar_select %p487, %s488, %s489
      %p493 = pneg %p487
      %p494 = scmp.eq.s32.totalorder %s40, 1
      %p495 = por %p493, %p494
      %p496 = scmp.ne.s32.totalorder %s488, %s491
      %p497 = scmp.eq.s32.totalorder %s40, 0
      %p498 = por %p496, %p497
      %p499 = scmp.ne.s32.totalorder %s488, %s491
      %p500 = scmp.eq.s32.totalorder %s45, 1
      %p501 = por %p499, %p500
      %p502 = scmp.ne.s32.totalorder %s491, %s492
      %p503 = scmp.eq.s32.totalorder %s45, 0
      %p504 = por %p502, %p503
      %p505 = scmp.ne.s32.totalorder %s491, %s492
      %p506 = scmp.eq.s32.totalorder %s46, 1
      %p507 = por %p505, %p506
      %p509 = scmp.ne.s32.totalorder %s492, %s508
      %p510 = scmp.eq.s32.totalorder %s46, 0
      %p511 = por %p509, %p510
      %s512 = ssub.s32 %s40, %s47
      %p513 = scmp.eq.s32.totalorder %s512, 0
      %s515 = sadd.s32 %s514, 1
      %s516 = scalar_select %p513, %s514, %s515
      %p519 = pneg %p513
      %p520 = scmp.eq.s32.totalorder %s40, 1
      %p521 = por %p519, %p520
      %p522 = scmp.ne.s32.totalorder %s514, %s517
      %p523 = scmp.eq.s32.totalorder %s40, 0
      %p524 = por %p522, %p523
      %p525 = scmp.ne.s32.totalorder %s514, %s517
      %p526 = scmp.eq.s32.totalorder %s45, 1
      %p527 = por %p525, %p526
      %p528 = scmp.ne.s32.totalorder %s517, %s518
      %p529 = scmp.eq.s32.totalorder %s45, 0
      %p530 = por %p528, %p529
      %p531 = scmp.ne.s32.totalorder %s517, %s518
      %p532 = scmp.eq.s32.totalorder %s46, 1
      %p533 = por %p531, %p532
      %p535 = scmp.ne.s32.totalorder %s518, %s534
      %p536 = scmp.eq.s32.totalorder %s46, 0
      %p537 = por %p535, %p536
      %s539 = sadd.s32 %s538, 1
      %p542 = scmp.eq.s32.totalorder %s40, 1
      %p543 = scmp.ne.s32.totalorder %s538, %s540
      %p544 = scmp.eq.s32.totalorder %s40, 0
      %p545 = por %p543, %p544
      %p546 = scmp.ne.s32.totalorder %s538, %s540
      %p547 = scmp.eq.s32.totalorder %s45, 1
      %p548 = por %p546, %p547
      %p549 = scmp.ne.s32.totalorder %s540, %s541
      %p550 = scmp.eq.s32.totalorder %s45, 0
      %p551 = por %p549, %p550
      %p552 = scmp.ne.s32.totalorder %s540, %s541
      %p553 = scmp.eq.s32.totalorder %s46, 1
      %p554 = por %p552, %p553
      %p556 = scmp.ne.s32.totalorder %s541, %s555
      %p557 = scmp.eq.s32.totalorder %s46, 0
      %p558 = por %p556, %p557
      %s560 = sadd.s32 %s559, 1
      %p563 = scmp.eq.s32.totalorder %s40, 1
      %p564 = scmp.ne.s32.totalorder %s559, %s561
      %p565 = scmp.eq.s32.totalorder %s40, 0
      %p566 = por %p564, %p565
      %p567 = scmp.ne.s32.totalorder %s559, %s561
      %p568 = scmp.eq.s32.totalorder %s45, 1
      %p569 = por %p567, %p568
      %p570 = scmp.ne.s32.totalorder %s561, %s562
      %p571 = scmp.eq.s32.totalorder %s45, 0
      %p572 = por %p570, %p571
      %p573 = scmp.ne.s32.totalorder %s561, %s562
      %p574 = scmp.eq.s32.totalorder %s46, 1
      %p575 = por %p573, %p574
      %p577 = scmp.ne.s32.totalorder %s562, %s576
      %p578 = scmp.eq.s32.totalorder %s46, 0
      %p579 = por %p577, %p578
      %s581 = sadd.s32 %s580, 1
      %p584 = scmp.eq.s32.totalorder %s40, 1
      %p585 = scmp.ne.s32.totalorder %s580, %s582
      %p586 = scmp.eq.s32.totalorder %s40, 0
      %p587 = por %p585, %p586
      %p588 = scmp.ne.s32.totalorder %s580, %s582
      %p589 = scmp.eq.s32.totalorder %s45, 1
      %p590 = por %p588, %p589
      %p591 = scmp.ne.s32.totalorder %s582, %s583
      %p592 = scmp.eq.s32.totalorder %s45, 0
      %p593 = por %p591, %p592
      %p594 = scmp.ne.s32.totalorder %s582, %s583
      %p595 = scmp.eq.s32.totalorder %s46, 1
      %p596 = por %p594, %p595
      %p598 = scmp.ne.s32.totalorder %s583, %s597
      %p599 = scmp.eq.s32.totalorder %s46, 0
      %p600 = por %p598, %p599
      %p601 = scmp.le.s32.totalorder 1, %s40
      %p602 = scmp.lt.s32.totalorder %s40, 3
      %p603 = pnand %p601, %p602
      %p604 = pneg %p603
      // Predicated region
      $region9: #{tpu_custom_call.1} parent=5 // pred_check
        _
      $region10: #{tpu_custom_call.1} parent=5 // pred_check_branch
        %606 = sbr.rel (%p603) target = $region12
      $region11: #{tpu_custom_call.1} parent=5 // pred_region
        %s607 = ssub.s32 %s40, 1
        // Predicated region
        $region13: #{tpu_custom_call.1} parent=11 // pred_check
          %p608 = pneg %p61
        $region14: #{tpu_custom_call.1} parent=11 // pred_check_branch
          %610 = sbr.rel (%p608) target = $region16
        $region15: #{tpu_custom_call.1} parent=11 // pred_region
          _
        $region16: #{tpu_custom_call.1} parent=11 // pred_fallthru
          _
        // Predicated region
        $region17: #{tpu_custom_call.1} parent=11 // pred_check
          %p611 = pneg %p82
        $region18: #{tpu_custom_call.1} parent=11 // pred_check_branch
          %613 = sbr.rel (%p611) target = $region20
        $region19: #{tpu_custom_call.1} parent=11 // pred_region
          %615 = vsyncadd [#allocation4], 0
          %s616 = sshll.u32 %s1, 4
          %s617 = int_to_ptr.hbm [resolvable:$true] %s616
          %s618 = sshll.u32 [#allocation3], 4
          %s619 = int_to_ptr.vmem [resolvable:$true] %s618
          %624 = dma.hbm_to_vmem [thread:$0]  %s617, 1024, %s619, [#allocation4], 128, 128, 8
        $region20: #{tpu_custom_call.1} parent=11 // pred_fallthru
          _
        // Predicated region
        $region21: #{tpu_custom_call.1} parent=11 // pred_check
          %p625 = pneg %p103
        $region22: #{tpu_custom_call.1} parent=11 // pred_check_branch
          %627 = sbr.rel (%p625) target = $region24
        $region23: #{tpu_custom_call.1} parent=11 // pred_region
          %629 = vsyncadd [#allocation7], 0
          %s631 = sshll.u32 %s2, 4
          %s632 = int_to_ptr.hbm [resolvable:$true] %s631
          %s633 = sshll.u32 [#allocation6], 4
          %s634 = int_to_ptr.vmem [resolvable:$true] %s633
          %636 = dma.hbm_to_vmem [thread:$0]  %s632, 16, %s634, [#allocation7]
        $region24: #{tpu_custom_call.1} parent=11 // pred_fallthru
          _
        // Predicated region
        $region25: #{tpu_custom_call.1} parent=11 // pred_check
          %p637 = pneg %p124
        $region26: #{tpu_custom_call.1} parent=11 // pred_check_branch
          %639 = sbr.rel (%p637) target = $region28
        $region27: #{tpu_custom_call.1} parent=11 // pred_region
          _
        $region28: #{tpu_custom_call.1} parent=11 // pred_fallthru
          _
        // Predicated region
        $region29: #{tpu_custom_call.1} parent=11 // pred_check
          %p640 = pneg %p145
        $region30: #{tpu_custom_call.1} parent=11 // pred_check_branch
          %642 = sbr.rel (%p640) target = $region32
        $region31: #{tpu_custom_call.1} parent=11 // pred_region
          _
        $region32: #{tpu_custom_call.1} parent=11 // pred_fallthru
          _
        // Predicated region
        $region33: #{tpu_custom_call.1} parent=11 // pred_check
          %p643 = pneg %p166
        $region34: #{tpu_custom_call.1} parent=11 // pred_check_branch
          %645 = sbr.rel (%p643) target = $region36
        $region35: #{tpu_custom_call.1} parent=11 // pred_region
          %647 = vsyncadd [#allocation7], 0
          %s649 = sshll.u32 %s5, 4
          %s650 = int_to_ptr.hbm [resolvable:$true] %s649
          %s651 = sshll.u32 [#allocation8], 4
          %s652 = int_to_ptr.vmem [resolvable:$true] %s651
          %654 = dma.hbm_to_vmem [thread:$0]  %s650, 16, %s652, [#allocation7]
        $region36: #{tpu_custom_call.1} parent=11 // pred_fallthru
          _
        // Predicated region
        $region37: #{tpu_custom_call.1} parent=11 // pred_check
          %p655 = pneg %p551
        $region38: #{tpu_custom_call.1} parent=11 // pred_check_branch
          %657 = sbr.rel (%p655) target = $region40
        $region39: #{tpu_custom_call.1} parent=11 // pred_region
          %659 = vsyncadd [#allocation16], 0
          %s660 = sshll.u32 %s20, 4
          %s661 = int_to_ptr.hbm [resolvable:$true] %s660
          %s662 = sshll.u32 [#allocation17], 4
          %s663 = int_to_ptr.vmem [resolvable:$true] %s662
          %668 = dma.hbm_to_vmem [thread:$0]  %s661, 1024, %s663, [#allocation16], 64, 64, 4
        $region40: #{tpu_custom_call.1} parent=11 // pred_fallthru
          _
        // Predicated region
        $region41: #{tpu_custom_call.1} parent=11 // pred_check
          %p669 = pneg %p572
        $region42: #{tpu_custom_call.1} parent=11 // pred_check_branch
          %671 = sbr.rel (%p669) target = $region44
        $region43: #{tpu_custom_call.1} parent=11 // pred_region
          _
        $region44: #{tpu_custom_call.1} parent=11 // pred_fallthru
          _
      $region12: #{tpu_custom_call.1} parent=5 // pred_fallthru
        _
      %p672 = scmp.lt.s32.totalorder %s40, 2
      // Predicated region
      $region45: #{tpu_custom_call.1} parent=5 // pred_check
        %p673 = pneg %p672
      $region46: #{tpu_custom_call.1} parent=5 // pred_check_branch
        %675 = sbr.rel (%p673) target = $region48
      $region47: #{tpu_custom_call.1} parent=5 // pred_region
        // Predicated region
        $region49: #{tpu_custom_call.1} parent=47 // pred_check
          %p676 = pneg %p186
        $region50: #{tpu_custom_call.1} parent=47 // pred_check_branch
          %678 = sbr.rel (%p676) target = $region52
        $region51: #{tpu_custom_call.1} parent=47 // pred_region
          %s679 = sand.u32 %s40, 1
          %s680 = scalar_lea.sflag [#allocation10], %s679
          %s681 = sand.u32 %s176, 1
          %s682 = smul.addr %s681, 192
          %s683 = scalar_lea.vmem [#allocation9], %s682
          %685 = vsyncadd %s680, 0
          %s686 = smul.addr %s40, 48
          %s687 = smul.addr %s686, 4
          %s688 = scalar_lea.hbm %s6, %s687
          %s689 = sshll.u32 %s688, 4
          %s690 = int_to_ptr.hbm [resolvable:$true] %s689
          %s691 = sshll.u32 %s683, 4
          %s692 = int_to_ptr.vmem [resolvable:$true] %s691
          %697 = dma.hbm_to_vmem [thread:$0]  %s690, 3072, %s692, %s680, 192, 192, 12
        $region52: #{tpu_custom_call.1} parent=47 // pred_fallthru
          _
        // Predicated region
        $region53: #{tpu_custom_call.1} parent=47 // pred_check
          %p698 = pneg %p212
        $region54: #{tpu_custom_call.1} parent=47 // pred_check_branch
          %700 = sbr.rel (%p698) target = $region56
        $region55: #{tpu_custom_call.1} parent=47 // pred_region
          %p701 = scmp.lt.s32.totalorder %s40, 1
          %s702 = scalar_select %p701, %s40, 1
          %s703 = smul.addr %s702, 3
          %s704 = scalar_lea.vmem %s7, %s703
        $region56: #{tpu_custom_call.1} parent=47 // pred_fallthru
          _
        // Predicated region
        $region57: #{tpu_custom_call.1} parent=47 // pred_check
          %p705 = pneg %p238
        $region58: #{tpu_custom_call.1} parent=47 // pred_check_branch
          %707 = sbr.rel (%p705) target = $region60
        $region59: #{tpu_custom_call.1} parent=47 // pred_region
          %s708 = sand.u32 %s40, 1
          %s709 = scalar_lea.sflag [#allocation10], %s708
          %s710 = sand.u32 %s228, 1
          %s711 = smul.addr %s710, 64
          %s712 = scalar_lea.vmem [#allocation11], %s711
          %714 = vsyncadd %s709, 0
          %s715 = smul.addr %s40, 16
          %s716 = smul.addr %s715, 4
          %s717 = scalar_lea.hbm %s8, %s716
          %s718 = sshll.u32 %s717, 4
          %s719 = int_to_ptr.hbm [resolvable:$true] %s718
          %s720 = sshll.u32 %s712, 4
          %s721 = int_to_ptr.vmem [resolvable:$true] %s720
          %726 = dma.hbm_to_vmem [thread:$0]  %s719, 1024, %s721, %s709, 64, 64, 4
        $region60: #{tpu_custom_call.1} parent=47 // pred_fallthru
          _
        // Predicated region
        $region61: #{tpu_custom_call.1} parent=47 // pred_check
          %p727 = pneg %p264
        $region62: #{tpu_custom_call.1} parent=47 // pred_check_branch
          %729 = sbr.rel (%p727) target = $region64
        $region63: #{tpu_custom_call.1} parent=47 // pred_region
          %p730 = scmp.lt.s32.totalorder %s40, 1
          %s731 = scalar_select %p730, %s40, 1
          %s732 = scalar_lea.vmem %s9, %s731
        $region64: #{tpu_custom_call.1} parent=47 // pred_fallthru
          _
        // Predicated region
        $region65: #{tpu_custom_call.1} parent=47 // pred_check
          %p733 = pneg %p290
        $region66: #{tpu_custom_call.1} parent=47 // pred_check_branch
          %735 = sbr.rel (%p733) target = $region68
        $region67: #{tpu_custom_call.1} parent=47 // pred_region
          %s736 = sand.u32 %s40, 1
          %s737 = scalar_lea.sflag [#allocation13], %s736
          %s738 = sand.u32 %s280, 1
          %s739 = smul.addr %s738, 512
          %s740 = scalar_lea.vmem [#allocation12], %s739
          %742 = vsyncadd %s737, 0
          %s743 = smul.addr %s40, 64
          %s744 = smul.addr %s743, 8
          %s745 = scalar_lea.hbm %s10, %s744
          %s746 = sshll.u32 %s745, 4
          %s747 = int_to_ptr.hbm [resolvable:$true] %s746
          %s748 = sshll.u32 %s740, 4
          %s749 = int_to_ptr.vmem [resolvable:$true] %s748
          %754 = dma.hbm_to_vmem [thread:$0]  %s747, 8192, %s749, %s737, 2048, 2048, 128
        $region68: #{tpu_custom_call.1} parent=47 // pred_fallthru
          _
        // Predicated region
        $region69: #{tpu_custom_call.1} parent=47 // pred_check
          %p755 = pneg %p316
        $region70: #{tpu_custom_call.1} parent=47 // pred_check_branch
          %757 = sbr.rel (%p755) target = $region72
        $region71: #{tpu_custom_call.1} parent=47 // pred_region
          %p758 = scmp.lt.s32.totalorder %s40, 1
          %s759 = scalar_select %p758, %s40, 1
          %s760 = smul.addr %s759, 16
          %s761 = scalar_lea.vmem %s11, %s760
        $region72: #{tpu_custom_call.1} parent=47 // pred_fallthru
          _
        // Predicated region
        $region73: #{tpu_custom_call.1} parent=47 // pred_check
          %p762 = pneg %p342
        $region74: #{tpu_custom_call.1} parent=47 // pred_check_branch
          %764 = sbr.rel (%p762) target = $region76
        $region75: #{tpu_custom_call.1} parent=47 // pred_region
          %s765 = sand.u32 %s40, 1
          %s766 = scalar_lea.sflag [#allocation13], %s765
          %s767 = sand.u32 %s332, 1
          %s768 = smul.addr %s767, 16
          %s769 = scalar_lea.vmem [#allocation14], %s768
          %771 = vsyncadd %s766, 0
          %s772 = smul.addr %s40, 16
          %s773 = scalar_lea.hbm %s12, %s772
          %s775 = sshll.u32 %s773, 4
          %s776 = int_to_ptr.hbm [resolvable:$true] %s775
          %s777 = sshll.u32 %s769, 4
          %s778 = int_to_ptr.vmem [resolvable:$true] %s777
          %780 = dma.hbm_to_vmem [thread:$0]  %s776, 256, %s778, %s766
        $region76: #{tpu_custom_call.1} parent=47 // pred_fallthru
          _
        // Predicated region
        $region77: #{tpu_custom_call.1} parent=47 // pred_check
          %p781 = pneg %p368
        $region78: #{tpu_custom_call.1} parent=47 // pred_check_branch
          %783 = sbr.rel (%p781) target = $region80
        $region79: #{tpu_custom_call.1} parent=47 // pred_region
          %s784 = sand.u32 %s40, 1
          %s785 = scalar_lea.sflag [#allocation16], %s784
          %s786 = sand.u32 %s358, 1
          %s787 = smul.addr %s786, 512
          %s788 = scalar_lea.vmem [#allocation15], %s787
          %790 = vsyncadd %s785, 0
          %s791 = smul.addr %s40, 64
          %s792 = smul.addr %s791, 8
          %s793 = scalar_lea.hbm %s13, %s792
          %s794 = sshll.u32 %s793, 4
          %s795 = int_to_ptr.hbm [resolvable:$true] %s794
          %s796 = sshll.u32 %s788, 4
          %s797 = int_to_ptr.vmem [resolvable:$true] %s796
          %802 = dma.hbm_to_vmem [thread:$0]  %s795, 8192, %s797, %s785, 128, 128, 8
        $region80: #{tpu_custom_call.1} parent=47 // pred_fallthru
          _
        // Predicated region
        $region81: #{tpu_custom_call.1} parent=47 // pred_check
          %p803 = pneg %p394
        $region82: #{tpu_custom_call.1} parent=47 // pred_check_branch
          %805 = sbr.rel (%p803) target = $region84
        $region83: #{tpu_custom_call.1} parent=47 // pred_region
          %p806 = scmp.lt.s32.totalorder %s40, 1
          %s807 = scalar_select %p806, %s40, 1
          %s808 = scalar_lea.vmem %s14, %s807
        $region84: #{tpu_custom_call.1} parent=47 // pred_fallthru
          _
        // Predicated region
        $region85: #{tpu_custom_call.1} parent=47 // pred_check
          %p809 = pneg %p420
        $region86: #{tpu_custom_call.1} parent=47 // pred_check_branch
          %811 = sbr.rel (%p809) target = $region88
        $region87: #{tpu_custom_call.1} parent=47 // pred_region
          %p812 = scmp.lt.s32.totalorder %s40, 1
          %s813 = scalar_select %p812, %s40, 1
          %s814 = scalar_lea.vmem %s15, %s813
        $region88: #{tpu_custom_call.1} parent=47 // pred_fallthru
          _
        // Predicated region
        $region89: #{tpu_custom_call.1} parent=47 // pred_check
          %p815 = pneg %p446
        $region90: #{tpu_custom_call.1} parent=47 // pred_check_branch
          %817 = sbr.rel (%p815) target = $region92
        $region91: #{tpu_custom_call.1} parent=47 // pred_region
          %p818 = scmp.lt.s32.totalorder %s40, 1
          %s819 = scalar_select %p818, %s40, 1
          %s820 = scalar_lea.vmem %s16, %s819
        $region92: #{tpu_custom_call.1} parent=47 // pred_fallthru
          _
        // Predicated region
        $region93: #{tpu_custom_call.1} parent=47 // pred_check
          %p821 = pneg %p472
        $region94: #{tpu_custom_call.1} parent=47 // pred_check_branch
          %823 = sbr.rel (%p821) target = $region96
        $region95: #{tpu_custom_call.1} parent=47 // pred_region
          %p824 = scmp.lt.s32.totalorder %s40, 1
          %s825 = scalar_select %p824, %s40, 1
          %s826 = scalar_lea.vmem %s17, %s825
        $region96: #{tpu_custom_call.1} parent=47 // pred_fallthru
          _
        // Predicated region
        $region97: #{tpu_custom_call.1} parent=47 // pred_check
          %p827 = pneg %p498
        $region98: #{tpu_custom_call.1} parent=47 // pred_check_branch
          %829 = sbr.rel (%p827) target = $region100
        $region99: #{tpu_custom_call.1} parent=47 // pred_region
          %p830 = scmp.lt.s32.totalorder %s40, 1
          %s831 = scalar_select %p830, %s40, 1
          %s832 = scalar_lea.vmem %s18, %s831
        $region100: #{tpu_custom_call.1} parent=47 // pred_fallthru
          _
        // Predicated region
        $region101: #{tpu_custom_call.1} parent=47 // pred_check
          %p833 = pneg %p524
        $region102: #{tpu_custom_call.1} parent=47 // pred_check_branch
          %835 = sbr.rel (%p833) target = $region104
        $region103: #{tpu_custom_call.1} parent=47 // pred_region
          %p836 = scmp.lt.s32.totalorder %s40, 1
          %s837 = scalar_select %p836, %s40, 1
          %s838 = scalar_lea.vmem %s19, %s837
        $region104: #{tpu_custom_call.1} parent=47 // pred_fallthru
          _
      $region48: #{tpu_custom_call.1} parent=5 // pred_fallthru
        _
      %p839 = scmp.le.s32.totalorder 1, %s40
      %p840 = scmp.lt.s32.totalorder %s40, 3
      %p841 = pnand %p839, %p840
      %p842 = pneg %p841
      // Predicated region
      $region105: #{tpu_custom_call.1} parent=5 // pred_check
        _
      $region106: #{tpu_custom_call.1} parent=5 // pred_check_branch
        %844 = sbr.rel (%p841) target = $region108
      $region107: #{tpu_custom_call.1} parent=5 // pred_region
        %s845 = ssub.s32 %s40, 1
        // Predicated region
        $region109: #{tpu_custom_call.1} parent=107 // pred_check
          %p846 = pneg %p82
        $region110: #{tpu_custom_call.1} parent=107 // pred_check_branch
          %848 = sbr.rel (%p846) target = $region112
        $region111: #{tpu_custom_call.1} parent=107 // pred_region
          %850 = dma.done [#allocation4], 1024
        $region112: #{tpu_custom_call.1} parent=107 // pred_fallthru
          _
        // Predicated region
        $region113: #{tpu_custom_call.1} parent=107 // pred_check
          %p851 = pneg %p103
        $region114: #{tpu_custom_call.1} parent=107 // pred_check_branch
          %853 = sbr.rel (%p851) target = $region116
        $region115: #{tpu_custom_call.1} parent=107 // pred_region
          %855 = dma.done [#allocation7], 16
        $region116: #{tpu_custom_call.1} parent=107 // pred_fallthru
          _
        // Predicated region
        $region117: #{tpu_custom_call.1} parent=107 // pred_check
          %p856 = pneg %p166
        $region118: #{tpu_custom_call.1} parent=107 // pred_check_branch
          %858 = sbr.rel (%p856) target = $region120
        $region119: #{tpu_custom_call.1} parent=107 // pred_region
          %860 = dma.done [#allocation7], 16
        $region120: #{tpu_custom_call.1} parent=107 // pred_fallthru
          _
        %s861 = sand.u32 %s45, 1
        %s862 = scalar_lea.sflag [#allocation10], %s861
        %s863 = sand.u32 %s179, 1
        %s864 = smul.addr %s863, 192
        %s865 = scalar_lea.vmem [#allocation9], %s864
        // Predicated region
        $region121: #{tpu_custom_call.1} parent=107 // pred_check
          %p866 = pneg %p192
        $region122: #{tpu_custom_call.1} parent=107 // pred_check_branch
          %868 = sbr.rel (%p866) target = $region124
        $region123: #{tpu_custom_call.1} parent=107 // pred_region
          %870 = dma.done %s862, 3072
        $region124: #{tpu_custom_call.1} parent=107 // pred_fallthru
          _
        %s871 = sand.u32 %s45, 1
        %s872 = scalar_lea.sflag [#allocation10], %s871
        %s873 = sand.u32 %s231, 1
        %s874 = smul.addr %s873, 64
        %s875 = scalar_lea.vmem [#allocation11], %s874
        // Predicated region
        $region125: #{tpu_custom_call.1} parent=107 // pred_check
          %p876 = pneg %p244
        $region126: #{tpu_custom_call.1} parent=107 // pred_check_branch
          %878 = sbr.rel (%p876) target = $region128
        $region127: #{tpu_custom_call.1} parent=107 // pred_region
          %880 = dma.done %s872, 1024
        $region128: #{tpu_custom_call.1} parent=107 // pred_fallthru
          _
        %s881 = sand.u32 %s45, 1
        %s882 = scalar_lea.sflag [#allocation13], %s881
        %s883 = sand.u32 %s283, 1
        %s884 = smul.addr %s883, 512
        %s885 = scalar_lea.vmem [#allocation12], %s884
        // Predicated region
        $region129: #{tpu_custom_call.1} parent=107 // pred_check
          %p886 = pneg %p296
        $region130: #{tpu_custom_call.1} parent=107 // pred_check_branch
          %888 = sbr.rel (%p886) target = $region132
        $region131: #{tpu_custom_call.1} parent=107 // pred_region
          %890 = dma.done %s882, 8192
        $region132: #{tpu_custom_call.1} parent=107 // pred_fallthru
          _
        %s891 = sand.u32 %s45, 1
        %s892 = scalar_lea.sflag [#allocation13], %s891
        %s893 = sand.u32 %s335, 1
        %s894 = smul.addr %s893, 16
        %s895 = scalar_lea.vmem [#allocation14], %s894
        // Predicated region
        $region133: #{tpu_custom_call.1} parent=107 // pred_check
          %p896 = pneg %p348
        $region134: #{tpu_custom_call.1} parent=107 // pred_check_branch
          %898 = sbr.rel (%p896) target = $region136
        $region135: #{tpu_custom_call.1} parent=107 // pred_region
          %900 = dma.done %s892, 256
        $region136: #{tpu_custom_call.1} parent=107 // pred_fallthru
          _
        %s901 = sand.u32 %s45, 1
        %s902 = scalar_lea.sflag [#allocation16], %s901
        %s903 = sand.u32 %s361, 1
        %s904 = smul.addr %s903, 512
        %s905 = scalar_lea.vmem [#allocation15], %s904
        // Predicated region
        $region137: #{tpu_custom_call.1} parent=107 // pred_check
          %p906 = pneg %p374
        $region138: #{tpu_custom_call.1} parent=107 // pred_check_branch
          %908 = sbr.rel (%p906) target = $region140
        $region139: #{tpu_custom_call.1} parent=107 // pred_region
          %910 = dma.done %s902, 8192
        $region140: #{tpu_custom_call.1} parent=107 // pred_fallthru
          _
        // Predicated region
        $region141: #{tpu_custom_call.1} parent=107 // pred_check
          %p911 = pneg %p551
        $region142: #{tpu_custom_call.1} parent=107 // pred_check_branch
          %913 = sbr.rel (%p911) target = $region144
        $region143: #{tpu_custom_call.1} parent=107 // pred_region
          %915 = dma.done [#allocation16], 1024
        $region144: #{tpu_custom_call.1} parent=107 // pred_fallthru
          _
        %p916 = pneg %p61
        %p917 = pneg %p58
        %p918 = pneg %p82
        %p919 = pneg %p79
        %p920 = pneg %p103
        %p921 = pneg %p100
        %p922 = pneg %p124
        %p923 = pneg %p121
        %p924 = pneg %p145
        %p925 = pneg %p142
        %p926 = pneg %p166
        %p927 = pneg %p163
        %s928 = sand.u32 %s45, 1
        %s929 = scalar_lea.sflag [#allocation10], %s928
        %s930 = sand.u32 %s179, 1
        %s931 = smul.addr %s930, 192
        %s932 = scalar_lea.vmem [#allocation9], %s931
        %p933 = pneg %p192
        %p934 = pneg %p189
        %p935 = scmp.lt.s32.totalorder %s45, 1
        %s936 = scalar_select %p935, %s45, 1
        %s937 = smul.addr %s936, 3
        %s938 = scalar_lea.vmem %s7, %s937
        %p939 = pneg %p218
        %p940 = pneg %p215
        %s941 = sand.u32 %s45, 1
        %s942 = scalar_lea.sflag [#allocation10], %s941
        %s943 = sand.u32 %s231, 1
        %s944 = smul.addr %s943, 64
        %s945 = scalar_lea.vmem [#allocation11], %s944
        %p946 = pneg %p244
        %p947 = pneg %p241
        %p948 = scmp.lt.s32.totalorder %s45, 1
        %s949 = scalar_select %p948, %s45, 1
        %s950 = scalar_lea.vmem %s9, %s949
        %p951 = pneg %p270
        %p952 = pneg %p267
        %s953 = sand.u32 %s45, 1
        %s954 = scalar_lea.sflag [#allocation13], %s953
        %s955 = sand.u32 %s283, 1
        %s956 = smul.addr %s955, 512
        %s957 = scalar_lea.vmem [#allocation12], %s956
        %p958 = pneg %p296
        %p959 = pneg %p293
        %p960 = scmp.lt.s32.totalorder %s45, 1
        %s961 = scalar_select %p960, %s45, 1
        %s962 = smul.addr %s961, 16
        %s963 = scalar_lea.vmem %s11, %s962
        %p964 = pneg %p322
        %p965 = pneg %p319
        %s966 = sand.u32 %s45, 1
        %s967 = scalar_lea.sflag [#allocation13], %s966
        %s968 = sand.u32 %s335, 1
        %s969 = smul.addr %s968, 16
        %s970 = scalar_lea.vmem [#allocation14], %s969
        %p971 = pneg %p348
        %p972 = pneg %p345
        %s973 = sand.u32 %s45, 1
        %s974 = scalar_lea.sflag [#allocation16], %s973
        %s975 = sand.u32 %s361, 1
        %s976 = smul.addr %s975, 512
        %s977 = scalar_lea.vmem [#allocation15], %s976
        %p978 = pneg %p374
        %p979 = pneg %p371
        %p980 = scmp.lt.s32.totalorder %s45, 1
        %s981 = scalar_select %p980, %s45, 1
        %s982 = scalar_lea.vmem %s14, %s981
        %p983 = pneg %p400
        %p984 = pneg %p397
        %p985 = scmp.lt.s32.totalorder %s45, 1
        %s986 = scalar_select %p985, %s45, 1
        %s987 = scalar_lea.vmem %s15, %s986
        %p988 = pneg %p426
        %p989 = pneg %p423
        %p990 = scmp.lt.s32.totalorder %s45, 1
        %s991 = scalar_select %p990, %s45, 1
        %s992 = scalar_lea.vmem %s16, %s991
        %p993 = pneg %p452
        %p994 = pneg %p449
        %p995 = scmp.lt.s32.totalorder %s45, 1
        %s996 = scalar_select %p995, %s45, 1
        %s997 = scalar_lea.vmem %s17, %s996
        %p998 = pneg %p478
        %p999 = pneg %p475
        %p1000 = scmp.lt.s32.totalorder %s45, 1
        %s1001 = scalar_select %p1000, %s45, 1
        %s1002 = scalar_lea.vmem %s18, %s1001
        %p1003 = pneg %p504
        %p1004 = pneg %p501
        %p1005 = scmp.lt.s32.totalorder %s45, 1
        %s1006 = scalar_select %p1005, %s45, 1
        %s1007 = scalar_lea.vmem %s19, %s1006
        %p1008 = pneg %p530
        %p1009 = pneg %p527
        %p1010 = pneg %p551
        %p1011 = pneg %p548
        %p1012 = pneg %p572
        %p1013 = pneg %p569
        %p1014 = pneg %p593
        %p1015 = pneg %p590
        %p1016 = scmp.lt.s32.totalorder %s45, 1
        %s1017 = scalar_select %p1016, %s45, 1
        %s1018 = smul.addr %s1017, 3
        %s1019 = scalar_lea.vmem %s7, %s1018
        %p1020 = scmp.lt.s32.totalorder %s45, 1
        %s1021 = scalar_select %p1020, %s45, 1
        %s1022 = scalar_lea.vmem %s9, %s1021
        %p1023 = scmp.lt.s32.totalorder %s45, 1
        %s1024 = scalar_select %p1023, %s45, 1
        %s1025 = smul.addr %s1024, 16
        %s1026 = scalar_lea.vmem %s11, %s1025
        %p1027 = scmp.lt.s32.totalorder %s45, 1
        %s1028 = scalar_select %p1027, %s45, 1
        %s1029 = scalar_lea.vmem %s14, %s1028
        %p1030 = scmp.lt.s32.totalorder %s45, 1
        %s1031 = scalar_select %p1030, %s45, 1
        %s1032 = scalar_lea.vmem %s15, %s1031
        %p1033 = scmp.lt.s32.totalorder %s45, 1
        %s1034 = scalar_select %p1033, %s45, 1
        %s1035 = scalar_lea.vmem %s16, %s1034
        %p1036 = scmp.lt.s32.totalorder %s45, 1
        %s1037 = scalar_select %p1036, %s45, 1
        %s1038 = scalar_lea.vmem %s17, %s1037
        %p1039 = scmp.lt.s32.totalorder %s45, 1
        %s1040 = scalar_select %p1039, %s45, 1
        %s1041 = scalar_lea.vmem %s18, %s1040
        %p1042 = scmp.lt.s32.totalorder %s45, 1
        %s1043 = scalar_select %p1042, %s45, 1
        %s1044 = scalar_lea.vmem %s19, %s1043
        %p1046 = scmp.eq.s32.totalorder %s45, 0
        // Predicated region
        $region145: #{tpu_custom_call.1} parent=107 // pred_check
          %p1047 = pneg %p1046
        $region146: #{tpu_custom_call.1} parent=107 // pred_check_branch
          %1049 = sbr.rel (%p1047) target = $region148
        $region147: #{tpu_custom_call.1} parent=107 // pred_region
          %v1050 = vld [vmem:[%s3] sm:$0xff]
          %v1051 = vld [vmem:[%s3 + $0x8] sm:$0xff]
          %v1052 = vld [vmem:[%s4] sm:$0xff]
          %v1053 = vld [vmem:[#allocation8] sm:$0x1]
          %v1055 = vperm.slane %v1053, 0
          %vm1057 = vcmask 64512
          %v1059 = vsel %vm1057, %v1050, 0
          %v1062 = vsel %vm1057, %v1051, 0
          %1064 = vmatpush.msra.mxu0 0.0
          %1065 = vmatpush.msra.mxu0 0.0
          %1066 = vmatpush.msra.mxu0 0.0
          %1067 = vmatpush.msra.mxu0 0.0
          %1068 = vmatpush.msra.mxu0 0.0
          %1069 = vmatpush.msra.mxu0 0.0
          %1070 = vmatpush.msra.mxu0 0.0
          %1071 = vmatpush.msra.mxu0 0.0
          %1072 = vmatpush.msra.mxu0 0.0
          %1073 = vmatpush.msra.mxu0 0.0
          %1074 = vmatpush.msra.mxu0 0.0
          %1075 = vmatpush.msra.mxu0 0.0
          %1076 = vmatpush.msra.mxu0 0.0
          %1077 = vmatpush.msra.mxu0 0.0
          %1078 = vmatpush.msra.mxu0 0.0
          %1079 = vmatpush.msra.mxu0 %v1052
          %1080 = vmatmul.f32.gmra.mxu0 %v1059
          %v1081 = vpop.f32.mrf.mxu0
          %v1082 = vadd.f32 %v1055, %v1081
          %1083 = vmatmul.f32.gmra.mxu0 %v1062
          %v1084 = vpop.f32.mrf.mxu0
          %v1085 = vadd.f32 %v1055, %v1084
          %1086 = vdwg.mxu0
          %1087 = vst [vmem:[#allocation2] sm:$0xff] %v1082
          %1088 = vst [vmem:[#allocation2 + $0x8] sm:$0xff] %v1085
        $region148: #{tpu_custom_call.1} parent=107 // pred_fallthru
          _
        %v1089 = vld [vmem:[#allocation2] sm:$0xff]
        %v1090 = vld [vmem:[#allocation2 + $0x8] sm:$0xff]
        %v1091 = vld [vmem:[%s865] sm:$0xff]
        %v1092 = vld [vmem:[%s865 + $0x8] sm:$0xf]
        %v1093 = vld [vmem:[%s865 + $0xc] sm:$0xff]
        %v1094 = vld [vmem:[%s865 + $0x14] sm:$0xf]
        %v1095 = vld [vmem:[%s865 + $0x18] sm:$0xff]
        %v1096 = vld [vmem:[%s865 + $0x20] sm:$0xf]
        %v1097 = vld [vmem:[%s865 + $0x24] sm:$0xff]
        %v1098 = vld [vmem:[%s865 + $0x2c] sm:$0xf]
        %v1099 = vld [vmem:[%s865 + $0x30] sm:$0xff]
        %v1100 = vld [vmem:[%s865 + $0x38] sm:$0xf]
        %v1101 = vld [vmem:[%s865 + $0x3c] sm:$0xff]
        %v1102 = vld [vmem:[%s865 + $0x44] sm:$0xf]
        %v1103 = vld [vmem:[%s865 + $0x48] sm:$0xff]
        %v1104 = vld [vmem:[%s865 + $0x50] sm:$0xf]
        %v1105 = vld [vmem:[%s865 + $0x54] sm:$0xff]
        %v1106 = vld [vmem:[%s865 + $0x5c] sm:$0xf]
        %v1107 = vld [vmem:[%s865 + $0x60] sm:$0xff]
        %v1108 = vld [vmem:[%s865 + $0x68] sm:$0xf]
        %v1109 = vld [vmem:[%s865 + $0x6c] sm:$0xff]
        %v1110 = vld [vmem:[%s865 + $0x74] sm:$0xf]
        %v1111 = vld [vmem:[%s865 + $0x78] sm:$0xff]
        %v1112 = vld [vmem:[%s865 + $0x80] sm:$0xf]
        %v1113 = vld [vmem:[%s865 + $0x84] sm:$0xff]
        %v1114 = vld [vmem:[%s865 + $0x8c] sm:$0xf]
        %v1115 = vld [vmem:[%s865 + $0x90] sm:$0xff]
        %v1116 = vld [vmem:[%s865 + $0x98] sm:$0xf]
        %v1117 = vld [vmem:[%s865 + $0x9c] sm:$0xff]
        %v1118 = vld [vmem:[%s865 + $0xa4] sm:$0xf]
        %v1119 = vld [vmem:[%s865 + $0xa8] sm:$0xff]
        %v1120 = vld [vmem:[%s865 + $0xb0] sm:$0xf]
        %v1121 = vld [vmem:[%s865 + $0xb4] sm:$0xff]
        %v1122 = vld [vmem:[%s865 + $0xbc] sm:$0xf]
        %v1123 = vld [vmem:[%s1019] sm:$0x7]
        %v1124 = vld [vmem:[%s875] sm:$0xf]
        %v1125 = vld [vmem:[%s875 + $0x4] sm:$0xf]
        %v1126 = vld [vmem:[%s875 + $0x8] sm:$0xf]
        %v1127 = vld [vmem:[%s875 + $0xc] sm:$0xf]
        %v1128 = vld [vmem:[%s875 + $0x10] sm:$0xf]
        %v1129 = vld [vmem:[%s875 + $0x14] sm:$0xf]
        %v1130 = vld [vmem:[%s875 + $0x18] sm:$0xf]
        %v1131 = vld [vmem:[%s875 + $0x1c] sm:$0xf]
        %v1132 = vld [vmem:[%s875 + $0x20] sm:$0xf]
        %v1133 = vld [vmem:[%s875 + $0x24] sm:$0xf]
        %v1134 = vld [vmem:[%s875 + $0x28] sm:$0xf]
        %v1135 = vld [vmem:[%s875 + $0x2c] sm:$0xf]
        %v1136 = vld [vmem:[%s875 + $0x30] sm:$0xf]
        %v1137 = vld [vmem:[%s875 + $0x34] sm:$0xf]
        %v1138 = vld [vmem:[%s875 + $0x38] sm:$0xf]
        %v1139 = vld [vmem:[%s875 + $0x3c] sm:$0xf]
        %v1140 = vld [vmem:[%s1022] sm:$0x1]
        %v1141 = vld [vmem:[%s1035] sm:$0x1]
        %v1142 = vld [vmem:[%s1038] sm:$0x1]
        %v1143 = vld [vmem:[%s1041] sm:$0x1]
        %v1144 = vld [vmem:[%s1044] sm:$0x1]
        %v1145 = vpack.c.bf16 %v1090, %v1089
        %v1147 = vperm.slane %v1123, 0
        %v1148 = vperm.slane %v1123, 1
        %v1149 = vperm.slane %v1123, 2
        %v1185 = vunpack.c.l.b16 %v1091
        %v1186 = vunpack.c.h.b16 %v1091
        %v1187 = vunpack.c.l.b16 %v1092
        %v1188 = vunpack.c.l.b16 %v1093
        %v1189 = vunpack.c.h.b16 %v1093
        %v1190 = vunpack.c.l.b16 %v1094
        %v1191 = vunpack.c.l.b16 %v1095
        %v1192 = vunpack.c.h.b16 %v1095
        %v1193 = vunpack.c.l.b16 %v1096
        %v1194 = vunpack.c.l.b16 %v1097
        %v1195 = vunpack.c.h.b16 %v1097
        %v1196 = vunpack.c.l.b16 %v1098
        %v1197 = vunpack.c.l.b16 %v1099
        %v1198 = vunpack.c.h.b16 %v1099
        %v1199 = vunpack.c.l.b16 %v1100
        %v1200 = vunpack.c.l.b16 %v1101
        %v1201 = vunpack.c.h.b16 %v1101
        %v1202 = vunpack.c.l.b16 %v1102
        %v1203 = vunpack.c.l.b16 %v1103
        %v1204 = vunpack.c.h.b16 %v1103
        %v1205 = vunpack.c.l.b16 %v1104
        %v1206 = vunpack.c.l.b16 %v1105
        %v1207 = vunpack.c.h.b16 %v1105
        %v1208 = vunpack.c.l.b16 %v1106
        %v1209 = vunpack.c.l.b16 %v1107
        %v1210 = vunpack.c.h.b16 %v1107
        %v1211 = vunpack.c.l.b16 %v1108
        %v1212 = vunpack.c.l.b16 %v1109
        %v1213 = vunpack.c.h.b16 %v1109
        %v1214 = vunpack.c.l.b16 %v1110
        %v1215 = vunpack.c.l.b16 %v1111
        %v1216 = vunpack.c.h.b16 %v1111
        %v1217 = vunpack.c.l.b16 %v1112
        %v1218 = vunpack.c.l.b16 %v1113
        %v1219 = vunpack.c.h.b16 %v1113
        %v1220 = vunpack.c.l.b16 %v1114
        %v1221 = vunpack.c.l.b16 %v1115
        %v1222 = vunpack.c.h.b16 %v1115
        %v1223 = vunpack.c.l.b16 %v1116
        %v1224 = vunpack.c.l.b16 %v1117
        %v1225 = vunpack.c.h.b16 %v1117
        %v1226 = vunpack.c.l.b16 %v1118
        %v1227 = vunpack.c.l.b16 %v1119
        %v1228 = vunpack.c.h.b16 %v1119
        %v1229 = vunpack.c.l.b16 %v1120
        %v1230 = vunpack.c.l.b16 %v1121
        %v1231 = vunpack.c.h.b16 %v1121
        %v1232 = vunpack.c.l.b16 %v1122
        %v1233 = vpack.c.b16 %v1188, %v1185
        %v1234 = vpack.c.b16 %v1189, %v1186
        %v1235 = vpack.c.b16 %v1190, %v1187
        %v1236 = vpack.c.b16 %v1194, %v1191
        %v1237 = vpack.c.b16 %v1195, %v1192
        %v1238 = vpack.c.b16 %v1196, %v1193
        %v1239 = vpack.c.b16 %v1200, %v1197
        %v1240 = vpack.c.b16 %v1201, %v1198
        %v1241 = vpack.c.b16 %v1202, %v1199
        %v1242 = vpack.c.b16 %v1206, %v1203
        %v1243 = vpack.c.b16 %v1207, %v1204
        %v1244 = vpack.c.b16 %v1208, %v1205
        %v1245 = vpack.c.b16 %v1212, %v1209
        %v1246 = vpack.c.b16 %v1213, %v1210
        %v1247 = vpack.c.b16 %v1214, %v1211
        %v1248 = vpack.c.b16 %v1218, %v1215
        %v1249 = vpack.c.b16 %v1219, %v1216
        %v1250 = vpack.c.b16 %v1220, %v1217
        %v1251 = vpack.c.b16 %v1224, %v1221
        %v1252 = vpack.c.b16 %v1225, %v1222
        %v1253 = vpack.c.b16 %v1226, %v1223
        %v1254 = vpack.c.b16 %v1230, %v1227
        %v1255 = vpack.c.b16 %v1231, %v1228
        %v1256 = vpack.c.b16 %v1232, %v1229
        %1281 = vmatpush.bf16.msra.mxu0 %v1254
        %1282 = vmatpush.bf16.msra.mxu0 %v1251
        %1283 = vmatpush.bf16.msra.mxu0 %v1248
        %1284 = vmatpush.bf16.msra.mxu0 %v1245
        %1285 = vmatpush.bf16.msra.mxu0 %v1242
        %1286 = vmatpush.bf16.msra.mxu0 %v1239
        %1287 = vmatpush.bf16.msra.mxu0 %v1236
        %1288 = vmatpush.bf16.msra.mxu0 %v1233
        %1289 = vmatmul.bf16.gmra.mxu0 %v1145
        %v1290 = vpop.f32.mrf.mxu0
        %v1291 = vadd.f32 %v1147, %v1290
        %v1292 = vpop.f32.mrf.mxu0
        %v1293 = vadd.f32 %v1147, %v1292
        %1294 = vdwg.mxu0
        %1295 = vmatpush.bf16.msra.mxu0 %v1255
        %1296 = vmatpush.bf16.msra.mxu0 %v1252
        %1297 = vmatpush.bf16.msra.mxu0 %v1249
        %1298 = vmatpush.bf16.msra.mxu0 %v1246
        %1299 = vmatpush.bf16.msra.mxu0 %v1243
        %1300 = vmatpush.bf16.msra.mxu0 %v1240
        %1301 = vmatpush.bf16.msra.mxu0 %v1237
        %1302 = vmatpush.bf16.msra.mxu0 %v1234
        %1303 = vmatmul.bf16.gmra.mxu0 %v1145
        %v1304 = vpop.f32.mrf.mxu0
        %v1305 = vadd.f32 %v1148, %v1304
        %v1306 = vpop.f32.mrf.mxu0
        %v1307 = vadd.f32 %v1148, %v1306
        %1308 = vdwg.mxu0
        %1309 = vmatpush.bf16.msra.mxu0 %v1256
        %1310 = vmatpush.bf16.msra.mxu0 %v1253
        %1311 = vmatpush.bf16.msra.mxu0 %v1250
        %1312 = vmatpush.bf16.msra.mxu0 %v1247
        %1313 = vmatpush.bf16.msra.mxu0 %v1244
        %1314 = vmatpush.bf16.msra.mxu0 %v1241
        %1315 = vmatpush.bf16.msra.mxu0 %v1238
        %1316 = vmatpush.bf16.msra.mxu0 %v1235
        %1317 = vmatmul.bf16.gmra.mxu0 %v1145
        %v1318 = vpop.f32.mrf.mxu0
        %v1319 = vadd.f32 %v1149, %v1318
        %v1320 = vpop.f32.mrf.mxu0
        %v1321 = vadd.f32 %v1149, %v1320
        %1322 = vdwg.mxu0
        %v1323 = vmul.f32 %v1291, 0.17677669
        %v1324 = vmul.f32 %v1293, 0.17677669
        %v1325 = vld [vmem:[#allocation3] sm:$0xff]
        %v1326 = vld [vmem:[#allocation3 + $0x8] sm:$0xff]
        %v1327 = vld [vmem:[#allocation3 + $0x10] sm:$0xff]
        %v1328 = vld [vmem:[#allocation3 + $0x18] sm:$0xff]
        %v1329 = vld [vmem:[#allocation3 + $0x20] sm:$0xff]
        %v1330 = vld [vmem:[#allocation3 + $0x28] sm:$0xff]
        %v1331 = vld [vmem:[#allocation3 + $0x30] sm:$0xff]
        %v1332 = vld [vmem:[#allocation3 + $0x38] sm:$0xff]
        %v1333 = vmul.f32 %v1323, %v1325
        %v1334 = vmul.f32 %v1324, %v1326
        %v1335 = vmul.f32 %v1323, %v1327
        %v1336 = vmul.f32 %v1324, %v1328
        %v1337 = vmul.f32 %v1323, %v1329
        %v1338 = vmul.f32 %v1324, %v1330
        %v1339 = vmul.f32 %v1323, %v1331
        %v1340 = vmul.f32 %v1324, %v1332
        %v1341 = vpack.c.bf16 %v1334, %v1333
        %v1342 = vpack.c.bf16 %v1336, %v1335
        %v1343 = vpack.c.bf16 %v1338, %v1337
        %v1344 = vpack.c.bf16 %v1340, %v1339
        %v1345 = vpack.c.bf16 %v1307, %v1305
        %v1346 = vld [vmem:[%s0] sm:$0xf]
        %v1347 = vld [vmem:[%s0 + $0x4] sm:$0xf]
        %v1348 = vld [vmem:[%s0 + $0x8] sm:$0xf]
        %v1349 = vld [vmem:[%s0 + $0xc] sm:$0xf]
        %v1350 = vld [vmem:[%s0 + $0x10] sm:$0xf]
        %v1351 = vld [vmem:[%s0 + $0x14] sm:$0xf]
        %v1352 = vld [vmem:[%s0 + $0x18] sm:$0xf]
        %v1353 = vld [vmem:[%s0 + $0x1c] sm:$0xf]
        %v1354 = vunpack.c.l.bf16 %v1346
        %v1355 = vunpack.c.l.bf16 %v1347
        %v1356 = vunpack.c.l.bf16 %v1348
        %v1357 = vunpack.c.l.bf16 %v1349
        %v1358 = vunpack.c.l.bf16 %v1350
        %v1359 = vunpack.c.l.bf16 %v1351
        %v1360 = vunpack.c.l.bf16 %v1352
        %v1361 = vunpack.c.l.bf16 %v1353
        %1362 = vmatpush.bf16.xpose.msra.mxu0 0
        %1363 = vmatpush.bf16.xpose.msra.mxu0 0
        %1364 = vmatpush.bf16.xpose.msra.mxu0 0
        %1365 = vmatpush.bf16.xpose.msra.mxu0 0
        %1366 = vmatpush.bf16.xpose.msra.mxu0 0
        %1367 = vmatpush.bf16.xpose.msra.mxu0 0
        %1368 = vmatpush.bf16.xpose.msra.mxu0 0
        %1369 = vmatpush.bf16.xpose.msra.mxu0 %v1345
        %1370 = vmatmul.bf16.gmra.mxu0 %v1341
        %v1371 = vpop.f32.mrf.mxu0
        %v1372 = vadd.f32 %v1354, %v1371
        %v1373 = vpop.f32.mrf.mxu0
        %v1374 = vadd.f32 %v1355, %v1373
        %1375 = vmatmul.bf16.gmra.mxu0 %v1342
        %v1376 = vpop.f32.mrf.mxu0
        %v1377 = vadd.f32 %v1356, %v1376
        %v1378 = vpop.f32.mrf.mxu0
        %v1379 = vadd.f32 %v1357, %v1378
        %1380 = vmatmul.bf16.gmra.mxu0 %v1343
        %v1381 = vpop.f32.mrf.mxu0
        %v1382 = vadd.f32 %v1358, %v1381
        %v1383 = vpop.f32.mrf.mxu0
        %v1384 = vadd.f32 %v1359, %v1383
        %1385 = vmatmul.bf16.gmra.mxu0 %v1344
        %v1386 = vpop.f32.mrf.mxu0
        %v1387 = vadd.f32 %v1360, %v1386
        %v1388 = vpop.f32.mrf.mxu0
        %v1389 = vadd.f32 %v1361, %v1388
        %1390 = vdwg.mxu0
        %vm1391 = vcmask 130048
        %v1392 = vsel %vm1391, %v1372, -inf
        %1393 = vmax.xlane.f32.xlu0 %v1392
        %v1394 = vpop.xlane.xlu0 %1393
        %v1395 = vsel %vm1391, %v1374, -inf
        %1396 = vmax.xlane.f32.xlu0 %v1395
        %v1397 = vpop.xlane.xlu0 %1396
        %v1398 = vsel %vm1391, %v1377, -inf
        %1399 = vmax.xlane.f32.xlu0 %v1398
        %v1400 = vpop.xlane.xlu0 %1399
        %v1401 = vsel %vm1391, %v1379, -inf
        %1402 = vmax.xlane.f32.xlu0 %v1401
        %v1403 = vpop.xlane.xlu0 %1402
        %v1404 = vsel %vm1391, %v1382, -inf
        %1405 = vmax.xlane.f32.xlu0 %v1404
        %v1406 = vpop.xlane.xlu0 %1405
        %v1407 = vsel %vm1391, %v1384, -inf
        %1408 = vmax.xlane.f32.xlu0 %v1407
        %v1409 = vpop.xlane.xlu0 %1408
        %v1410 = vsel %vm1391, %v1387, -inf
        %1411 = vmax.xlane.f32.xlu0 %v1410
        %v1412 = vpop.xlane.xlu0 %1411
        %v1413 = vsel %vm1391, %v1389, -inf
        %1414 = vmax.xlane.f32.xlu0 %v1413
        %v1415 = vpop.xlane.xlu0 %1414
        %v1416 = vsub.f32 %v1372, %v1394
        %v1417 = vsub.f32 %v1374, %v1397
        %v1418 = vsub.f32 %v1377, %v1400
        %v1419 = vsub.f32 %v1379, %v1403
        %v1420 = vsub.f32 %v1382, %v1406
        %v1421 = vsub.f32 %v1384, %v1409
        %v1422 = vsub.f32 %v1387, %v1412
        %v1423 = vsub.f32 %v1389, %v1415
        %v1424 = vmul.f32 %v1416, 1.442695
        %v1425 = vpow.pop %v1424
        %v1426 = vmul.f32 %v1417, 1.442695
        %v1427 = vpow.pop %v1426
        %v1428 = vmul.f32 %v1418, 1.442695
        %v1429 = vpow.pop %v1428
        %v1430 = vmul.f32 %v1419, 1.442695
        %v1431 = vpow.pop %v1430
        %v1432 = vmul.f32 %v1420, 1.442695
        %v1433 = vpow.pop %v1432
        %v1434 = vmul.f32 %v1421, 1.442695
        %v1435 = vpow.pop %v1434
        %v1436 = vmul.f32 %v1422, 1.442695
        %v1437 = vpow.pop %v1436
        %v1438 = vmul.f32 %v1423, 1.442695
        %v1439 = vpow.pop %v1438
        %v1440 = vsel %vm1391, %v1425, 0.0
        %1441 = vadd.xlane.f32.xlu0 %v1440
        %v1442 = vpop.xlane.xlu0 %1441
        %v1443 = vsel %vm1391, %v1427, 0.0
        %1444 = vadd.xlane.f32.xlu0 %v1443
        %v1445 = vpop.xlane.xlu0 %1444
        %v1446 = vsel %vm1391, %v1429, 0.0
        %1447 = vadd.xlane.f32.xlu0 %v1446
        %v1448 = vpop.xlane.xlu0 %1447
        %v1449 = vsel %vm1391, %v1431, 0.0
        %1450 = vadd.xlane.f32.xlu0 %v1449
        %v1451 = vpop.xlane.xlu0 %1450
        %v1452 = vsel %vm1391, %v1433, 0.0
        %1453 = vadd.xlane.f32.xlu0 %v1452
        %v1454 = vpop.xlane.xlu0 %1453
        %v1455 = vsel %vm1391, %v1435, 0.0
        %1456 = vadd.xlane.f32.xlu0 %v1455
        %v1457 = vpop.xlane.xlu0 %1456
        %v1458 = vsel %vm1391, %v1437, 0.0
        %1459 = vadd.xlane.f32.xlu0 %v1458
        %v1460 = vpop.xlane.xlu0 %1459
        %v1461 = vsel %vm1391, %v1439, 0.0
        %1462 = vadd.xlane.f32.xlu0 %v1461
        %v1463 = vpop.xlane.xlu0 %1462
        %v1464 = vrcp.pop %v1442
        %v1465 = vrcp.pop %v1445
        %v1466 = vrcp.pop %v1448
        %v1467 = vrcp.pop %v1451
        %v1468 = vrcp.pop %v1454
        %v1469 = vrcp.pop %v1457
        %v1470 = vrcp.pop %v1460
        %v1471 = vrcp.pop %v1463
        %v1472 = vmul.f32 %v1425, %v1464
        %v1473 = vmul.f32 %v1427, %v1465
        %v1474 = vmul.f32 %v1429, %v1466
        %v1475 = vmul.f32 %v1431, %v1467
        %v1476 = vmul.f32 %v1433, %v1468
        %v1477 = vmul.f32 %v1435, %v1469
        %v1478 = vmul.f32 %v1437, %v1470
        %v1479 = vmul.f32 %v1439, %v1471
        %v1480 = vpack.c.bf16 %v1473, %v1472
        %v1481 = vpack.c.bf16 %v1475, %v1474
        %v1482 = vpack.c.bf16 %v1477, %v1476
        %v1483 = vpack.c.bf16 %v1479, %v1478
        %v1484 = vpack.c.bf16 %v1321, %v1319
        %v1486 = vsel %vm1391, %v1480, 0
        %v1489 = vsel %vm1391, %v1481, 0
        %v1492 = vsel %vm1391, %v1482, 0
        %v1495 = vsel %vm1391, %v1483, 0
        %1497 = vmatpush.bf16.msra.mxu0 0
        %1498 = vmatpush.bf16.msra.mxu0 0
        %1499 = vmatpush.bf16.msra.mxu0 0
        %1500 = vmatpush.bf16.msra.mxu0 0
        %1501 = vmatpush.bf16.msra.mxu0 0
        %1502 = vmatpush.bf16.msra.mxu0 0
        %1503 = vmatpush.bf16.msra.mxu0 0
        %1504 = vmatpush.bf16.msra.mxu0 %v1484
        %1505 = vmatmul.bf16.gmra.mxu0 %v1486
        %v1506 = vpop.f32.mrf.mxu0
        %v1507 = vadd.f32 0.0, %v1506
        %v1508 = vpop.f32.mrf.mxu0
        %v1509 = vadd.f32 0.0, %v1508
        %1510 = vmatmul.bf16.gmra.mxu0 %v1489
        %v1511 = vpop.f32.mrf.mxu0
        %v1512 = vadd.f32 0.0, %v1511
        %v1513 = vpop.f32.mrf.mxu0
        %v1514 = vadd.f32 0.0, %v1513
        %1515 = vmatmul.bf16.gmra.mxu0 %v1492
        %v1516 = vpop.f32.mrf.mxu0
        %v1517 = vadd.f32 0.0, %v1516
        %v1518 = vpop.f32.mrf.mxu0
        %v1519 = vadd.f32 0.0, %v1518
        %1520 = vmatmul.bf16.gmra.mxu0 %v1495
        %v1521 = vpop.f32.mrf.mxu0
        %v1522 = vadd.f32 0.0, %v1521
        %v1523 = vpop.f32.mrf.mxu0
        %v1524 = vadd.f32 0.0, %v1523
        %1525 = vdwg.mxu0
        %v1526 = vperm.slane %v1325, 0
        %v1527 = vmul.f32 %v1507, %v1526
        %v1528 = vmul.f32 %v1509, %v1526
        %v1529 = vadd.f32 %v1527, 0.0
        %v1530 = vadd.f32 %v1528, 0.0
        %v1531 = vperm.slane %v1327, 0
        %v1532 = vmul.f32 %v1512, %v1531
        %v1533 = vmul.f32 %v1514, %v1531
        %v1534 = vadd.f32 %v1529, %v1532
        %v1535 = vadd.f32 %v1530, %v1533
        %v1536 = vperm.slane %v1329, 0
        %v1537 = vmul.f32 %v1517, %v1536
        %v1538 = vmul.f32 %v1519, %v1536
        %v1539 = vadd.f32 %v1534, %v1537
        %v1540 = vadd.f32 %v1535, %v1538
        %v1541 = vperm.slane %v1331, 0
        %v1542 = vmul.f32 %v1522, %v1541
        %v1543 = vmul.f32 %v1524, %v1541
        %v1544 = vadd.f32 %v1539, %v1542
        %v1545 = vadd.f32 %v1540, %v1543
        %v1546 = vpack.c.bf16 %v1545, %v1544
        %v1548 = vperm.slane %v1140, 0
        %v1566 = vunpack.c.l.b16 %v1124
        %v1567 = vunpack.c.l.b16 %v1125
        %v1568 = vunpack.c.l.b16 %v1126
        %v1569 = vunpack.c.l.b16 %v1127
        %v1570 = vunpack.c.l.b16 %v1128
        %v1571 = vunpack.c.l.b16 %v1129
        %v1572 = vunpack.c.l.b16 %v1130
        %v1573 = vunpack.c.l.b16 %v1131
        %v1574 = vunpack.c.l.b16 %v1132
        %v1575 = vunpack.c.l.b16 %v1133
        %v1576 = vunpack.c.l.b16 %v1134
        %v1577 = vunpack.c.l.b16 %v1135
        %v1578 = vunpack.c.l.b16 %v1136
        %v1579 = vunpack.c.l.b16 %v1137
        %v1580 = vunpack.c.l.b16 %v1138
        %v1581 = vunpack.c.l.b16 %v1139
        %v1582 = vpack.c.b16 %v1567, %v1566
        %v1583 = vpack.c.b16 %v1569, %v1568
        %v1584 = vpack.c.b16 %v1571, %v1570
        %v1585 = vpack.c.b16 %v1573, %v1572
        %v1586 = vpack.c.b16 %v1575, %v1574
        %v1587 = vpack.c.b16 %v1577, %v1576
        %v1588 = vpack.c.b16 %v1579, %v1578
        %v1589 = vpack.c.b16 %v1581, %v1580
        %1598 = vmatpush.bf16.msra.mxu0 %v1589
        %1599 = vmatpush.bf16.msra.mxu0 %v1588
        %1600 = vmatpush.bf16.msra.mxu0 %v1587
        %1601 = vmatpush.bf16.msra.mxu0 %v1586
        %1602 = vmatpush.bf16.msra.mxu0 %v1585
        %1603 = vmatpush.bf16.msra.mxu0 %v1584
        %1604 = vmatpush.bf16.msra.mxu0 %v1583
        %1605 = vmatpush.bf16.msra.mxu0 %v1582
        %1606 = vmatmul.bf16.gmra.mxu0 %v1546
        %v1607 = vpop.f32.mrf.mxu0
        %v1608 = vadd.f32 %v1548, %v1607
        %v1609 = vpop.f32.mrf.mxu0
        %v1610 = vadd.f32 %v1548, %v1609
        %1611 = vdwg.mxu0
        %v1612 = vadd.f32 %v1089, %v1608
        %v1613 = vadd.f32 %v1090, %v1610
        %1614 = vadd.xlane.f32.xlu0 %v1612
        %v1615 = vpop.xlane.xlu0 %1614
        %1616 = vadd.xlane.f32.xlu0 %v1613
        %v1617 = vpop.xlane.xlu0 %1616
        %v1618 = vrcp.pop 128.0
        %v1619 = vmul.f32 128.0, %v1618
        %v1620 = vsub.f32 1.0, %v1619
        %v1621 = vmul.f32 %v1618, %v1620
        %v1622 = vadd.f32 %v1618, %v1621
        %vm1623 = vweird.f32 %v1618
        %v1624 = vsel %vm1623, %v1618, %v1622
        %v1625 = vmul.f32 %v1615, %v1624
        %v1626 = vmul.f32 %v1617, %v1624
        %v1627 = vsub.f32 %v1612, %v1625
        %v1628 = vsub.f32 %v1613, %v1626
        %v1629 = vmul.f32 %v1627, %v1627
        %v1630 = vmul.f32 %v1628, %v1628
        %1631 = vadd.xlane.f32.xlu0 %v1629
        %v1632 = vpop.xlane.xlu0 %1631
        %1633 = vadd.xlane.f32.xlu0 %v1630
        %v1634 = vpop.xlane.xlu0 %1633
        %v1635 = vmul.f32 %v1632, %v1624
        %v1636 = vmul.f32 %v1634, %v1624
        %v1637 = vadd.f32 %v1635, 1e-05
        %v1638 = vadd.f32 %v1636, 1e-05
        %v1639 = vrsqrt.pop %v1637
        %v1640 = vmul.f32 %v1639, %v1637
        %v1641 = vmul.f32 %v1640, %v1639
        %v1642 = vmul.f32 0.5, %v1641
        %v1643 = vsub.f32 1.5, %v1642
        %v1644 = vmul.f32 %v1639, %v1643
        %vm1645 = vweird.f32 %v1637
        %vm1646 = vweird.f32 %v1639
        %vm1647 = vmor %vm1645, %vm1646
        %v1648 = vsel %vm1647, %v1639, %v1644
        %v1649 = vrsqrt.pop %v1638
        %v1650 = vmul.f32 %v1649, %v1638
        %v1651 = vmul.f32 %v1650, %v1649
        %v1652 = vmul.f32 0.5, %v1651
        %v1653 = vsub.f32 1.5, %v1652
        %v1654 = vmul.f32 %v1649, %v1653
        %vm1655 = vweird.f32 %v1638
        %vm1656 = vweird.f32 %v1649
        %vm1657 = vmor %vm1655, %vm1656
        %v1658 = vsel %vm1657, %v1649, %v1654
        %v1659 = vmul.f32 %v1627, %v1648
        %v1660 = vmul.f32 %v1628, %v1658
        %v1662 = vperm.slane %v1141, 0
        %v1664 = vmul.f32 %v1659, %v1662
        %v1665 = vmul.f32 %v1660, %v1662
        %v1667 = vperm.slane %v1142, 0
        %v1669 = vadd.f32 %v1664, %v1667
        %v1670 = vadd.f32 %v1665, %v1667
        %v1671 = vld [vmem:[%s885] sm:$0xff]
        %v1672 = vld [vmem:[%s885 + $0x8] sm:$0xff]
        %v1673 = vld [vmem:[%s885 + $0x10] sm:$0xff]
        %v1674 = vld [vmem:[%s885 + $0x18] sm:$0xff]
        %v1675 = vld [vmem:[%s885 + $0x20] sm:$0xff]
        %v1676 = vld [vmem:[%s885 + $0x28] sm:$0xff]
        %v1677 = vld [vmem:[%s885 + $0x30] sm:$0xff]
        %v1678 = vld [vmem:[%s885 + $0x38] sm:$0xff]
        %v1679 = vld [vmem:[%s885 + $0x40] sm:$0xff]
        %v1680 = vld [vmem:[%s885 + $0x48] sm:$0xff]
        %v1681 = vld [vmem:[%s885 + $0x50] sm:$0xff]
        %v1682 = vld [vmem:[%s885 + $0x58] sm:$0xff]
        %v1683 = vld [vmem:[%s885 + $0x60] sm:$0xff]
        %v1684 = vld [vmem:[%s885 + $0x68] sm:$0xff]
        %v1685 = vld [vmem:[%s885 + $0x70] sm:$0xff]
        %v1686 = vld [vmem:[%s885 + $0x78] sm:$0xff]
        %v1687 = vld [vmem:[%s885 + $0x80] sm:$0xff]
        %v1688 = vld [vmem:[%s885 + $0x88] sm:$0xff]
        %v1689 = vld [vmem:[%s885 + $0x90] sm:$0xff]
        %v1690 = vld [vmem:[%s885 + $0x98] sm:$0xff]
        %v1691 = vld [vmem:[%s885 + $0xa0] sm:$0xff]
        %v1692 = vld [vmem:[%s885 + $0xa8] sm:$0xff]
        %v1693 = vld [vmem:[%s885 + $0xb0] sm:$0xff]
        %v1694 = vld [vmem:[%s885 + $0xb8] sm:$0xff]
        %v1695 = vld [vmem:[%s885 + $0xc0] sm:$0xff]
        %v1696 = vld [vmem:[%s885 + $0xc8] sm:$0xff]
        %v1697 = vld [vmem:[%s885 + $0xd0] sm:$0xff]
        %v1698 = vld [vmem:[%s885 + $0xd8] sm:$0xff]
        %v1699 = vld [vmem:[%s885 + $0xe0] sm:$0xff]
        %v1700 = vld [vmem:[%s885 + $0xe8] sm:$0xff]
        %v1701 = vld [vmem:[%s885 + $0xf0] sm:$0xff]
        %v1702 = vld [vmem:[%s885 + $0xf8] sm:$0xff]
        %v1703 = vld [vmem:[%s885 + $0x100] sm:$0xff]
        %v1704 = vld [vmem:[%s885 + $0x108] sm:$0xff]
        %v1705 = vld [vmem:[%s885 + $0x110] sm:$0xff]
        %v1706 = vld [vmem:[%s885 + $0x118] sm:$0xff]
        %v1707 = vld [vmem:[%s885 + $0x120] sm:$0xff]
        %v1708 = vld [vmem:[%s885 + $0x128] sm:$0xff]
        %v1709 = vld [vmem:[%s885 + $0x130] sm:$0xff]
        %v1710 = vld [vmem:[%s885 + $0x138] sm:$0xff]
        %v1711 = vld [vmem:[%s885 + $0x140] sm:$0xff]
        %v1712 = vld [vmem:[%s885 + $0x148] sm:$0xff]
        %v1713 = vld [vmem:[%s885 + $0x150] sm:$0xff]
        %v1714 = vld [vmem:[%s885 + $0x158] sm:$0xff]
        %v1715 = vld [vmem:[%s885 + $0x160] sm:$0xff]
        %v1716 = vld [vmem:[%s885 + $0x168] sm:$0xff]
        %v1717 = vld [vmem:[%s885 + $0x170] sm:$0xff]
        %v1718 = vld [vmem:[%s885 + $0x178] sm:$0xff]
        %v1719 = vld [vmem:[%s885 + $0x180] sm:$0xff]
        %v1720 = vld [vmem:[%s885 + $0x188] sm:$0xff]
        %v1721 = vld [vmem:[%s885 + $0x190] sm:$0xff]
        %v1722 = vld [vmem:[%s885 + $0x198] sm:$0xff]
        %v1723 = vld [vmem:[%s885 + $0x1a0] sm:$0xff]
        %v1724 = vld [vmem:[%s885 + $0x1a8] sm:$0xff]
        %v1725 = vld [vmem:[%s885 + $0x1b0] sm:$0xff]
        %v1726 = vld [vmem:[%s885 + $0x1b8] sm:$0xff]
        %v1727 = vld [vmem:[%s885 + $0x1c0] sm:$0xff]
        %v1728 = vld [vmem:[%s885 + $0x1c8] sm:$0xff]
        %v1729 = vld [vmem:[%s885 + $0x1d0] sm:$0xff]
        %v1730 = vld [vmem:[%s885 + $0x1d8] sm:$0xff]
        %v1731 = vld [vmem:[%s885 + $0x1e0] sm:$0xff]
        %v1732 = vld [vmem:[%s885 + $0x1e8] sm:$0xff]
        %v1733 = vld [vmem:[%s885 + $0x1f0] sm:$0xff]
        %v1734 = vld [vmem:[%s885 + $0x1f8] sm:$0xff]
        %v1735 = vunpack.c.0.s8 %v1671
        %v1736 = vunpack.c.0.s8 %v1672
        %v1737 = vunpack.c.0.s8 %v1673
        %v1738 = vunpack.c.0.s8 %v1674
        %v1739 = vunpack.c.0.s8 %v1675
        %v1740 = vunpack.c.0.s8 %v1676
        %v1741 = vunpack.c.0.s8 %v1677
        %v1742 = vunpack.c.0.s8 %v1678
        %v1743 = vunpack.c.0.s8 %v1679
        %v1744 = vunpack.c.0.s8 %v1680
        %v1745 = vunpack.c.0.s8 %v1681
        %v1746 = vunpack.c.0.s8 %v1682
        %v1747 = vunpack.c.0.s8 %v1683
        %v1748 = vunpack.c.0.s8 %v1684
        %v1749 = vunpack.c.0.s8 %v1685
        %v1750 = vunpack.c.0.s8 %v1686
        %v1751 = vunpack.c.1.s8 %v1671
        %v1752 = vunpack.c.1.s8 %v1672
        %v1753 = vunpack.c.1.s8 %v1673
        %v1754 = vunpack.c.1.s8 %v1674
        %v1755 = vunpack.c.1.s8 %v1675
        %v1756 = vunpack.c.1.s8 %v1676
        %v1757 = vunpack.c.1.s8 %v1677
        %v1758 = vunpack.c.1.s8 %v1678
        %v1759 = vunpack.c.1.s8 %v1679
        %v1760 = vunpack.c.1.s8 %v1680
        %v1761 = vunpack.c.1.s8 %v1681
        %v1762 = vunpack.c.1.s8 %v1682
        %v1763 = vunpack.c.1.s8 %v1683
        %v1764 = vunpack.c.1.s8 %v1684
        %v1765 = vunpack.c.1.s8 %v1685
        %v1766 = vunpack.c.1.s8 %v1686
        %v1767 = vunpack.c.2.s8 %v1671
        %v1768 = vunpack.c.2.s8 %v1672
        %v1769 = vunpack.c.2.s8 %v1673
        %v1770 = vunpack.c.2.s8 %v1674
        %v1771 = vunpack.c.2.s8 %v1675
        %v1772 = vunpack.c.2.s8 %v1676
        %v1773 = vunpack.c.2.s8 %v1677
        %v1774 = vunpack.c.2.s8 %v1678
        %v1775 = vunpack.c.2.s8 %v1679
        %v1776 = vunpack.c.2.s8 %v1680
        %v1777 = vunpack.c.2.s8 %v1681
        %v1778 = vunpack.c.2.s8 %v1682
        %v1779 = vunpack.c.2.s8 %v1683
        %v1780 = vunpack.c.2.s8 %v1684
        %v1781 = vunpack.c.2.s8 %v1685
        %v1782 = vunpack.c.2.s8 %v1686
        %v1783 = vunpack.c.3.s8 %v1671
        %v1784 = vunpack.c.3.s8 %v1672
        %v1785 = vunpack.c.3.s8 %v1673
        %v1786 = vunpack.c.3.s8 %v1674
        %v1787 = vunpack.c.3.s8 %v1675
        %v1788 = vunpack.c.3.s8 %v1676
        %v1789 = vunpack.c.3.s8 %v1677
        %v1790 = vunpack.c.3.s8 %v1678
        %v1791 = vunpack.c.3.s8 %v1679
        %v1792 = vunpack.c.3.s8 %v1680
        %v1793 = vunpack.c.3.s8 %v1681
        %v1794 = vunpack.c.3.s8 %v1682
        %v1795 = vunpack.c.3.s8 %v1683
        %v1796 = vunpack.c.3.s8 %v1684
        %v1797 = vunpack.c.3.s8 %v1685
        %v1798 = vunpack.c.3.s8 %v1686
        %v1799 = vunpack.c.0.s8 %v1687
        %v1800 = vunpack.c.0.s8 %v1688
        %v1801 = vunpack.c.0.s8 %v1689
        %v1802 = vunpack.c.0.s8 %v1690
        %v1803 = vunpack.c.0.s8 %v1691
        %v1804 = vunpack.c.0.s8 %v1692
        %v1805 = vunpack.c.0.s8 %v1693
        %v1806 = vunpack.c.0.s8 %v1694
        %v1807 = vunpack.c.0.s8 %v1695
        %v1808 = vunpack.c.0.s8 %v1696
        %v1809 = vunpack.c.0.s8 %v1697
        %v1810 = vunpack.c.0.s8 %v1698
        %v1811 = vunpack.c.0.s8 %v1699
        %v1812 = vunpack.c.0.s8 %v1700
        %v1813 = vunpack.c.0.s8 %v1701
        %v1814 = vunpack.c.0.s8 %v1702
        %v1815 = vunpack.c.1.s8 %v1687
        %v1816 = vunpack.c.1.s8 %v1688
        %v1817 = vunpack.c.1.s8 %v1689
        %v1818 = vunpack.c.1.s8 %v1690
        %v1819 = vunpack.c.1.s8 %v1691
        %v1820 = vunpack.c.1.s8 %v1692
        %v1821 = vunpack.c.1.s8 %v1693
        %v1822 = vunpack.c.1.s8 %v1694
        %v1823 = vunpack.c.1.s8 %v1695
        %v1824 = vunpack.c.1.s8 %v1696
        %v1825 = vunpack.c.1.s8 %v1697
        %v1826 = vunpack.c.1.s8 %v1698
        %v1827 = vunpack.c.1.s8 %v1699
        %v1828 = vunpack.c.1.s8 %v1700
        %v1829 = vunpack.c.1.s8 %v1701
        %v1830 = vunpack.c.1.s8 %v1702
        %v1831 = vunpack.c.2.s8 %v1687
        %v1832 = vunpack.c.2.s8 %v1688
        %v1833 = vunpack.c.2.s8 %v1689
        %v1834 = vunpack.c.2.s8 %v1690
        %v1835 = vunpack.c.2.s8 %v1691
        %v1836 = vunpack.c.2.s8 %v1692
        %v1837 = vunpack.c.2.s8 %v1693
        %v1838 = vunpack.c.2.s8 %v1694
        %v1839 = vunpack.c.2.s8 %v1695
        %v1840 = vunpack.c.2.s8 %v1696
        %v1841 = vunpack.c.2.s8 %v1697
        %v1842 = vunpack.c.2.s8 %v1698
        %v1843 = vunpack.c.2.s8 %v1699
        %v1844 = vunpack.c.2.s8 %v1700
        %v1845 = vunpack.c.2.s8 %v1701
        %v1846 = vunpack.c.2.s8 %v1702
        %v1847 = vunpack.c.3.s8 %v1687
        %v1848 = vunpack.c.3.s8 %v1688
        %v1849 = vunpack.c.3.s8 %v1689
        %v1850 = vunpack.c.3.s8 %v1690
        %v1851 = vunpack.c.3.s8 %v1691
        %v1852 = vunpack.c.3.s8 %v1692
        %v1853 = vunpack.c.3.s8 %v1693
        %v1854 = vunpack.c.3.s8 %v1694
        %v1855 = vunpack.c.3.s8 %v1695
        %v1856 = vunpack.c.3.s8 %v1696
        %v1857 = vunpack.c.3.s8 %v1697
        %v1858 = vunpack.c.3.s8 %v1698
        %v1859 = vunpack.c.3.s8 %v1699
        %v1860 = vunpack.c.3.s8 %v1700
        %v1861 = vunpack.c.3.s8 %v1701
        %v1862 = vunpack.c.3.s8 %v1702
        %v1863 = vunpack.c.0.s8 %v1703
        %v1864 = vunpack.c.0.s8 %v1704
        %v1865 = vunpack.c.0.s8 %v1705
        %v1866 = vunpack.c.0.s8 %v1706
        %v1867 = vunpack.c.0.s8 %v1707
        %v1868 = vunpack.c.0.s8 %v1708
        %v1869 = vunpack.c.0.s8 %v1709
        %v1870 = vunpack.c.0.s8 %v1710
        %v1871 = vunpack.c.0.s8 %v1711
        %v1872 = vunpack.c.0.s8 %v1712
        %v1873 = vunpack.c.0.s8 %v1713
        %v1874 = vunpack.c.0.s8 %v1714
        %v1875 = vunpack.c.0.s8 %v1715
        %v1876 = vunpack.c.0.s8 %v1716
        %v1877 = vunpack.c.0.s8 %v1717
        %v1878 = vunpack.c.0.s8 %v1718
        %v1879 = vunpack.c.1.s8 %v1703
        %v1880 = vunpack.c.1.s8 %v1704
        %v1881 = vunpack.c.1.s8 %v1705
        %v1882 = vunpack.c.1.s8 %v1706
        %v1883 = vunpack.c.1.s8 %v1707
        %v1884 = vunpack.c.1.s8 %v1708
        %v1885 = vunpack.c.1.s8 %v1709
        %v1886 = vunpack.c.1.s8 %v1710
        %v1887 = vunpack.c.1.s8 %v1711
        %v1888 = vunpack.c.1.s8 %v1712
        %v1889 = vunpack.c.1.s8 %v1713
        %v1890 = vunpack.c.1.s8 %v1714
        %v1891 = vunpack.c.1.s8 %v1715
        %v1892 = vunpack.c.1.s8 %v1716
        %v1893 = vunpack.c.1.s8 %v1717
        %v1894 = vunpack.c.1.s8 %v1718
        %v1895 = vunpack.c.2.s8 %v1703
        %v1896 = vunpack.c.2.s8 %v1704
        %v1897 = vunpack.c.2.s8 %v1705
        %v1898 = vunpack.c.2.s8 %v1706
        %v1899 = vunpack.c.2.s8 %v1707
        %v1900 = vunpack.c.2.s8 %v1708
        %v1901 = vunpack.c.2.s8 %v1709
        %v1902 = vunpack.c.2.s8 %v1710
        %v1903 = vunpack.c.2.s8 %v1711
        %v1904 = vunpack.c.2.s8 %v1712
        %v1905 = vunpack.c.2.s8 %v1713
        %v1906 = vunpack.c.2.s8 %v1714
        %v1907 = vunpack.c.2.s8 %v1715
        %v1908 = vunpack.c.2.s8 %v1716
        %v1909 = vunpack.c.2.s8 %v1717
        %v1910 = vunpack.c.2.s8 %v1718
        %v1911 = vunpack.c.3.s8 %v1703
        %v1912 = vunpack.c.3.s8 %v1704
        %v1913 = vunpack.c.3.s8 %v1705
        %v1914 = vunpack.c.3.s8 %v1706
        %v1915 = vunpack.c.3.s8 %v1707
        %v1916 = vunpack.c.3.s8 %v1708
        %v1917 = vunpack.c.3.s8 %v1709
        %v1918 = vunpack.c.3.s8 %v1710
        %v1919 = vunpack.c.3.s8 %v1711
        %v1920 = vunpack.c.3.s8 %v1712
        %v1921 = vunpack.c.3.s8 %v1713
        %v1922 = vunpack.c.3.s8 %v1714
        %v1923 = vunpack.c.3.s8 %v1715
        %v1924 = vunpack.c.3.s8 %v1716
        %v1925 = vunpack.c.3.s8 %v1717
        %v1926 = vunpack.c.3.s8 %v1718
        %v1927 = vunpack.c.0.s8 %v1719
        %v1928 = vunpack.c.0.s8 %v1720
        %v1929 = vunpack.c.0.s8 %v1721
        %v1930 = vunpack.c.0.s8 %v1722
        %v1931 = vunpack.c.0.s8 %v1723
        %v1932 = vunpack.c.0.s8 %v1724
        %v1933 = vunpack.c.0.s8 %v1725
        %v1934 = vunpack.c.0.s8 %v1726
        %v1935 = vunpack.c.0.s8 %v1727
        %v1936 = vunpack.c.0.s8 %v1728
        %v1937 = vunpack.c.0.s8 %v1729
        %v1938 = vunpack.c.0.s8 %v1730
        %v1939 = vunpack.c.0.s8 %v1731
        %v1940 = vunpack.c.0.s8 %v1732
        %v1941 = vunpack.c.0.s8 %v1733
        %v1942 = vunpack.c.0.s8 %v1734
        %v1943 = vunpack.c.1.s8 %v1719
        %v1944 = vunpack.c.1.s8 %v1720
        %v1945 = vunpack.c.1.s8 %v1721
        %v1946 = vunpack.c.1.s8 %v1722
        %v1947 = vunpack.c.1.s8 %v1723
        %v1948 = vunpack.c.1.s8 %v1724
        %v1949 = vunpack.c.1.s8 %v1725
        %v1950 = vunpack.c.1.s8 %v1726
        %v1951 = vunpack.c.1.s8 %v1727
        %v1952 = vunpack.c.1.s8 %v1728
        %v1953 = vunpack.c.1.s8 %v1729
        %v1954 = vunpack.c.1.s8 %v1730
        %v1955 = vunpack.c.1.s8 %v1731
        %v1956 = vunpack.c.1.s8 %v1732
        %v1957 = vunpack.c.1.s8 %v1733
        %v1958 = vunpack.c.1.s8 %v1734
        %v1959 = vunpack.c.2.s8 %v1719
        %v1960 = vunpack.c.2.s8 %v1720
        %v1961 = vunpack.c.2.s8 %v1721
        %v1962 = vunpack.c.2.s8 %v1722
        %v1963 = vunpack.c.2.s8 %v1723
        %v1964 = vunpack.c.2.s8 %v1724
        %v1965 = vunpack.c.2.s8 %v1725
        %v1966 = vunpack.c.2.s8 %v1726
        %v1967 = vunpack.c.2.s8 %v1727
        %v1968 = vunpack.c.2.s8 %v1728
        %v1969 = vunpack.c.2.s8 %v1729
        %v1970 = vunpack.c.2.s8 %v1730
        %v1971 = vunpack.c.2.s8 %v1731
        %v1972 = vunpack.c.2.s8 %v1732
        %v1973 = vunpack.c.2.s8 %v1733
        %v1974 = vunpack.c.2.s8 %v1734
        %v1975 = vunpack.c.3.s8 %v1719
        %v1976 = vunpack.c.3.s8 %v1720
        %v1977 = vunpack.c.3.s8 %v1721
        %v1978 = vunpack.c.3.s8 %v1722
        %v1979 = vunpack.c.3.s8 %v1723
        %v1980 = vunpack.c.3.s8 %v1724
        %v1981 = vunpack.c.3.s8 %v1725
        %v1982 = vunpack.c.3.s8 %v1726
        %v1983 = vunpack.c.3.s8 %v1727
        %v1984 = vunpack.c.3.s8 %v1728
        %v1985 = vunpack.c.3.s8 %v1729
        %v1986 = vunpack.c.3.s8 %v1730
        %v1987 = vunpack.c.3.s8 %v1731
        %v1988 = vunpack.c.3.s8 %v1732
        %v1989 = vunpack.c.3.s8 %v1733
        %v1990 = vunpack.c.3.s8 %v1734
        %v1991 = vcvt.s32.f32 %v1735
        %v1992 = vcvt.s32.f32 %v1736
        %v1993 = vcvt.s32.f32 %v1737
        %v1994 = vcvt.s32.f32 %v1738
        %v1995 = vcvt.s32.f32 %v1739
        %v1996 = vcvt.s32.f32 %v1740
        %v1997 = vcvt.s32.f32 %v1741
        %v1998 = vcvt.s32.f32 %v1742
        %v1999 = vcvt.s32.f32 %v1743
        %v2000 = vcvt.s32.f32 %v1744
        %v2001 = vcvt.s32.f32 %v1745
        %v2002 = vcvt.s32.f32 %v1746
        %v2003 = vcvt.s32.f32 %v1747
        %v2004 = vcvt.s32.f32 %v1748
        %v2005 = vcvt.s32.f32 %v1749
        %v2006 = vcvt.s32.f32 %v1750
        %v2007 = vcvt.s32.f32 %v1751
        %v2008 = vcvt.s32.f32 %v1752
        %v2009 = vcvt.s32.f32 %v1753
        %v2010 = vcvt.s32.f32 %v1754
        %v2011 = vcvt.s32.f32 %v1755
        %v2012 = vcvt.s32.f32 %v1756
        %v2013 = vcvt.s32.f32 %v1757
        %v2014 = vcvt.s32.f32 %v1758
        %v2015 = vcvt.s32.f32 %v1759
        %v2016 = vcvt.s32.f32 %v1760
        %v2017 = vcvt.s32.f32 %v1761
        %v2018 = vcvt.s32.f32 %v1762
        %v2019 = vcvt.s32.f32 %v1763
        %v2020 = vcvt.s32.f32 %v1764
        %v2021 = vcvt.s32.f32 %v1765
        %v2022 = vcvt.s32.f32 %v1766
        %v2023 = vcvt.s32.f32 %v1767
        %v2024 = vcvt.s32.f32 %v1768
        %v2025 = vcvt.s32.f32 %v1769
        %v2026 = vcvt.s32.f32 %v1770
        %v2027 = vcvt.s32.f32 %v1771
        %v2028 = vcvt.s32.f32 %v1772
        %v2029 = vcvt.s32.f32 %v1773
        %v2030 = vcvt.s32.f32 %v1774
        %v2031 = vcvt.s32.f32 %v1775
        %v2032 = vcvt.s32.f32 %v1776
        %v2033 = vcvt.s32.f32 %v1777
        %v2034 = vcvt.s32.f32 %v1778
        %v2035 = vcvt.s32.f32 %v1779
        %v2036 = vcvt.s32.f32 %v1780
        %v2037 = vcvt.s32.f32 %v1781
        %v2038 = vcvt.s32.f32 %v1782
        %v2039 = vcvt.s32.f32 %v1783
        %v2040 = vcvt.s32.f32 %v1784
        %v2041 = vcvt.s32.f32 %v1785
        %v2042 = vcvt.s32.f32 %v1786
        %v2043 = vcvt.s32.f32 %v1787
        %v2044 = vcvt.s32.f32 %v1788
        %v2045 = vcvt.s32.f32 %v1789
        %v2046 = vcvt.s32.f32 %v1790
        %v2047 = vcvt.s32.f32 %v1791
        %v2048 = vcvt.s32.f32 %v1792
        %v2049 = vcvt.s32.f32 %v1793
        %v2050 = vcvt.s32.f32 %v1794
        %v2051 = vcvt.s32.f32 %v1795
        %v2052 = vcvt.s32.f32 %v1796
        %v2053 = vcvt.s32.f32 %v1797
        %v2054 = vcvt.s32.f32 %v1798
        %v2055 = vcvt.s32.f32 %v1799
        %v2056 = vcvt.s32.f32 %v1800
        %v2057 = vcvt.s32.f32 %v1801
        %v2058 = vcvt.s32.f32 %v1802
        %v2059 = vcvt.s32.f32 %v1803
        %v2060 = vcvt.s32.f32 %v1804
        %v2061 = vcvt.s32.f32 %v1805
        %v2062 = vcvt.s32.f32 %v1806
        %v2063 = vcvt.s32.f32 %v1807
        %v2064 = vcvt.s32.f32 %v1808
        %v2065 = vcvt.s32.f32 %v1809
        %v2066 = vcvt.s32.f32 %v1810
        %v2067 = vcvt.s32.f32 %v1811
        %v2068 = vcvt.s32.f32 %v1812
        %v2069 = vcvt.s32.f32 %v1813
        %v2070 = vcvt.s32.f32 %v1814
        %v2071 = vcvt.s32.f32 %v1815
        %v2072 = vcvt.s32.f32 %v1816
        %v2073 = vcvt.s32.f32 %v1817
        %v2074 = vcvt.s32.f32 %v1818
        %v2075 = vcvt.s32.f32 %v1819
        %v2076 = vcvt.s32.f32 %v1820
        %v2077 = vcvt.s32.f32 %v1821
        %v2078 = vcvt.s32.f32 %v1822
        %v2079 = vcvt.s32.f32 %v1823
        %v2080 = vcvt.s32.f32 %v1824
        %v2081 = vcvt.s32.f32 %v1825
        %v2082 = vcvt.s32.f32 %v1826
        %v2083 = vcvt.s32.f32 %v1827
        %v2084 = vcvt.s32.f32 %v1828
        %v2085 = vcvt.s32.f32 %v1829
        %v2086 = vcvt.s32.f32 %v1830
        %v2087 = vcvt.s32.f32 %v1831
        %v2088 = vcvt.s32.f32 %v1832
        %v2089 = vcvt.s32.f32 %v1833
        %v2090 = vcvt.s32.f32 %v1834
        %v2091 = vcvt.s32.f32 %v1835
        %v2092 = vcvt.s32.f32 %v1836
        %v2093 = vcvt.s32.f32 %v1837
        %v2094 = vcvt.s32.f32 %v1838
        %v2095 = vcvt.s32.f32 %v1839
        %v2096 = vcvt.s32.f32 %v1840
        %v2097 = vcvt.s32.f32 %v1841
        %v2098 = vcvt.s32.f32 %v1842
        %v2099 = vcvt.s32.f32 %v1843
        %v2100 = vcvt.s32.f32 %v1844
        %v2101 = vcvt.s32.f32 %v1845
        %v2102 = vcvt.s32.f32 %v1846
        %v2103 = vcvt.s32.f32 %v1847
        %v2104 = vcvt.s32.f32 %v1848
        %v2105 = vcvt.s32.f32 %v1849
        %v2106 = vcvt.s32.f32 %v1850
        %v2107 = vcvt.s32.f32 %v1851
        %v2108 = vcvt.s32.f32 %v1852
        %v2109 = vcvt.s32.f32 %v1853
        %v2110 = vcvt.s32.f32 %v1854
        %v2111 = vcvt.s32.f32 %v1855
        %v2112 = vcvt.s32.f32 %v1856
        %v2113 = vcvt.s32.f32 %v1857
        %v2114 = vcvt.s32.f32 %v1858
        %v2115 = vcvt.s32.f32 %v1859
        %v2116 = vcvt.s32.f32 %v1860
        %v2117 = vcvt.s32.f32 %v1861
        %v2118 = vcvt.s32.f32 %v1862
        %v2119 = vcvt.s32.f32 %v1863
        %v2120 = vcvt.s32.f32 %v1864
        %v2121 = vcvt.s32.f32 %v1865
        %v2122 = vcvt.s32.f32 %v1866
        %v2123 = vcvt.s32.f32 %v1867
        %v2124 = vcvt.s32.f32 %v1868
        %v2125 = vcvt.s32.f32 %v1869
        %v2126 = vcvt.s32.f32 %v1870
        %v2127 = vcvt.s32.f32 %v1871
        %v2128 = vcvt.s32.f32 %v1872
        %v2129 = vcvt.s32.f32 %v1873
        %v2130 = vcvt.s32.f32 %v1874
        %v2131 = vcvt.s32.f32 %v1875
        %v2132 = vcvt.s32.f32 %v1876
        %v2133 = vcvt.s32.f32 %v1877
        %v2134 = vcvt.s32.f32 %v1878
        %v2135 = vcvt.s32.f32 %v1879
        %v2136 = vcvt.s32.f32 %v1880
        %v2137 = vcvt.s32.f32 %v1881
        %v2138 = vcvt.s32.f32 %v1882
        %v2139 = vcvt.s32.f32 %v1883
        %v2140 = vcvt.s32.f32 %v1884
        %v2141 = vcvt.s32.f32 %v1885
        %v2142 = vcvt.s32.f32 %v1886
        %v2143 = vcvt.s32.f32 %v1887
        %v2144 = vcvt.s32.f32 %v1888
        %v2145 = vcvt.s32.f32 %v1889
        %v2146 = vcvt.s32.f32 %v1890
        %v2147 = vcvt.s32.f32 %v1891
        %v2148 = vcvt.s32.f32 %v1892
        %v2149 = vcvt.s32.f32 %v1893
        %v2150 = vcvt.s32.f32 %v1894
        %v2151 = vcvt.s32.f32 %v1895
        %v2152 = vcvt.s32.f32 %v1896
        %v2153 = vcvt.s32.f32 %v1897
        %v2154 = vcvt.s32.f32 %v1898
        %v2155 = vcvt.s32.f32 %v1899
        %v2156 = vcvt.s32.f32 %v1900
        %v2157 = vcvt.s32.f32 %v1901
        %v2158 = vcvt.s32.f32 %v1902
        %v2159 = vcvt.s32.f32 %v1903
        %v2160 = vcvt.s32.f32 %v1904
        %v2161 = vcvt.s32.f32 %v1905
        %v2162 = vcvt.s32.f32 %v1906
        %v2163 = vcvt.s32.f32 %v1907
        %v2164 = vcvt.s32.f32 %v1908
        %v2165 = vcvt.s32.f32 %v1909
        %v2166 = vcvt.s32.f32 %v1910
        %v2167 = vcvt.s32.f32 %v1911
        %v2168 = vcvt.s32.f32 %v1912
        %v2169 = vcvt.s32.f32 %v1913
        %v2170 = vcvt.s32.f32 %v1914
        %v2171 = vcvt.s32.f32 %v1915
        %v2172 = vcvt.s32.f32 %v1916
        %v2173 = vcvt.s32.f32 %v1917
        %v2174 = vcvt.s32.f32 %v1918
        %v2175 = vcvt.s32.f32 %v1919
        %v2176 = vcvt.s32.f32 %v1920
        %v2177 = vcvt.s32.f32 %v1921
        %v2178 = vcvt.s32.f32 %v1922
        %v2179 = vcvt.s32.f32 %v1923
        %v2180 = vcvt.s32.f32 %v1924
        %v2181 = vcvt.s32.f32 %v1925
        %v2182 = vcvt.s32.f32 %v1926
        %v2183 = vcvt.s32.f32 %v1927
        %v2184 = vcvt.s32.f32 %v1928
        %v2185 = vcvt.s32.f32 %v1929
        %v2186 = vcvt.s32.f32 %v1930
        %v2187 = vcvt.s32.f32 %v1931
        %v2188 = vcvt.s32.f32 %v1932
        %v2189 = vcvt.s32.f32 %v1933
        %v2190 = vcvt.s32.f32 %v1934
        %v2191 = vcvt.s32.f32 %v1935
        %v2192 = vcvt.s32.f32 %v1936
        %v2193 = vcvt.s32.f32 %v1937
        %v2194 = vcvt.s32.f32 %v1938
        %v2195 = vcvt.s32.f32 %v1939
        %v2196 = vcvt.s32.f32 %v1940
        %v2197 = vcvt.s32.f32 %v1941
        %v2198 = vcvt.s32.f32 %v1942
        %v2199 = vcvt.s32.f32 %v1943
        %v2200 = vcvt.s32.f32 %v1944
        %v2201 = vcvt.s32.f32 %v1945
        %v2202 = vcvt.s32.f32 %v1946
        %v2203 = vcvt.s32.f32 %v1947
        %v2204 = vcvt.s32.f32 %v1948
        %v2205 = vcvt.s32.f32 %v1949
        %v2206 = vcvt.s32.f32 %v1950
        %v2207 = vcvt.s32.f32 %v1951
        %v2208 = vcvt.s32.f32 %v1952
        %v2209 = vcvt.s32.f32 %v1953
        %v2210 = vcvt.s32.f32 %v1954
        %v2211 = vcvt.s32.f32 %v1955
        %v2212 = vcvt.s32.f32 %v1956
        %v2213 = vcvt.s32.f32 %v1957
        %v2214 = vcvt.s32.f32 %v1958
        %v2215 = vcvt.s32.f32 %v1959
        %v2216 = vcvt.s32.f32 %v1960
        %v2217 = vcvt.s32.f32 %v1961
        %v2218 = vcvt.s32.f32 %v1962
        %v2219 = vcvt.s32.f32 %v1963
        %v2220 = vcvt.s32.f32 %v1964
        %v2221 = vcvt.s32.f32 %v1965
        %v2222 = vcvt.s32.f32 %v1966
        %v2223 = vcvt.s32.f32 %v1967
        %v2224 = vcvt.s32.f32 %v1968
        %v2225 = vcvt.s32.f32 %v1969
        %v2226 = vcvt.s32.f32 %v1970
        %v2227 = vcvt.s32.f32 %v1971
        %v2228 = vcvt.s32.f32 %v1972
        %v2229 = vcvt.s32.f32 %v1973
        %v2230 = vcvt.s32.f32 %v1974
        %v2231 = vcvt.s32.f32 %v1975
        %v2232 = vcvt.s32.f32 %v1976
        %v2233 = vcvt.s32.f32 %v1977
        %v2234 = vcvt.s32.f32 %v1978
        %v2235 = vcvt.s32.f32 %v1979
        %v2236 = vcvt.s32.f32 %v1980
        %v2237 = vcvt.s32.f32 %v1981
        %v2238 = vcvt.s32.f32 %v1982
        %v2239 = vcvt.s32.f32 %v1983
        %v2240 = vcvt.s32.f32 %v1984
        %v2241 = vcvt.s32.f32 %v1985
        %v2242 = vcvt.s32.f32 %v1986
        %v2243 = vcvt.s32.f32 %v1987
        %v2244 = vcvt.s32.f32 %v1988
        %v2245 = vcvt.s32.f32 %v1989
        %v2246 = vcvt.s32.f32 %v1990
        %v2247 = vpack.c.bf16 %v2007, %v1991
        %v2248 = vpack.c.bf16 %v2008, %v1992
        %v2249 = vpack.c.bf16 %v2009, %v1993
        %v2250 = vpack.c.bf16 %v2010, %v1994
        %v2251 = vpack.c.bf16 %v2011, %v1995
        %v2252 = vpack.c.bf16 %v2012, %v1996
        %v2253 = vpack.c.bf16 %v2013, %v1997
        %v2254 = vpack.c.bf16 %v2014, %v1998
        %v2255 = vpack.c.bf16 %v2015, %v1999
        %v2256 = vpack.c.bf16 %v2016, %v2000
        %v2257 = vpack.c.bf16 %v2017, %v2001
        %v2258 = vpack.c.bf16 %v2018, %v2002
        %v2259 = vpack.c.bf16 %v2019, %v2003
        %v2260 = vpack.c.bf16 %v2020, %v2004
        %v2261 = vpack.c.bf16 %v2021, %v2005
        %v2262 = vpack.c.bf16 %v2022, %v2006
        %v2263 = vpack.c.bf16 %v2039, %v2023
        %v2264 = vpack.c.bf16 %v2040, %v2024
        %v2265 = vpack.c.bf16 %v2041, %v2025
        %v2266 = vpack.c.bf16 %v2042, %v2026
        %v2267 = vpack.c.bf16 %v2043, %v2027
        %v2268 = vpack.c.bf16 %v2044, %v2028
        %v2269 = vpack.c.bf16 %v2045, %v2029
        %v2270 = vpack.c.bf16 %v2046, %v2030
        %v2271 = vpack.c.bf16 %v2047, %v2031
        %v2272 = vpack.c.bf16 %v2048, %v2032
        %v2273 = vpack.c.bf16 %v2049, %v2033
        %v2274 = vpack.c.bf16 %v2050, %v2034
        %v2275 = vpack.c.bf16 %v2051, %v2035
        %v2276 = vpack.c.bf16 %v2052, %v2036
        %v2277 = vpack.c.bf16 %v2053, %v2037
        %v2278 = vpack.c.bf16 %v2054, %v2038
        %v2279 = vpack.c.bf16 %v2071, %v2055
        %v2280 = vpack.c.bf16 %v2072, %v2056
        %v2281 = vpack.c.bf16 %v2073, %v2057
        %v2282 = vpack.c.bf16 %v2074, %v2058
        %v2283 = vpack.c.bf16 %v2075, %v2059
        %v2284 = vpack.c.bf16 %v2076, %v2060
        %v2285 = vpack.c.bf16 %v2077, %v2061
        %v2286 = vpack.c.bf16 %v2078, %v2062
        %v2287 = vpack.c.bf16 %v2079, %v2063
        %v2288 = vpack.c.bf16 %v2080, %v2064
        %v2289 = vpack.c.bf16 %v2081, %v2065
        %v2290 = vpack.c.bf16 %v2082, %v2066
        %v2291 = vpack.c.bf16 %v2083, %v2067
        %v2292 = vpack.c.bf16 %v2084, %v2068
        %v2293 = vpack.c.bf16 %v2085, %v2069
        %v2294 = vpack.c.bf16 %v2086, %v2070
        %v2295 = vpack.c.bf16 %v2103, %v2087
        %v2296 = vpack.c.bf16 %v2104, %v2088
        %v2297 = vpack.c.bf16 %v2105, %v2089
        %v2298 = vpack.c.bf16 %v2106, %v2090
        %v2299 = vpack.c.bf16 %v2107, %v2091
        %v2300 = vpack.c.bf16 %v2108, %v2092
        %v2301 = vpack.c.bf16 %v2109, %v2093
        %v2302 = vpack.c.bf16 %v2110, %v2094
        %v2303 = vpack.c.bf16 %v2111, %v2095
        %v2304 = vpack.c.bf16 %v2112, %v2096
        %v2305 = vpack.c.bf16 %v2113, %v2097
        %v2306 = vpack.c.bf16 %v2114, %v2098
        %v2307 = vpack.c.bf16 %v2115, %v2099
        %v2308 = vpack.c.bf16 %v2116, %v2100
        %v2309 = vpack.c.bf16 %v2117, %v2101
        %v2310 = vpack.c.bf16 %v2118, %v2102
        %v2311 = vpack.c.bf16 %v2135, %v2119
        %v2312 = vpack.c.bf16 %v2136, %v2120
        %v2313 = vpack.c.bf16 %v2137, %v2121
        %v2314 = vpack.c.bf16 %v2138, %v2122
        %v2315 = vpack.c.bf16 %v2139, %v2123
        %v2316 = vpack.c.bf16 %v2140, %v2124
        %v2317 = vpack.c.bf16 %v2141, %v2125
        %v2318 = vpack.c.bf16 %v2142, %v2126
        %v2319 = vpack.c.bf16 %v2143, %v2127
        %v2320 = vpack.c.bf16 %v2144, %v2128
        %v2321 = vpack.c.bf16 %v2145, %v2129
        %v2322 = vpack.c.bf16 %v2146, %v2130
        %v2323 = vpack.c.bf16 %v2147, %v2131
        %v2324 = vpack.c.bf16 %v2148, %v2132
        %v2325 = vpack.c.bf16 %v2149, %v2133
        %v2326 = vpack.c.bf16 %v2150, %v2134
        %v2327 = vpack.c.bf16 %v2167, %v2151
        %v2328 = vpack.c.bf16 %v2168, %v2152
        %v2329 = vpack.c.bf16 %v2169, %v2153
        %v2330 = vpack.c.bf16 %v2170, %v2154
        %v2331 = vpack.c.bf16 %v2171, %v2155
        %v2332 = vpack.c.bf16 %v2172, %v2156
        %v2333 = vpack.c.bf16 %v2173, %v2157
        %v2334 = vpack.c.bf16 %v2174, %v2158
        %v2335 = vpack.c.bf16 %v2175, %v2159
        %v2336 = vpack.c.bf16 %v2176, %v2160
        %v2337 = vpack.c.bf16 %v2177, %v2161
        %v2338 = vpack.c.bf16 %v2178, %v2162
        %v2339 = vpack.c.bf16 %v2179, %v2163
        %v2340 = vpack.c.bf16 %v2180, %v2164
        %v2341 = vpack.c.bf16 %v2181, %v2165
        %v2342 = vpack.c.bf16 %v2182, %v2166
        %v2343 = vpack.c.bf16 %v2199, %v2183
        %v2344 = vpack.c.bf16 %v2200, %v2184
        %v2345 = vpack.c.bf16 %v2201, %v2185
        %v2346 = vpack.c.bf16 %v2202, %v2186
        %v2347 = vpack.c.bf16 %v2203, %v2187
        %v2348 = vpack.c.bf16 %v2204, %v2188
        %v2349 = vpack.c.bf16 %v2205, %v2189
        %v2350 = vpack.c.bf16 %v2206, %v2190
        %v2351 = vpack.c.bf16 %v2207, %v2191
        %v2352 = vpack.c.bf16 %v2208, %v2192
        %v2353 = vpack.c.bf16 %v2209, %v2193
        %v2354 = vpack.c.bf16 %v2210, %v2194
        %v2355 = vpack.c.bf16 %v2211, %v2195
        %v2356 = vpack.c.bf16 %v2212, %v2196
        %v2357 = vpack.c.bf16 %v2213, %v2197
        %v2358 = vpack.c.bf16 %v2214, %v2198
        %v2359 = vpack.c.bf16 %v2231, %v2215
        %v2360 = vpack.c.bf16 %v2232, %v2216
        %v2361 = vpack.c.bf16 %v2233, %v2217
        %v2362 = vpack.c.bf16 %v2234, %v2218
        %v2363 = vpack.c.bf16 %v2235, %v2219
        %v2364 = vpack.c.bf16 %v2236, %v2220
        %v2365 = vpack.c.bf16 %v2237, %v2221
        %v2366 = vpack.c.bf16 %v2238, %v2222
        %v2367 = vpack.c.bf16 %v2239, %v2223
        %v2368 = vpack.c.bf16 %v2240, %v2224
        %v2369 = vpack.c.bf16 %v2241, %v2225
        %v2370 = vpack.c.bf16 %v2242, %v2226
        %v2371 = vpack.c.bf16 %v2243, %v2227
        %v2372 = vpack.c.bf16 %v2244, %v2228
        %v2373 = vpack.c.bf16 %v2245, %v2229
        %v2374 = vpack.c.bf16 %v2246, %v2230
        %v2375 = vpack.c.bf16 %v1670, %v1669
        %2376 = vmatpush.bf16.msra.mxu0 %v2359
        %2377 = vmatpush.bf16.msra.mxu0 %v2343
        %2378 = vmatpush.bf16.msra.mxu0 %v2327
        %2379 = vmatpush.bf16.msra.mxu0 %v2311
        %2380 = vmatpush.bf16.msra.mxu0 %v2295
        %2381 = vmatpush.bf16.msra.mxu0 %v2279
        %2382 = vmatpush.bf16.msra.mxu0 %v2263
        %2383 = vmatpush.bf16.msra.mxu0 %v2247
        %2384 = vmatmul.bf16.gmra.mxu0 %v2375
        %v2385 = vpop.f32.mrf.mxu0
        %v2386 = vadd.f32 0.0, %v2385
        %v2387 = vpop.f32.mrf.mxu0
        %v2388 = vadd.f32 0.0, %v2387
        %2389 = vdwg.mxu0
        %2390 = vmatpush.bf16.msra.mxu0 %v2360
        %2391 = vmatpush.bf16.msra.mxu0 %v2344
        %2392 = vmatpush.bf16.msra.mxu0 %v2328
        %2393 = vmatpush.bf16.msra.mxu0 %v2312
        %2394 = vmatpush.bf16.msra.mxu0 %v2296
        %2395 = vmatpush.bf16.msra.mxu0 %v2280
        %2396 = vmatpush.bf16.msra.mxu0 %v2264
        %2397 = vmatpush.bf16.msra.mxu0 %v2248
        %2398 = vmatmul.bf16.gmra.mxu0 %v2375
        %v2399 = vpop.f32.mrf.mxu0
        %v2400 = vadd.f32 0.0, %v2399
        %v2401 = vpop.f32.mrf.mxu0
        %v2402 = vadd.f32 0.0, %v2401
        %2403 = vdwg.mxu0
        %2404 = vmatpush.bf16.msra.mxu0 %v2361
        %2405 = vmatpush.bf16.msra.mxu0 %v2345
        %2406 = vmatpush.bf16.msra.mxu0 %v2329
        %2407 = vmatpush.bf16.msra.mxu0 %v2313
        %2408 = vmatpush.bf16.msra.mxu0 %v2297
        %2409 = vmatpush.bf16.msra.mxu0 %v2281
        %2410 = vmatpush.bf16.msra.mxu0 %v2265
        %2411 = vmatpush.bf16.msra.mxu0 %v2249
        %2412 = vmatmul.bf16.gmra.mxu0 %v2375
        %v2413 = vpop.f32.mrf.mxu0
        %v2414 = vadd.f32 0.0, %v2413
        %v2415 = vpop.f32.mrf.mxu0
        %v2416 = vadd.f32 0.0, %v2415
        %2417 = vdwg.mxu0
        %2418 = vmatpush.bf16.msra.mxu0 %v2362
        %2419 = vmatpush.bf16.msra.mxu0 %v2346
        %2420 = vmatpush.bf16.msra.mxu0 %v2330
        %2421 = vmatpush.bf16.msra.mxu0 %v2314
        %2422 = vmatpush.bf16.msra.mxu0 %v2298
        %2423 = vmatpush.bf16.msra.mxu0 %v2282
        %2424 = vmatpush.bf16.msra.mxu0 %v2266
        %2425 = vmatpush.bf16.msra.mxu0 %v2250
        %2426 = vmatmul.bf16.gmra.mxu0 %v2375
        %v2427 = vpop.f32.mrf.mxu0
        %v2428 = vadd.f32 0.0, %v2427
        %v2429 = vpop.f32.mrf.mxu0
        %v2430 = vadd.f32 0.0, %v2429
        %2431 = vdwg.mxu0
        %2432 = vmatpush.bf16.msra.mxu0 %v2363
        %2433 = vmatpush.bf16.msra.mxu0 %v2347
        %2434 = vmatpush.bf16.msra.mxu0 %v2331
        %2435 = vmatpush.bf16.msra.mxu0 %v2315
        %2436 = vmatpush.bf16.msra.mxu0 %v2299
        %2437 = vmatpush.bf16.msra.mxu0 %v2283
        %2438 = vmatpush.bf16.msra.mxu0 %v2267
        %2439 = vmatpush.bf16.msra.mxu0 %v2251
        %2440 = vmatmul.bf16.gmra.mxu0 %v2375
        %v2441 = vpop.f32.mrf.mxu0
        %v2442 = vadd.f32 0.0, %v2441
        %v2443 = vpop.f32.mrf.mxu0
        %v2444 = vadd.f32 0.0, %v2443
        %2445 = vdwg.mxu0
        %2446 = vmatpush.bf16.msra.mxu0 %v2364
        %2447 = vmatpush.bf16.msra.mxu0 %v2348
        %2448 = vmatpush.bf16.msra.mxu0 %v2332
        %2449 = vmatpush.bf16.msra.mxu0 %v2316
        %2450 = vmatpush.bf16.msra.mxu0 %v2300
        %2451 = vmatpush.bf16.msra.mxu0 %v2284
        %2452 = vmatpush.bf16.msra.mxu0 %v2268
        %2453 = vmatpush.bf16.msra.mxu0 %v2252
        %2454 = vmatmul.bf16.gmra.mxu0 %v2375
        %v2455 = vpop.f32.mrf.mxu0
        %v2456 = vadd.f32 0.0, %v2455
        %v2457 = vpop.f32.mrf.mxu0
        %v2458 = vadd.f32 0.0, %v2457
        %2459 = vdwg.mxu0
        %2460 = vmatpush.bf16.msra.mxu0 %v2365
        %2461 = vmatpush.bf16.msra.mxu0 %v2349
        %2462 = vmatpush.bf16.msra.mxu0 %v2333
        %2463 = vmatpush.bf16.msra.mxu0 %v2317
        %2464 = vmatpush.bf16.msra.mxu0 %v2301
        %2465 = vmatpush.bf16.msra.mxu0 %v2285
        %2466 = vmatpush.bf16.msra.mxu0 %v2269
        %2467 = vmatpush.bf16.msra.mxu0 %v2253
        %2468 = vmatmul.bf16.gmra.mxu0 %v2375
        %v2469 = vpop.f32.mrf.mxu0
        %v2470 = vadd.f32 0.0, %v2469
        %v2471 = vpop.f32.mrf.mxu0
        %v2472 = vadd.f32 0.0, %v2471
        %2473 = vdwg.mxu0
        %2474 = vmatpush.bf16.msra.mxu0 %v2366
        %2475 = vmatpush.bf16.msra.mxu0 %v2350
        %2476 = vmatpush.bf16.msra.mxu0 %v2334
        %2477 = vmatpush.bf16.msra.mxu0 %v2318
        %2478 = vmatpush.bf16.msra.mxu0 %v2302
        %2479 = vmatpush.bf16.msra.mxu0 %v2286
        %2480 = vmatpush.bf16.msra.mxu0 %v2270
        %2481 = vmatpush.bf16.msra.mxu0 %v2254
        %2482 = vmatmul.bf16.gmra.mxu0 %v2375
        %v2483 = vpop.f32.mrf.mxu0
        %v2484 = vadd.f32 0.0, %v2483
        %v2485 = vpop.f32.mrf.mxu0
        %v2486 = vadd.f32 0.0, %v2485
        %2487 = vdwg.mxu0
        %2488 = vmatpush.bf16.msra.mxu0 %v2367
        %2489 = vmatpush.bf16.msra.mxu0 %v2351
        %2490 = vmatpush.bf16.msra.mxu0 %v2335
        %2491 = vmatpush.bf16.msra.mxu0 %v2319
        %2492 = vmatpush.bf16.msra.mxu0 %v2303
        %2493 = vmatpush.bf16.msra.mxu0 %v2287
        %2494 = vmatpush.bf16.msra.mxu0 %v2271
        %2495 = vmatpush.bf16.msra.mxu0 %v2255
        %2496 = vmatmul.bf16.gmra.mxu0 %v2375
        %v2497 = vpop.f32.mrf.mxu0
        %v2498 = vadd.f32 0.0, %v2497
        %v2499 = vpop.f32.mrf.mxu0
        %v2500 = vadd.f32 0.0, %v2499
        %2501 = vdwg.mxu0
        %2502 = vmatpush.bf16.msra.mxu0 %v2368
        %2503 = vmatpush.bf16.msra.mxu0 %v2352
        %2504 = vmatpush.bf16.msra.mxu0 %v2336
        %2505 = vmatpush.bf16.msra.mxu0 %v2320
        %2506 = vmatpush.bf16.msra.mxu0 %v2304
        %2507 = vmatpush.bf16.msra.mxu0 %v2288
        %2508 = vmatpush.bf16.msra.mxu0 %v2272
        %2509 = vmatpush.bf16.msra.mxu0 %v2256
        %2510 = vmatmul.bf16.gmra.mxu0 %v2375
        %v2511 = vpop.f32.mrf.mxu0
        %v2512 = vadd.f32 0.0, %v2511
        %v2513 = vpop.f32.mrf.mxu0
        %v2514 = vadd.f32 0.0, %v2513
        %2515 = vdwg.mxu0
        %2516 = vmatpush.bf16.msra.mxu0 %v2369
        %2517 = vmatpush.bf16.msra.mxu0 %v2353
        %2518 = vmatpush.bf16.msra.mxu0 %v2337
        %2519 = vmatpush.bf16.msra.mxu0 %v2321
        %2520 = vmatpush.bf16.msra.mxu0 %v2305
        %2521 = vmatpush.bf16.msra.mxu0 %v2289
        %2522 = vmatpush.bf16.msra.mxu0 %v2273
        %2523 = vmatpush.bf16.msra.mxu0 %v2257
        %2524 = vmatmul.bf16.gmra.mxu0 %v2375
        %v2525 = vpop.f32.mrf.mxu0
        %v2526 = vadd.f32 0.0, %v2525
        %v2527 = vpop.f32.mrf.mxu0
        %v2528 = vadd.f32 0.0, %v2527
        %2529 = vdwg.mxu0
        %2530 = vmatpush.bf16.msra.mxu0 %v2370
        %2531 = vmatpush.bf16.msra.mxu0 %v2354
        %2532 = vmatpush.bf16.msra.mxu0 %v2338
        %2533 = vmatpush.bf16.msra.mxu0 %v2322
        %2534 = vmatpush.bf16.msra.mxu0 %v2306
        %2535 = vmatpush.bf16.msra.mxu0 %v2290
        %2536 = vmatpush.bf16.msra.mxu0 %v2274
        %2537 = vmatpush.bf16.msra.mxu0 %v2258
        %2538 = vmatmul.bf16.gmra.mxu0 %v2375
        %v2539 = vpop.f32.mrf.mxu0
        %v2540 = vadd.f32 0.0, %v2539
        %v2541 = vpop.f32.mrf.mxu0
        %v2542 = vadd.f32 0.0, %v2541
        %2543 = vdwg.mxu0
        %2544 = vmatpush.bf16.msra.mxu0 %v2371
        %2545 = vmatpush.bf16.msra.mxu0 %v2355
        %2546 = vmatpush.bf16.msra.mxu0 %v2339
        %2547 = vmatpush.bf16.msra.mxu0 %v2323
        %2548 = vmatpush.bf16.msra.mxu0 %v2307
        %2549 = vmatpush.bf16.msra.mxu0 %v2291
        %2550 = vmatpush.bf16.msra.mxu0 %v2275
        %2551 = vmatpush.bf16.msra.mxu0 %v2259
        %2552 = vmatmul.bf16.gmra.mxu0 %v2375
        %v2553 = vpop.f32.mrf.mxu0
        %v2554 = vadd.f32 0.0, %v2553
        %v2555 = vpop.f32.mrf.mxu0
        %v2556 = vadd.f32 0.0, %v2555
        %2557 = vdwg.mxu0
        %2558 = vmatpush.bf16.msra.mxu0 %v2372
        %2559 = vmatpush.bf16.msra.mxu0 %v2356
        %2560 = vmatpush.bf16.msra.mxu0 %v2340
        %2561 = vmatpush.bf16.msra.mxu0 %v2324
        %2562 = vmatpush.bf16.msra.mxu0 %v2308
        %2563 = vmatpush.bf16.msra.mxu0 %v2292
        %2564 = vmatpush.bf16.msra.mxu0 %v2276
        %2565 = vmatpush.bf16.msra.mxu0 %v2260
        %2566 = vmatmul.bf16.gmra.mxu0 %v2375
        %v2567 = vpop.f32.mrf.mxu0
        %v2568 = vadd.f32 0.0, %v2567
        %v2569 = vpop.f32.mrf.mxu0
        %v2570 = vadd.f32 0.0, %v2569
        %2571 = vdwg.mxu0
        %2572 = vmatpush.bf16.msra.mxu0 %v2373
        %2573 = vmatpush.bf16.msra.mxu0 %v2357
        %2574 = vmatpush.bf16.msra.mxu0 %v2341
        %2575 = vmatpush.bf16.msra.mxu0 %v2325
        %2576 = vmatpush.bf16.msra.mxu0 %v2309
        %2577 = vmatpush.bf16.msra.mxu0 %v2293
        %2578 = vmatpush.bf16.msra.mxu0 %v2277
        %2579 = vmatpush.bf16.msra.mxu0 %v2261
        %2580 = vmatmul.bf16.gmra.mxu0 %v2375
        %v2581 = vpop.f32.mrf.mxu0
        %v2582 = vadd.f32 0.0, %v2581
        %v2583 = vpop.f32.mrf.mxu0
        %v2584 = vadd.f32 0.0, %v2583
        %2585 = vdwg.mxu0
        %2586 = vmatpush.bf16.msra.mxu0 %v2374
        %2587 = vmatpush.bf16.msra.mxu0 %v2358
        %2588 = vmatpush.bf16.msra.mxu0 %v2342
        %2589 = vmatpush.bf16.msra.mxu0 %v2326
        %2590 = vmatpush.bf16.msra.mxu0 %v2310
        %2591 = vmatpush.bf16.msra.mxu0 %v2294
        %2592 = vmatpush.bf16.msra.mxu0 %v2278
        %2593 = vmatpush.bf16.msra.mxu0 %v2262
        %2594 = vmatmul.bf16.gmra.mxu0 %v2375
        %v2595 = vpop.f32.mrf.mxu0
        %v2596 = vadd.f32 0.0, %v2595
        %v2597 = vpop.f32.mrf.mxu0
        %v2598 = vadd.f32 0.0, %v2597
        %2599 = vdwg.mxu0
        %v2600 = vld [vmem:[%s1026] sm:$0xff]
        %v2601 = vld [vmem:[%s1026 + $0x8] sm:$0xff]
        %v2604 = vperm.slane %v2600, 0
        %v2605 = vperm.slane %v2600, 1
        %v2606 = vperm.slane %v2600, 2
        %v2607 = vperm.slane %v2600, 3
        %v2608 = vperm.slane %v2600, 4
        %v2609 = vperm.slane %v2600, 5
        %v2610 = vperm.slane %v2600, 6
        %v2611 = vperm.slane %v2600, 7
        %v2612 = vperm.slane %v2601, 0
        %v2613 = vperm.slane %v2601, 1
        %v2614 = vperm.slane %v2601, 2
        %v2615 = vperm.slane %v2601, 3
        %v2616 = vperm.slane %v2601, 4
        %v2617 = vperm.slane %v2601, 5
        %v2618 = vperm.slane %v2601, 6
        %v2619 = vperm.slane %v2601, 7
        %v2636 = vmul.f32 %v2386, %v2604
        %v2637 = vmul.f32 %v2400, %v2605
        %v2638 = vmul.f32 %v2414, %v2606
        %v2639 = vmul.f32 %v2428, %v2607
        %v2640 = vmul.f32 %v2442, %v2608
        %v2641 = vmul.f32 %v2456, %v2609
        %v2642 = vmul.f32 %v2470, %v2610
        %v2643 = vmul.f32 %v2484, %v2611
        %v2644 = vmul.f32 %v2498, %v2612
        %v2645 = vmul.f32 %v2512, %v2613
        %v2646 = vmul.f32 %v2526, %v2614
        %v2647 = vmul.f32 %v2540, %v2615
        %v2648 = vmul.f32 %v2554, %v2616
        %v2649 = vmul.f32 %v2568, %v2617
        %v2650 = vmul.f32 %v2582, %v2618
        %v2651 = vmul.f32 %v2596, %v2619
        %v2652 = vmul.f32 %v2388, %v2604
        %v2653 = vmul.f32 %v2402, %v2605
        %v2654 = vmul.f32 %v2416, %v2606
        %v2655 = vmul.f32 %v2430, %v2607
        %v2656 = vmul.f32 %v2444, %v2608
        %v2657 = vmul.f32 %v2458, %v2609
        %v2658 = vmul.f32 %v2472, %v2610
        %v2659 = vmul.f32 %v2486, %v2611
        %v2660 = vmul.f32 %v2500, %v2612
        %v2661 = vmul.f32 %v2514, %v2613
        %v2662 = vmul.f32 %v2528, %v2614
        %v2663 = vmul.f32 %v2542, %v2615
        %v2664 = vmul.f32 %v2556, %v2616
        %v2665 = vmul.f32 %v2570, %v2617
        %v2666 = vmul.f32 %v2584, %v2618
        %v2667 = vmul.f32 %v2598, %v2619
        %v2668 = vld [vmem:[%s895] sm:$0xff]
        %v2669 = vld [vmem:[%s895 + $0x8] sm:$0xff]
        %v2672 = vperm.slane %v2668, 0
        %v2673 = vperm.slane %v2668, 1
        %v2674 = vperm.slane %v2668, 2
        %v2675 = vperm.slane %v2668, 3
        %v2676 = vperm.slane %v2668, 4
        %v2677 = vperm.slane %v2668, 5
        %v2678 = vperm.slane %v2668, 6
        %v2679 = vperm.slane %v2668, 7
        %v2680 = vperm.slane %v2669, 0
        %v2681 = vperm.slane %v2669, 1
        %v2682 = vperm.slane %v2669, 2
        %v2683 = vperm.slane %v2669, 3
        %v2684 = vperm.slane %v2669, 4
        %v2685 = vperm.slane %v2669, 5
        %v2686 = vperm.slane %v2669, 6
        %v2687 = vperm.slane %v2669, 7
        %v2704 = vadd.f32 %v2636, %v2672
        %v2705 = vadd.f32 %v2637, %v2673
        %v2706 = vadd.f32 %v2638, %v2674
        %v2707 = vadd.f32 %v2639, %v2675
        %v2708 = vadd.f32 %v2640, %v2676
        %v2709 = vadd.f32 %v2641, %v2677
        %v2710 = vadd.f32 %v2642, %v2678
        %v2711 = vadd.f32 %v2643, %v2679
        %v2712 = vadd.f32 %v2644, %v2680
        %v2713 = vadd.f32 %v2645, %v2681
        %v2714 = vadd.f32 %v2646, %v2682
        %v2715 = vadd.f32 %v2647, %v2683
        %v2716 = vadd.f32 %v2648, %v2684
        %v2717 = vadd.f32 %v2649, %v2685
        %v2718 = vadd.f32 %v2650, %v2686
        %v2719 = vadd.f32 %v2651, %v2687
        %v2720 = vadd.f32 %v2652, %v2672
        %v2721 = vadd.f32 %v2653, %v2673
        %v2722 = vadd.f32 %v2654, %v2674
        %v2723 = vadd.f32 %v2655, %v2675
        %v2724 = vadd.f32 %v2656, %v2676
        %v2725 = vadd.f32 %v2657, %v2677
        %v2726 = vadd.f32 %v2658, %v2678
        %v2727 = vadd.f32 %v2659, %v2679
        %v2728 = vadd.f32 %v2660, %v2680
        %v2729 = vadd.f32 %v2661, %v2681
        %v2730 = vadd.f32 %v2662, %v2682
        %v2731 = vadd.f32 %v2663, %v2683
        %v2732 = vadd.f32 %v2664, %v2684
        %v2733 = vadd.f32 %v2665, %v2685
        %v2734 = vadd.f32 %v2666, %v2686
        %v2735 = vadd.f32 %v2667, %v2687
        %v2736 = vmax.f32 %v2704, 0.0
        %v2737 = vmax.f32 %v2705, 0.0
        %v2738 = vmax.f32 %v2706, 0.0
        %v2739 = vmax.f32 %v2707, 0.0
        %v2740 = vmax.f32 %v2708, 0.0
        %v2741 = vmax.f32 %v2709, 0.0
        %v2742 = vmax.f32 %v2710, 0.0
        %v2743 = vmax.f32 %v2711, 0.0
        %v2744 = vmax.f32 %v2712, 0.0
        %v2745 = vmax.f32 %v2713, 0.0
        %v2746 = vmax.f32 %v2714, 0.0
        %v2747 = vmax.f32 %v2715, 0.0
        %v2748 = vmax.f32 %v2716, 0.0
        %v2749 = vmax.f32 %v2717, 0.0
        %v2750 = vmax.f32 %v2718, 0.0
        %v2751 = vmax.f32 %v2719, 0.0
        %v2752 = vmax.f32 %v2720, 0.0
        %v2753 = vmax.f32 %v2721, 0.0
        %v2754 = vmax.f32 %v2722, 0.0
        %v2755 = vmax.f32 %v2723, 0.0
        %v2756 = vmax.f32 %v2724, 0.0
        %v2757 = vmax.f32 %v2725, 0.0
        %v2758 = vmax.f32 %v2726, 0.0
        %v2759 = vmax.f32 %v2727, 0.0
        %v2760 = vmax.f32 %v2728, 0.0
        %v2761 = vmax.f32 %v2729, 0.0
        %v2762 = vmax.f32 %v2730, 0.0
        %v2763 = vmax.f32 %v2731, 0.0
        %v2764 = vmax.f32 %v2732, 0.0
        %v2765 = vmax.f32 %v2733, 0.0
        %v2766 = vmax.f32 %v2734, 0.0
        %v2767 = vmax.f32 %v2735, 0.0
        %v2768 = vld [vmem:[%s905] sm:$0xff]
        %v2769 = vld [vmem:[%s905 + $0x8] sm:$0xff]
        %v2770 = vld [vmem:[%s905 + $0x10] sm:$0xff]
        %v2771 = vld [vmem:[%s905 + $0x18] sm:$0xff]
        %v2772 = vld [vmem:[%s905 + $0x20] sm:$0xff]
        %v2773 = vld [vmem:[%s905 + $0x28] sm:$0xff]
        %v2774 = vld [vmem:[%s905 + $0x30] sm:$0xff]
        %v2775 = vld [vmem:[%s905 + $0x38] sm:$0xff]
        %v2776 = vld [vmem:[%s905 + $0x40] sm:$0xff]
        %v2777 = vld [vmem:[%s905 + $0x48] sm:$0xff]
        %v2778 = vld [vmem:[%s905 + $0x50] sm:$0xff]
        %v2779 = vld [vmem:[%s905 + $0x58] sm:$0xff]
        %v2780 = vld [vmem:[%s905 + $0x60] sm:$0xff]
        %v2781 = vld [vmem:[%s905 + $0x68] sm:$0xff]
        %v2782 = vld [vmem:[%s905 + $0x70] sm:$0xff]
        %v2783 = vld [vmem:[%s905 + $0x78] sm:$0xff]
        %v2784 = vld [vmem:[%s905 + $0x80] sm:$0xff]
        %v2785 = vld [vmem:[%s905 + $0x88] sm:$0xff]
        %v2786 = vld [vmem:[%s905 + $0x90] sm:$0xff]
        %v2787 = vld [vmem:[%s905 + $0x98] sm:$0xff]
        %v2788 = vld [vmem:[%s905 + $0xa0] sm:$0xff]
        %v2789 = vld [vmem:[%s905 + $0xa8] sm:$0xff]
        %v2790 = vld [vmem:[%s905 + $0xb0] sm:$0xff]
        %v2791 = vld [vmem:[%s905 + $0xb8] sm:$0xff]
        %v2792 = vld [vmem:[%s905 + $0xc0] sm:$0xff]
        %v2793 = vld [vmem:[%s905 + $0xc8] sm:$0xff]
        %v2794 = vld [vmem:[%s905 + $0xd0] sm:$0xff]
        %v2795 = vld [vmem:[%s905 + $0xd8] sm:$0xff]
        %v2796 = vld [vmem:[%s905 + $0xe0] sm:$0xff]
        %v2797 = vld [vmem:[%s905 + $0xe8] sm:$0xff]
        %v2798 = vld [vmem:[%s905 + $0xf0] sm:$0xff]
        %v2799 = vld [vmem:[%s905 + $0xf8] sm:$0xff]
        %v2800 = vld [vmem:[%s905 + $0x100] sm:$0xff]
        %v2801 = vld [vmem:[%s905 + $0x108] sm:$0xff]
        %v2802 = vld [vmem:[%s905 + $0x110] sm:$0xff]
        %v2803 = vld [vmem:[%s905 + $0x118] sm:$0xff]
        %v2804 = vld [vmem:[%s905 + $0x120] sm:$0xff]
        %v2805 = vld [vmem:[%s905 + $0x128] sm:$0xff]
        %v2806 = vld [vmem:[%s905 + $0x130] sm:$0xff]
        %v2807 = vld [vmem:[%s905 + $0x138] sm:$0xff]
        %v2808 = vld [vmem:[%s905 + $0x140] sm:$0xff]
        %v2809 = vld [vmem:[%s905 + $0x148] sm:$0xff]
        %v2810 = vld [vmem:[%s905 + $0x150] sm:$0xff]
        %v2811 = vld [vmem:[%s905 + $0x158] sm:$0xff]
        %v2812 = vld [vmem:[%s905 + $0x160] sm:$0xff]
        %v2813 = vld [vmem:[%s905 + $0x168] sm:$0xff]
        %v2814 = vld [vmem:[%s905 + $0x170] sm:$0xff]
        %v2815 = vld [vmem:[%s905 + $0x178] sm:$0xff]
        %v2816 = vld [vmem:[%s905 + $0x180] sm:$0xff]
        %v2817 = vld [vmem:[%s905 + $0x188] sm:$0xff]
        %v2818 = vld [vmem:[%s905 + $0x190] sm:$0xff]
        %v2819 = vld [vmem:[%s905 + $0x198] sm:$0xff]
        %v2820 = vld [vmem:[%s905 + $0x1a0] sm:$0xff]
        %v2821 = vld [vmem:[%s905 + $0x1a8] sm:$0xff]
        %v2822 = vld [vmem:[%s905 + $0x1b0] sm:$0xff]
        %v2823 = vld [vmem:[%s905 + $0x1b8] sm:$0xff]
        %v2824 = vld [vmem:[%s905 + $0x1c0] sm:$0xff]
        %v2825 = vld [vmem:[%s905 + $0x1c8] sm:$0xff]
        %v2826 = vld [vmem:[%s905 + $0x1d0] sm:$0xff]
        %v2827 = vld [vmem:[%s905 + $0x1d8] sm:$0xff]
        %v2828 = vld [vmem:[%s905 + $0x1e0] sm:$0xff]
        %v2829 = vld [vmem:[%s905 + $0x1e8] sm:$0xff]
        %v2830 = vld [vmem:[%s905 + $0x1f0] sm:$0xff]
        %v2831 = vld [vmem:[%s905 + $0x1f8] sm:$0xff]
        %v2832 = vunpack.c.0.s8 %v2768
        %v2833 = vunpack.c.1.s8 %v2768
        %v2834 = vunpack.c.2.s8 %v2768
        %v2835 = vunpack.c.3.s8 %v2768
        %v2836 = vunpack.c.0.s8 %v2769
        %v2837 = vunpack.c.1.s8 %v2769
        %v2838 = vunpack.c.2.s8 %v2769
        %v2839 = vunpack.c.3.s8 %v2769
        %v2840 = vunpack.c.0.s8 %v2770
        %v2841 = vunpack.c.1.s8 %v2770
        %v2842 = vunpack.c.2.s8 %v2770
        %v2843 = vunpack.c.3.s8 %v2770
        %v2844 = vunpack.c.0.s8 %v2771
        %v2845 = vunpack.c.1.s8 %v2771
        %v2846 = vunpack.c.2.s8 %v2771
        %v2847 = vunpack.c.3.s8 %v2771
        %v2848 = vunpack.c.0.s8 %v2772
        %v2849 = vunpack.c.1.s8 %v2772
        %v2850 = vunpack.c.2.s8 %v2772
        %v2851 = vunpack.c.3.s8 %v2772
        %v2852 = vunpack.c.0.s8 %v2773
        %v2853 = vunpack.c.1.s8 %v2773
        %v2854 = vunpack.c.2.s8 %v2773
        %v2855 = vunpack.c.3.s8 %v2773
        %v2856 = vunpack.c.0.s8 %v2774
        %v2857 = vunpack.c.1.s8 %v2774
        %v2858 = vunpack.c.2.s8 %v2774
        %v2859 = vunpack.c.3.s8 %v2774
        %v2860 = vunpack.c.0.s8 %v2775
        %v2861 = vunpack.c.1.s8 %v2775
        %v2862 = vunpack.c.2.s8 %v2775
        %v2863 = vunpack.c.3.s8 %v2775
        %v2864 = vunpack.c.0.s8 %v2776
        %v2865 = vunpack.c.1.s8 %v2776
        %v2866 = vunpack.c.2.s8 %v2776
        %v2867 = vunpack.c.3.s8 %v2776
        %v2868 = vunpack.c.0.s8 %v2777
        %v2869 = vunpack.c.1.s8 %v2777
        %v2870 = vunpack.c.2.s8 %v2777
        %v2871 = vunpack.c.3.s8 %v2777
        %v2872 = vunpack.c.0.s8 %v2778
        %v2873 = vunpack.c.1.s8 %v2778
        %v2874 = vunpack.c.2.s8 %v2778
        %v2875 = vunpack.c.3.s8 %v2778
        %v2876 = vunpack.c.0.s8 %v2779
        %v2877 = vunpack.c.1.s8 %v2779
        %v2878 = vunpack.c.2.s8 %v2779
        %v2879 = vunpack.c.3.s8 %v2779
        %v2880 = vunpack.c.0.s8 %v2780
        %v2881 = vunpack.c.1.s8 %v2780
        %v2882 = vunpack.c.2.s8 %v2780
        %v2883 = vunpack.c.3.s8 %v2780
        %v2884 = vunpack.c.0.s8 %v2781
        %v2885 = vunpack.c.1.s8 %v2781
        %v2886 = vunpack.c.2.s8 %v2781
        %v2887 = vunpack.c.3.s8 %v2781
        %v2888 = vunpack.c.0.s8 %v2782
        %v2889 = vunpack.c.1.s8 %v2782
        %v2890 = vunpack.c.2.s8 %v2782
        %v2891 = vunpack.c.3.s8 %v2782
        %v2892 = vunpack.c.0.s8 %v2783
        %v2893 = vunpack.c.1.s8 %v2783
        %v2894 = vunpack.c.2.s8 %v2783
        %v2895 = vunpack.c.3.s8 %v2783
        %v2896 = vunpack.c.0.s8 %v2784
        %v2897 = vunpack.c.1.s8 %v2784
        %v2898 = vunpack.c.2.s8 %v2784
        %v2899 = vunpack.c.3.s8 %v2784
        %v2900 = vunpack.c.0.s8 %v2785
        %v2901 = vunpack.c.1.s8 %v2785
        %v2902 = vunpack.c.2.s8 %v2785
        %v2903 = vunpack.c.3.s8 %v2785
        %v2904 = vunpack.c.0.s8 %v2786
        %v2905 = vunpack.c.1.s8 %v2786
        %v2906 = vunpack.c.2.s8 %v2786
        %v2907 = vunpack.c.3.s8 %v2786
        %v2908 = vunpack.c.0.s8 %v2787
        %v2909 = vunpack.c.1.s8 %v2787
        %v2910 = vunpack.c.2.s8 %v2787
        %v2911 = vunpack.c.3.s8 %v2787
        %v2912 = vunpack.c.0.s8 %v2788
        %v2913 = vunpack.c.1.s8 %v2788
        %v2914 = vunpack.c.2.s8 %v2788
        %v2915 = vunpack.c.3.s8 %v2788
        %v2916 = vunpack.c.0.s8 %v2789
        %v2917 = vunpack.c.1.s8 %v2789
        %v2918 = vunpack.c.2.s8 %v2789
        %v2919 = vunpack.c.3.s8 %v2789
        %v2920 = vunpack.c.0.s8 %v2790
        %v2921 = vunpack.c.1.s8 %v2790
        %v2922 = vunpack.c.2.s8 %v2790
        %v2923 = vunpack.c.3.s8 %v2790
        %v2924 = vunpack.c.0.s8 %v2791
        %v2925 = vunpack.c.1.s8 %v2791
        %v2926 = vunpack.c.2.s8 %v2791
        %v2927 = vunpack.c.3.s8 %v2791
        %v2928 = vunpack.c.0.s8 %v2792
        %v2929 = vunpack.c.1.s8 %v2792
        %v2930 = vunpack.c.2.s8 %v2792
        %v2931 = vunpack.c.3.s8 %v2792
        %v2932 = vunpack.c.0.s8 %v2793
        %v2933 = vunpack.c.1.s8 %v2793
        %v2934 = vunpack.c.2.s8 %v2793
        %v2935 = vunpack.c.3.s8 %v2793
        %v2936 = vunpack.c.0.s8 %v2794
        %v2937 = vunpack.c.1.s8 %v2794
        %v2938 = vunpack.c.2.s8 %v2794
        %v2939 = vunpack.c.3.s8 %v2794
        %v2940 = vunpack.c.0.s8 %v2795
        %v2941 = vunpack.c.1.s8 %v2795
        %v2942 = vunpack.c.2.s8 %v2795
        %v2943 = vunpack.c.3.s8 %v2795
        %v2944 = vunpack.c.0.s8 %v2796
        %v2945 = vunpack.c.1.s8 %v2796
        %v2946 = vunpack.c.2.s8 %v2796
        %v2947 = vunpack.c.3.s8 %v2796
        %v2948 = vunpack.c.0.s8 %v2797
        %v2949 = vunpack.c.1.s8 %v2797
        %v2950 = vunpack.c.2.s8 %v2797
        %v2951 = vunpack.c.3.s8 %v2797
        %v2952 = vunpack.c.0.s8 %v2798
        %v2953 = vunpack.c.1.s8 %v2798
        %v2954 = vunpack.c.2.s8 %v2798
        %v2955 = vunpack.c.3.s8 %v2798
        %v2956 = vunpack.c.0.s8 %v2799
        %v2957 = vunpack.c.1.s8 %v2799
        %v2958 = vunpack.c.2.s8 %v2799
        %v2959 = vunpack.c.3.s8 %v2799
        %v2960 = vunpack.c.0.s8 %v2800
        %v2961 = vunpack.c.1.s8 %v2800
        %v2962 = vunpack.c.2.s8 %v2800
        %v2963 = vunpack.c.3.s8 %v2800
        %v2964 = vunpack.c.0.s8 %v2801
        %v2965 = vunpack.c.1.s8 %v2801
        %v2966 = vunpack.c.2.s8 %v2801
        %v2967 = vunpack.c.3.s8 %v2801
        %v2968 = vunpack.c.0.s8 %v2802
        %v2969 = vunpack.c.1.s8 %v2802
        %v2970 = vunpack.c.2.s8 %v2802
        %v2971 = vunpack.c.3.s8 %v2802
        %v2972 = vunpack.c.0.s8 %v2803
        %v2973 = vunpack.c.1.s8 %v2803
        %v2974 = vunpack.c.2.s8 %v2803
        %v2975 = vunpack.c.3.s8 %v2803
        %v2976 = vunpack.c.0.s8 %v2804
        %v2977 = vunpack.c.1.s8 %v2804
        %v2978 = vunpack.c.2.s8 %v2804
        %v2979 = vunpack.c.3.s8 %v2804
        %v2980 = vunpack.c.0.s8 %v2805
        %v2981 = vunpack.c.1.s8 %v2805
        %v2982 = vunpack.c.2.s8 %v2805
        %v2983 = vunpack.c.3.s8 %v2805
        %v2984 = vunpack.c.0.s8 %v2806
        %v2985 = vunpack.c.1.s8 %v2806
        %v2986 = vunpack.c.2.s8 %v2806
        %v2987 = vunpack.c.3.s8 %v2806
        %v2988 = vunpack.c.0.s8 %v2807
        %v2989 = vunpack.c.1.s8 %v2807
        %v2990 = vunpack.c.2.s8 %v2807
        %v2991 = vunpack.c.3.s8 %v2807
        %v2992 = vunpack.c.0.s8 %v2808
        %v2993 = vunpack.c.1.s8 %v2808
        %v2994 = vunpack.c.2.s8 %v2808
        %v2995 = vunpack.c.3.s8 %v2808
        %v2996 = vunpack.c.0.s8 %v2809
        %v2997 = vunpack.c.1.s8 %v2809
        %v2998 = vunpack.c.2.s8 %v2809
        %v2999 = vunpack.c.3.s8 %v2809
        %v3000 = vunpack.c.0.s8 %v2810
        %v3001 = vunpack.c.1.s8 %v2810
        %v3002 = vunpack.c.2.s8 %v2810
        %v3003 = vunpack.c.3.s8 %v2810
        %v3004 = vunpack.c.0.s8 %v2811
        %v3005 = vunpack.c.1.s8 %v2811
        %v3006 = vunpack.c.2.s8 %v2811
        %v3007 = vunpack.c.3.s8 %v2811
        %v3008 = vunpack.c.0.s8 %v2812
        %v3009 = vunpack.c.1.s8 %v2812
        %v3010 = vunpack.c.2.s8 %v2812
        %v3011 = vunpack.c.3.s8 %v2812
        %v3012 = vunpack.c.0.s8 %v2813
        %v3013 = vunpack.c.1.s8 %v2813
        %v3014 = vunpack.c.2.s8 %v2813
        %v3015 = vunpack.c.3.s8 %v2813
        %v3016 = vunpack.c.0.s8 %v2814
        %v3017 = vunpack.c.1.s8 %v2814
        %v3018 = vunpack.c.2.s8 %v2814
        %v3019 = vunpack.c.3.s8 %v2814
        %v3020 = vunpack.c.0.s8 %v2815
        %v3021 = vunpack.c.1.s8 %v2815
        %v3022 = vunpack.c.2.s8 %v2815
        %v3023 = vunpack.c.3.s8 %v2815
        %v3024 = vunpack.c.0.s8 %v2816
        %v3025 = vunpack.c.1.s8 %v2816
        %v3026 = vunpack.c.2.s8 %v2816
        %v3027 = vunpack.c.3.s8 %v2816
        %v3028 = vunpack.c.0.s8 %v2817
        %v3029 = vunpack.c.1.s8 %v2817
        %v3030 = vunpack.c.2.s8 %v2817
        %v3031 = vunpack.c.3.s8 %v2817
        %v3032 = vunpack.c.0.s8 %v2818
        %v3033 = vunpack.c.1.s8 %v2818
        %v3034 = vunpack.c.2.s8 %v2818
        %v3035 = vunpack.c.3.s8 %v2818
        %v3036 = vunpack.c.0.s8 %v2819
        %v3037 = vunpack.c.1.s8 %v2819
        %v3038 = vunpack.c.2.s8 %v2819
        %v3039 = vunpack.c.3.s8 %v2819
        %v3040 = vunpack.c.0.s8 %v2820
        %v3041 = vunpack.c.1.s8 %v2820
        %v3042 = vunpack.c.2.s8 %v2820
        %v3043 = vunpack.c.3.s8 %v2820
        %v3044 = vunpack.c.0.s8 %v2821
        %v3045 = vunpack.c.1.s8 %v2821
        %v3046 = vunpack.c.2.s8 %v2821
        %v3047 = vunpack.c.3.s8 %v2821
        %v3048 = vunpack.c.0.s8 %v2822
        %v3049 = vunpack.c.1.s8 %v2822
        %v3050 = vunpack.c.2.s8 %v2822
        %v3051 = vunpack.c.3.s8 %v2822
        %v3052 = vunpack.c.0.s8 %v2823
        %v3053 = vunpack.c.1.s8 %v2823
        %v3054 = vunpack.c.2.s8 %v2823
        %v3055 = vunpack.c.3.s8 %v2823
        %v3056 = vunpack.c.0.s8 %v2824
        %v3057 = vunpack.c.1.s8 %v2824
        %v3058 = vunpack.c.2.s8 %v2824
        %v3059 = vunpack.c.3.s8 %v2824
        %v3060 = vunpack.c.0.s8 %v2825
        %v3061 = vunpack.c.1.s8 %v2825
        %v3062 = vunpack.c.2.s8 %v2825
        %v3063 = vunpack.c.3.s8 %v2825
        %v3064 = vunpack.c.0.s8 %v2826
        %v3065 = vunpack.c.1.s8 %v2826
        %v3066 = vunpack.c.2.s8 %v2826
        %v3067 = vunpack.c.3.s8 %v2826
        %v3068 = vunpack.c.0.s8 %v2827
        %v3069 = vunpack.c.1.s8 %v2827
        %v3070 = vunpack.c.2.s8 %v2827
        %v3071 = vunpack.c.3.s8 %v2827
        %v3072 = vunpack.c.0.s8 %v2828
        %v3073 = vunpack.c.1.s8 %v2828
        %v3074 = vunpack.c.2.s8 %v2828
        %v3075 = vunpack.c.3.s8 %v2828
        %v3076 = vunpack.c.0.s8 %v2829
        %v3077 = vunpack.c.1.s8 %v2829
        %v3078 = vunpack.c.2.s8 %v2829
        %v3079 = vunpack.c.3.s8 %v2829
        %v3080 = vunpack.c.0.s8 %v2830
        %v3081 = vunpack.c.1.s8 %v2830
        %v3082 = vunpack.c.2.s8 %v2830
        %v3083 = vunpack.c.3.s8 %v2830
        %v3084 = vunpack.c.0.s8 %v2831
        %v3085 = vunpack.c.1.s8 %v2831
        %v3086 = vunpack.c.2.s8 %v2831
        %v3087 = vunpack.c.3.s8 %v2831
        %v3088 = vcvt.s32.f32 %v2832
        %v3089 = vcvt.s32.f32 %v2833
        %v3090 = vcvt.s32.f32 %v2834
        %v3091 = vcvt.s32.f32 %v2835
        %v3092 = vcvt.s32.f32 %v2836
        %v3093 = vcvt.s32.f32 %v2837
        %v3094 = vcvt.s32.f32 %v2838
        %v3095 = vcvt.s32.f32 %v2839
        %v3096 = vcvt.s32.f32 %v2840
        %v3097 = vcvt.s32.f32 %v2841
        %v3098 = vcvt.s32.f32 %v2842
        %v3099 = vcvt.s32.f32 %v2843
        %v3100 = vcvt.s32.f32 %v2844
        %v3101 = vcvt.s32.f32 %v2845
        %v3102 = vcvt.s32.f32 %v2846
        %v3103 = vcvt.s32.f32 %v2847
        %v3104 = vcvt.s32.f32 %v2848
        %v3105 = vcvt.s32.f32 %v2849
        %v3106 = vcvt.s32.f32 %v2850
        %v3107 = vcvt.s32.f32 %v2851
        %v3108 = vcvt.s32.f32 %v2852
        %v3109 = vcvt.s32.f32 %v2853
        %v3110 = vcvt.s32.f32 %v2854
        %v3111 = vcvt.s32.f32 %v2855
        %v3112 = vcvt.s32.f32 %v2856
        %v3113 = vcvt.s32.f32 %v2857
        %v3114 = vcvt.s32.f32 %v2858
        %v3115 = vcvt.s32.f32 %v2859
        %v3116 = vcvt.s32.f32 %v2860
        %v3117 = vcvt.s32.f32 %v2861
        %v3118 = vcvt.s32.f32 %v2862
        %v3119 = vcvt.s32.f32 %v2863
        %v3120 = vcvt.s32.f32 %v2864
        %v3121 = vcvt.s32.f32 %v2865
        %v3122 = vcvt.s32.f32 %v2866
        %v3123 = vcvt.s32.f32 %v2867
        %v3124 = vcvt.s32.f32 %v2868
        %v3125 = vcvt.s32.f32 %v2869
        %v3126 = vcvt.s32.f32 %v2870
        %v3127 = vcvt.s32.f32 %v2871
        %v3128 = vcvt.s32.f32 %v2872
        %v3129 = vcvt.s32.f32 %v2873
        %v3130 = vcvt.s32.f32 %v2874
        %v3131 = vcvt.s32.f32 %v2875
        %v3132 = vcvt.s32.f32 %v2876
        %v3133 = vcvt.s32.f32 %v2877
        %v3134 = vcvt.s32.f32 %v2878
        %v3135 = vcvt.s32.f32 %v2879
        %v3136 = vcvt.s32.f32 %v2880
        %v3137 = vcvt.s32.f32 %v2881
        %v3138 = vcvt.s32.f32 %v2882
        %v3139 = vcvt.s32.f32 %v2883
        %v3140 = vcvt.s32.f32 %v2884
        %v3141 = vcvt.s32.f32 %v2885
        %v3142 = vcvt.s32.f32 %v2886
        %v3143 = vcvt.s32.f32 %v2887
        %v3144 = vcvt.s32.f32 %v2888
        %v3145 = vcvt.s32.f32 %v2889
        %v3146 = vcvt.s32.f32 %v2890
        %v3147 = vcvt.s32.f32 %v2891
        %v3148 = vcvt.s32.f32 %v2892
        %v3149 = vcvt.s32.f32 %v2893
        %v3150 = vcvt.s32.f32 %v2894
        %v3151 = vcvt.s32.f32 %v2895
        %v3152 = vcvt.s32.f32 %v2896
        %v3153 = vcvt.s32.f32 %v2897
        %v3154 = vcvt.s32.f32 %v2898
        %v3155 = vcvt.s32.f32 %v2899
        %v3156 = vcvt.s32.f32 %v2900
        %v3157 = vcvt.s32.f32 %v2901
        %v3158 = vcvt.s32.f32 %v2902
        %v3159 = vcvt.s32.f32 %v2903
        %v3160 = vcvt.s32.f32 %v2904
        %v3161 = vcvt.s32.f32 %v2905
        %v3162 = vcvt.s32.f32 %v2906
        %v3163 = vcvt.s32.f32 %v2907
        %v3164 = vcvt.s32.f32 %v2908
        %v3165 = vcvt.s32.f32 %v2909
        %v3166 = vcvt.s32.f32 %v2910
        %v3167 = vcvt.s32.f32 %v2911
        %v3168 = vcvt.s32.f32 %v2912
        %v3169 = vcvt.s32.f32 %v2913
        %v3170 = vcvt.s32.f32 %v2914
        %v3171 = vcvt.s32.f32 %v2915
        %v3172 = vcvt.s32.f32 %v2916
        %v3173 = vcvt.s32.f32 %v2917
        %v3174 = vcvt.s32.f32 %v2918
        %v3175 = vcvt.s32.f32 %v2919
        %v3176 = vcvt.s32.f32 %v2920
        %v3177 = vcvt.s32.f32 %v2921
        %v3178 = vcvt.s32.f32 %v2922
        %v3179 = vcvt.s32.f32 %v2923
        %v3180 = vcvt.s32.f32 %v2924
        %v3181 = vcvt.s32.f32 %v2925
        %v3182 = vcvt.s32.f32 %v2926
        %v3183 = vcvt.s32.f32 %v2927
        %v3184 = vcvt.s32.f32 %v2928
        %v3185 = vcvt.s32.f32 %v2929
        %v3186 = vcvt.s32.f32 %v2930
        %v3187 = vcvt.s32.f32 %v2931
        %v3188 = vcvt.s32.f32 %v2932
        %v3189 = vcvt.s32.f32 %v2933
        %v3190 = vcvt.s32.f32 %v2934
        %v3191 = vcvt.s32.f32 %v2935
        %v3192 = vcvt.s32.f32 %v2936
        %v3193 = vcvt.s32.f32 %v2937
        %v3194 = vcvt.s32.f32 %v2938
        %v3195 = vcvt.s32.f32 %v2939
        %v3196 = vcvt.s32.f32 %v2940
        %v3197 = vcvt.s32.f32 %v2941
        %v3198 = vcvt.s32.f32 %v2942
        %v3199 = vcvt.s32.f32 %v2943
        %v3200 = vcvt.s32.f32 %v2944
        %v3201 = vcvt.s32.f32 %v2945
        %v3202 = vcvt.s32.f32 %v2946
        %v3203 = vcvt.s32.f32 %v2947
        %v3204 = vcvt.s32.f32 %v2948
        %v3205 = vcvt.s32.f32 %v2949
        %v3206 = vcvt.s32.f32 %v2950
        %v3207 = vcvt.s32.f32 %v2951
        %v3208 = vcvt.s32.f32 %v2952
        %v3209 = vcvt.s32.f32 %v2953
        %v3210 = vcvt.s32.f32 %v2954
        %v3211 = vcvt.s32.f32 %v2955
        %v3212 = vcvt.s32.f32 %v2956
        %v3213 = vcvt.s32.f32 %v2957
        %v3214 = vcvt.s32.f32 %v2958
        %v3215 = vcvt.s32.f32 %v2959
        %v3216 = vcvt.s32.f32 %v2960
        %v3217 = vcvt.s32.f32 %v2961
        %v3218 = vcvt.s32.f32 %v2962
        %v3219 = vcvt.s32.f32 %v2963
        %v3220 = vcvt.s32.f32 %v2964
        %v3221 = vcvt.s32.f32 %v2965
        %v3222 = vcvt.s32.f32 %v2966
        %v3223 = vcvt.s32.f32 %v2967
        %v3224 = vcvt.s32.f32 %v2968
        %v3225 = vcvt.s32.f32 %v2969
        %v3226 = vcvt.s32.f32 %v2970
        %v3227 = vcvt.s32.f32 %v2971
        %v3228 = vcvt.s32.f32 %v2972
        %v3229 = vcvt.s32.f32 %v2973
        %v3230 = vcvt.s32.f32 %v2974
        %v3231 = vcvt.s32.f32 %v2975
        %v3232 = vcvt.s32.f32 %v2976
        %v3233 = vcvt.s32.f32 %v2977
        %v3234 = vcvt.s32.f32 %v2978
        %v3235 = vcvt.s32.f32 %v2979
        %v3236 = vcvt.s32.f32 %v2980
        %v3237 = vcvt.s32.f32 %v2981
        %v3238 = vcvt.s32.f32 %v2982
        %v3239 = vcvt.s32.f32 %v2983
        %v3240 = vcvt.s32.f32 %v2984
        %v3241 = vcvt.s32.f32 %v2985
        %v3242 = vcvt.s32.f32 %v2986
        %v3243 = vcvt.s32.f32 %v2987
        %v3244 = vcvt.s32.f32 %v2988
        %v3245 = vcvt.s32.f32 %v2989
        %v3246 = vcvt.s32.f32 %v2990
        %v3247 = vcvt.s32.f32 %v2991
        %v3248 = vcvt.s32.f32 %v2992
        %v3249 = vcvt.s32.f32 %v2993
        %v3250 = vcvt.s32.f32 %v2994
        %v3251 = vcvt.s32.f32 %v2995
        %v3252 = vcvt.s32.f32 %v2996
        %v3253 = vcvt.s32.f32 %v2997
        %v3254 = vcvt.s32.f32 %v2998
        %v3255 = vcvt.s32.f32 %v2999
        %v3256 = vcvt.s32.f32 %v3000
        %v3257 = vcvt.s32.f32 %v3001
        %v3258 = vcvt.s32.f32 %v3002
        %v3259 = vcvt.s32.f32 %v3003
        %v3260 = vcvt.s32.f32 %v3004
        %v3261 = vcvt.s32.f32 %v3005
        %v3262 = vcvt.s32.f32 %v3006
        %v3263 = vcvt.s32.f32 %v3007
        %v3264 = vcvt.s32.f32 %v3008
        %v3265 = vcvt.s32.f32 %v3009
        %v3266 = vcvt.s32.f32 %v3010
        %v3267 = vcvt.s32.f32 %v3011
        %v3268 = vcvt.s32.f32 %v3012
        %v3269 = vcvt.s32.f32 %v3013
        %v3270 = vcvt.s32.f32 %v3014
        %v3271 = vcvt.s32.f32 %v3015
        %v3272 = vcvt.s32.f32 %v3016
        %v3273 = vcvt.s32.f32 %v3017
        %v3274 = vcvt.s32.f32 %v3018
        %v3275 = vcvt.s32.f32 %v3019
        %v3276 = vcvt.s32.f32 %v3020
        %v3277 = vcvt.s32.f32 %v3021
        %v3278 = vcvt.s32.f32 %v3022
        %v3279 = vcvt.s32.f32 %v3023
        %v3280 = vcvt.s32.f32 %v3024
        %v3281 = vcvt.s32.f32 %v3025
        %v3282 = vcvt.s32.f32 %v3026
        %v3283 = vcvt.s32.f32 %v3027
        %v3284 = vcvt.s32.f32 %v3028
        %v3285 = vcvt.s32.f32 %v3029
        %v3286 = vcvt.s32.f32 %v3030
        %v3287 = vcvt.s32.f32 %v3031
        %v3288 = vcvt.s32.f32 %v3032
        %v3289 = vcvt.s32.f32 %v3033
        %v3290 = vcvt.s32.f32 %v3034
        %v3291 = vcvt.s32.f32 %v3035
        %v3292 = vcvt.s32.f32 %v3036
        %v3293 = vcvt.s32.f32 %v3037
        %v3294 = vcvt.s32.f32 %v3038
        %v3295 = vcvt.s32.f32 %v3039
        %v3296 = vcvt.s32.f32 %v3040
        %v3297 = vcvt.s32.f32 %v3041
        %v3298 = vcvt.s32.f32 %v3042
        %v3299 = vcvt.s32.f32 %v3043
        %v3300 = vcvt.s32.f32 %v3044
        %v3301 = vcvt.s32.f32 %v3045
        %v3302 = vcvt.s32.f32 %v3046
        %v3303 = vcvt.s32.f32 %v3047
        %v3304 = vcvt.s32.f32 %v3048
        %v3305 = vcvt.s32.f32 %v3049
        %v3306 = vcvt.s32.f32 %v3050
        %v3307 = vcvt.s32.f32 %v3051
        %v3308 = vcvt.s32.f32 %v3052
        %v3309 = vcvt.s32.f32 %v3053
        %v3310 = vcvt.s32.f32 %v3054
        %v3311 = vcvt.s32.f32 %v3055
        %v3312 = vcvt.s32.f32 %v3056
        %v3313 = vcvt.s32.f32 %v3057
        %v3314 = vcvt.s32.f32 %v3058
        %v3315 = vcvt.s32.f32 %v3059
        %v3316 = vcvt.s32.f32 %v3060
        %v3317 = vcvt.s32.f32 %v3061
        %v3318 = vcvt.s32.f32 %v3062
        %v3319 = vcvt.s32.f32 %v3063
        %v3320 = vcvt.s32.f32 %v3064
        %v3321 = vcvt.s32.f32 %v3065
        %v3322 = vcvt.s32.f32 %v3066
        %v3323 = vcvt.s32.f32 %v3067
        %v3324 = vcvt.s32.f32 %v3068
        %v3325 = vcvt.s32.f32 %v3069
        %v3326 = vcvt.s32.f32 %v3070
        %v3327 = vcvt.s32.f32 %v3071
        %v3328 = vcvt.s32.f32 %v3072
        %v3329 = vcvt.s32.f32 %v3073
        %v3330 = vcvt.s32.f32 %v3074
        %v3331 = vcvt.s32.f32 %v3075
        %v3332 = vcvt.s32.f32 %v3076
        %v3333 = vcvt.s32.f32 %v3077
        %v3334 = vcvt.s32.f32 %v3078
        %v3335 = vcvt.s32.f32 %v3079
        %v3336 = vcvt.s32.f32 %v3080
        %v3337 = vcvt.s32.f32 %v3081
        %v3338 = vcvt.s32.f32 %v3082
        %v3339 = vcvt.s32.f32 %v3083
        %v3340 = vcvt.s32.f32 %v3084
        %v3341 = vcvt.s32.f32 %v3085
        %v3342 = vcvt.s32.f32 %v3086
        %v3343 = vcvt.s32.f32 %v3087
        %v3344 = vpack.c.bf16 %v3089, %v3088
        %v3345 = vpack.c.bf16 %v3091, %v3090
        %v3346 = vpack.c.bf16 %v3093, %v3092
        %v3347 = vpack.c.bf16 %v3095, %v3094
        %v3348 = vpack.c.bf16 %v3097, %v3096
        %v3349 = vpack.c.bf16 %v3099, %v3098
        %v3350 = vpack.c.bf16 %v3101, %v3100
        %v3351 = vpack.c.bf16 %v3103, %v3102
        %v3352 = vpack.c.bf16 %v3105, %v3104
        %v3353 = vpack.c.bf16 %v3107, %v3106
        %v3354 = vpack.c.bf16 %v3109, %v3108
        %v3355 = vpack.c.bf16 %v3111, %v3110
        %v3356 = vpack.c.bf16 %v3113, %v3112
        %v3357 = vpack.c.bf16 %v3115, %v3114
        %v3358 = vpack.c.bf16 %v3117, %v3116
        %v3359 = vpack.c.bf16 %v3119, %v3118
        %v3360 = vpack.c.bf16 %v3121, %v3120
        %v3361 = vpack.c.bf16 %v3123, %v3122
        %v3362 = vpack.c.bf16 %v3125, %v3124
        %v3363 = vpack.c.bf16 %v3127, %v3126
        %v3364 = vpack.c.bf16 %v3129, %v3128
        %v3365 = vpack.c.bf16 %v3131, %v3130
        %v3366 = vpack.c.bf16 %v3133, %v3132
        %v3367 = vpack.c.bf16 %v3135, %v3134
        %v3368 = vpack.c.bf16 %v3137, %v3136
        %v3369 = vpack.c.bf16 %v3139, %v3138
        %v3370 = vpack.c.bf16 %v3141, %v3140
        %v3371 = vpack.c.bf16 %v3143, %v3142
        %v3372 = vpack.c.bf16 %v3145, %v3144
        %v3373 = vpack.c.bf16 %v3147, %v3146
        %v3374 = vpack.c.bf16 %v3149, %v3148
        %v3375 = vpack.c.bf16 %v3151, %v3150
        %v3376 = vpack.c.bf16 %v3153, %v3152
        %v3377 = vpack.c.bf16 %v3155, %v3154
        %v3378 = vpack.c.bf16 %v3157, %v3156
        %v3379 = vpack.c.bf16 %v3159, %v3158
        %v3380 = vpack.c.bf16 %v3161, %v3160
        %v3381 = vpack.c.bf16 %v3163, %v3162
        %v3382 = vpack.c.bf16 %v3165, %v3164
        %v3383 = vpack.c.bf16 %v3167, %v3166
        %v3384 = vpack.c.bf16 %v3169, %v3168
        %v3385 = vpack.c.bf16 %v3171, %v3170
        %v3386 = vpack.c.bf16 %v3173, %v3172
        %v3387 = vpack.c.bf16 %v3175, %v3174
        %v3388 = vpack.c.bf16 %v3177, %v3176
        %v3389 = vpack.c.bf16 %v3179, %v3178
        %v3390 = vpack.c.bf16 %v3181, %v3180
        %v3391 = vpack.c.bf16 %v3183, %v3182
        %v3392 = vpack.c.bf16 %v3185, %v3184
        %v3393 = vpack.c.bf16 %v3187, %v3186
        %v3394 = vpack.c.bf16 %v3189, %v3188
        %v3395 = vpack.c.bf16 %v3191, %v3190
        %v3396 = vpack.c.bf16 %v3193, %v3192
        %v3397 = vpack.c.bf16 %v3195, %v3194
        %v3398 = vpack.c.bf16 %v3197, %v3196
        %v3399 = vpack.c.bf16 %v3199, %v3198
        %v3400 = vpack.c.bf16 %v3201, %v3200
        %v3401 = vpack.c.bf16 %v3203, %v3202
        %v3402 = vpack.c.bf16 %v3205, %v3204
        %v3403 = vpack.c.bf16 %v3207, %v3206
        %v3404 = vpack.c.bf16 %v3209, %v3208
        %v3405 = vpack.c.bf16 %v3211, %v3210
        %v3406 = vpack.c.bf16 %v3213, %v3212
        %v3407 = vpack.c.bf16 %v3215, %v3214
        %v3408 = vpack.c.bf16 %v3217, %v3216
        %v3409 = vpack.c.bf16 %v3219, %v3218
        %v3410 = vpack.c.bf16 %v3221, %v3220
        %v3411 = vpack.c.bf16 %v3223, %v3222
        %v3412 = vpack.c.bf16 %v3225, %v3224
        %v3413 = vpack.c.bf16 %v3227, %v3226
        %v3414 = vpack.c.bf16 %v3229, %v3228
        %v3415 = vpack.c.bf16 %v3231, %v3230
        %v3416 = vpack.c.bf16 %v3233, %v3232
        %v3417 = vpack.c.bf16 %v3235, %v3234
        %v3418 = vpack.c.bf16 %v3237, %v3236
        %v3419 = vpack.c.bf16 %v3239, %v3238
        %v3420 = vpack.c.bf16 %v3241, %v3240
        %v3421 = vpack.c.bf16 %v3243, %v3242
        %v3422 = vpack.c.bf16 %v3245, %v3244
        %v3423 = vpack.c.bf16 %v3247, %v3246
        %v3424 = vpack.c.bf16 %v3249, %v3248
        %v3425 = vpack.c.bf16 %v3251, %v3250
        %v3426 = vpack.c.bf16 %v3253, %v3252
        %v3427 = vpack.c.bf16 %v3255, %v3254
        %v3428 = vpack.c.bf16 %v3257, %v3256
        %v3429 = vpack.c.bf16 %v3259, %v3258
        %v3430 = vpack.c.bf16 %v3261, %v3260
        %v3431 = vpack.c.bf16 %v3263, %v3262
        %v3432 = vpack.c.bf16 %v3265, %v3264
        %v3433 = vpack.c.bf16 %v3267, %v3266
        %v3434 = vpack.c.bf16 %v3269, %v3268
        %v3435 = vpack.c.bf16 %v3271, %v3270
        %v3436 = vpack.c.bf16 %v3273, %v3272
        %v3437 = vpack.c.bf16 %v3275, %v3274
        %v3438 = vpack.c.bf16 %v3277, %v3276
        %v3439 = vpack.c.bf16 %v3279, %v3278
        %v3440 = vpack.c.bf16 %v3281, %v3280
        %v3441 = vpack.c.bf16 %v3283, %v3282
        %v3442 = vpack.c.bf16 %v3285, %v3284
        %v3443 = vpack.c.bf16 %v3287, %v3286
        %v3444 = vpack.c.bf16 %v3289, %v3288
        %v3445 = vpack.c.bf16 %v3291, %v3290
        %v3446 = vpack.c.bf16 %v3293, %v3292
        %v3447 = vpack.c.bf16 %v3295, %v3294
        %v3448 = vpack.c.bf16 %v3297, %v3296
        %v3449 = vpack.c.bf16 %v3299, %v3298
        %v3450 = vpack.c.bf16 %v3301, %v3300
        %v3451 = vpack.c.bf16 %v3303, %v3302
        %v3452 = vpack.c.bf16 %v3305, %v3304
        %v3453 = vpack.c.bf16 %v3307, %v3306
        %v3454 = vpack.c.bf16 %v3309, %v3308
        %v3455 = vpack.c.bf16 %v3311, %v3310
        %v3456 = vpack.c.bf16 %v3313, %v3312
        %v3457 = vpack.c.bf16 %v3315, %v3314
        %v3458 = vpack.c.bf16 %v3317, %v3316
        %v3459 = vpack.c.bf16 %v3319, %v3318
        %v3460 = vpack.c.bf16 %v3321, %v3320
        %v3461 = vpack.c.bf16 %v3323, %v3322
        %v3462 = vpack.c.bf16 %v3325, %v3324
        %v3463 = vpack.c.bf16 %v3327, %v3326
        %v3464 = vpack.c.bf16 %v3329, %v3328
        %v3465 = vpack.c.bf16 %v3331, %v3330
        %v3466 = vpack.c.bf16 %v3333, %v3332
        %v3467 = vpack.c.bf16 %v3335, %v3334
        %v3468 = vpack.c.bf16 %v3337, %v3336
        %v3469 = vpack.c.bf16 %v3339, %v3338
        %v3470 = vpack.c.bf16 %v3341, %v3340
        %v3471 = vpack.c.bf16 %v3343, %v3342
        %v3472 = vpack.c.bf16 %v2752, %v2736
        %v3473 = vpack.c.bf16 %v2753, %v2737
        %v3474 = vpack.c.bf16 %v2754, %v2738
        %v3475 = vpack.c.bf16 %v2755, %v2739
        %v3476 = vpack.c.bf16 %v2756, %v2740
        %v3477 = vpack.c.bf16 %v2757, %v2741
        %v3478 = vpack.c.bf16 %v2758, %v2742
        %v3479 = vpack.c.bf16 %v2759, %v2743
        %v3480 = vpack.c.bf16 %v2760, %v2744
        %v3481 = vpack.c.bf16 %v2761, %v2745
        %v3482 = vpack.c.bf16 %v2762, %v2746
        %v3483 = vpack.c.bf16 %v2763, %v2747
        %v3484 = vpack.c.bf16 %v2764, %v2748
        %v3485 = vpack.c.bf16 %v2765, %v2749
        %v3486 = vpack.c.bf16 %v2766, %v2750
        %v3487 = vpack.c.bf16 %v2767, %v2751
        %3488 = vmatpush.bf16.msra.mxu0 %v3351
        %3489 = vmatpush.bf16.msra.mxu0 %v3350
        %3490 = vmatpush.bf16.msra.mxu0 %v3349
        %3491 = vmatpush.bf16.msra.mxu0 %v3348
        %3492 = vmatpush.bf16.msra.mxu0 %v3347
        %3493 = vmatpush.bf16.msra.mxu0 %v3346
        %3494 = vmatpush.bf16.msra.mxu0 %v3345
        %3495 = vmatpush.bf16.msra.mxu0 %v3344
        %3496 = vmatmul.bf16.gmra.mxu0 %v3472
        %v3497 = vpop.f32.mrf.mxu0
        %v3498 = vadd.f32 0.0, %v3497
        %v3499 = vpop.f32.mrf.mxu0
        %v3500 = vadd.f32 0.0, %v3499
        %3501 = vdwg.mxu0
        %3502 = vmatpush.bf16.msra.mxu0 %v3359
        %3503 = vmatpush.bf16.msra.mxu0 %v3358
        %3504 = vmatpush.bf16.msra.mxu0 %v3357
        %3505 = vmatpush.bf16.msra.mxu0 %v3356
        %3506 = vmatpush.bf16.msra.mxu0 %v3355
        %3507 = vmatpush.bf16.msra.mxu0 %v3354
        %3508 = vmatpush.bf16.msra.mxu0 %v3353
        %3509 = vmatpush.bf16.msra.mxu0 %v3352
        %3510 = vmatmul.bf16.gmra.mxu0 %v3473
        %v3511 = vpop.f32.mrf.mxu0
        %v3512 = vadd.f32 %v3498, %v3511
        %v3513 = vpop.f32.mrf.mxu0
        %v3514 = vadd.f32 %v3500, %v3513
        %3515 = vdwg.mxu0
        %3516 = vmatpush.bf16.msra.mxu0 %v3367
        %3517 = vmatpush.bf16.msra.mxu0 %v3366
        %3518 = vmatpush.bf16.msra.mxu0 %v3365
        %3519 = vmatpush.bf16.msra.mxu0 %v3364
        %3520 = vmatpush.bf16.msra.mxu0 %v3363
        %3521 = vmatpush.bf16.msra.mxu0 %v3362
        %3522 = vmatpush.bf16.msra.mxu0 %v3361
        %3523 = vmatpush.bf16.msra.mxu0 %v3360
        %3524 = vmatmul.bf16.gmra.mxu0 %v3474
        %v3525 = vpop.f32.mrf.mxu0
        %v3526 = vadd.f32 %v3512, %v3525
        %v3527 = vpop.f32.mrf.mxu0
        %v3528 = vadd.f32 %v3514, %v3527
        %3529 = vdwg.mxu0
        %3530 = vmatpush.bf16.msra.mxu0 %v3375
        %3531 = vmatpush.bf16.msra.mxu0 %v3374
        %3532 = vmatpush.bf16.msra.mxu0 %v3373
        %3533 = vmatpush.bf16.msra.mxu0 %v3372
        %3534 = vmatpush.bf16.msra.mxu0 %v3371
        %3535 = vmatpush.bf16.msra.mxu0 %v3370
        %3536 = vmatpush.bf16.msra.mxu0 %v3369
        %3537 = vmatpush.bf16.msra.mxu0 %v3368
        %3538 = vmatmul.bf16.gmra.mxu0 %v3475
        %v3539 = vpop.f32.mrf.mxu0
        %v3540 = vadd.f32 %v3526, %v3539
        %v3541 = vpop.f32.mrf.mxu0
        %v3542 = vadd.f32 %v3528, %v3541
        %3543 = vdwg.mxu0
        %3544 = vmatpush.bf16.msra.mxu0 %v3383
        %3545 = vmatpush.bf16.msra.mxu0 %v3382
        %3546 = vmatpush.bf16.msra.mxu0 %v3381
        %3547 = vmatpush.bf16.msra.mxu0 %v3380
        %3548 = vmatpush.bf16.msra.mxu0 %v3379
        %3549 = vmatpush.bf16.msra.mxu0 %v3378
        %3550 = vmatpush.bf16.msra.mxu0 %v3377
        %3551 = vmatpush.bf16.msra.mxu0 %v3376
        %3552 = vmatmul.bf16.gmra.mxu0 %v3476
        %v3553 = vpop.f32.mrf.mxu0
        %v3554 = vadd.f32 %v3540, %v3553
        %v3555 = vpop.f32.mrf.mxu0
        %v3556 = vadd.f32 %v3542, %v3555
        %3557 = vdwg.mxu0
        %3558 = vmatpush.bf16.msra.mxu0 %v3391
        %3559 = vmatpush.bf16.msra.mxu0 %v3390
        %3560 = vmatpush.bf16.msra.mxu0 %v3389
        %3561 = vmatpush.bf16.msra.mxu0 %v3388
        %3562 = vmatpush.bf16.msra.mxu0 %v3387
        %3563 = vmatpush.bf16.msra.mxu0 %v3386
        %3564 = vmatpush.bf16.msra.mxu0 %v3385
        %3565 = vmatpush.bf16.msra.mxu0 %v3384
        %3566 = vmatmul.bf16.gmra.mxu0 %v3477
        %v3567 = vpop.f32.mrf.mxu0
        %v3568 = vadd.f32 %v3554, %v3567
        %v3569 = vpop.f32.mrf.mxu0
        %v3570 = vadd.f32 %v3556, %v3569
        %3571 = vdwg.mxu0
        %3572 = vmatpush.bf16.msra.mxu0 %v3399
        %3573 = vmatpush.bf16.msra.mxu0 %v3398
        %3574 = vmatpush.bf16.msra.mxu0 %v3397
        %3575 = vmatpush.bf16.msra.mxu0 %v3396
        %3576 = vmatpush.bf16.msra.mxu0 %v3395
        %3577 = vmatpush.bf16.msra.mxu0 %v3394
        %3578 = vmatpush.bf16.msra.mxu0 %v3393
        %3579 = vmatpush.bf16.msra.mxu0 %v3392
        %3580 = vmatmul.bf16.gmra.mxu0 %v3478
        %v3581 = vpop.f32.mrf.mxu0
        %v3582 = vadd.f32 %v3568, %v3581
        %v3583 = vpop.f32.mrf.mxu0
        %v3584 = vadd.f32 %v3570, %v3583
        %3585 = vdwg.mxu0
        %3586 = vmatpush.bf16.msra.mxu0 %v3407
        %3587 = vmatpush.bf16.msra.mxu0 %v3406
        %3588 = vmatpush.bf16.msra.mxu0 %v3405
        %3589 = vmatpush.bf16.msra.mxu0 %v3404
        %3590 = vmatpush.bf16.msra.mxu0 %v3403
        %3591 = vmatpush.bf16.msra.mxu0 %v3402
        %3592 = vmatpush.bf16.msra.mxu0 %v3401
        %3593 = vmatpush.bf16.msra.mxu0 %v3400
        %3594 = vmatmul.bf16.gmra.mxu0 %v3479
        %v3595 = vpop.f32.mrf.mxu0
        %v3596 = vadd.f32 %v3582, %v3595
        %v3597 = vpop.f32.mrf.mxu0
        %v3598 = vadd.f32 %v3584, %v3597
        %3599 = vdwg.mxu0
        %3600 = vmatpush.bf16.msra.mxu0 %v3415
        %3601 = vmatpush.bf16.msra.mxu0 %v3414
        %3602 = vmatpush.bf16.msra.mxu0 %v3413
        %3603 = vmatpush.bf16.msra.mxu0 %v3412
        %3604 = vmatpush.bf16.msra.mxu0 %v3411
        %3605 = vmatpush.bf16.msra.mxu0 %v3410
        %3606 = vmatpush.bf16.msra.mxu0 %v3409
        %3607 = vmatpush.bf16.msra.mxu0 %v3408
        %3608 = vmatmul.bf16.gmra.mxu0 %v3480
        %v3609 = vpop.f32.mrf.mxu0
        %v3610 = vadd.f32 %v3596, %v3609
        %v3611 = vpop.f32.mrf.mxu0
        %v3612 = vadd.f32 %v3598, %v3611
        %3613 = vdwg.mxu0
        %3614 = vmatpush.bf16.msra.mxu0 %v3423
        %3615 = vmatpush.bf16.msra.mxu0 %v3422
        %3616 = vmatpush.bf16.msra.mxu0 %v3421
        %3617 = vmatpush.bf16.msra.mxu0 %v3420
        %3618 = vmatpush.bf16.msra.mxu0 %v3419
        %3619 = vmatpush.bf16.msra.mxu0 %v3418
        %3620 = vmatpush.bf16.msra.mxu0 %v3417
        %3621 = vmatpush.bf16.msra.mxu0 %v3416
        %3622 = vmatmul.bf16.gmra.mxu0 %v3481
        %v3623 = vpop.f32.mrf.mxu0
        %v3624 = vadd.f32 %v3610, %v3623
        %v3625 = vpop.f32.mrf.mxu0
        %v3626 = vadd.f32 %v3612, %v3625
        %3627 = vdwg.mxu0
        %3628 = vmatpush.bf16.msra.mxu0 %v3431
        %3629 = vmatpush.bf16.msra.mxu0 %v3430
        %3630 = vmatpush.bf16.msra.mxu0 %v3429
        %3631 = vmatpush.bf16.msra.mxu0 %v3428
        %3632 = vmatpush.bf16.msra.mxu0 %v3427
        %3633 = vmatpush.bf16.msra.mxu0 %v3426
        %3634 = vmatpush.bf16.msra.mxu0 %v3425
        %3635 = vmatpush.bf16.msra.mxu0 %v3424
        %3636 = vmatmul.bf16.gmra.mxu0 %v3482
        %v3637 = vpop.f32.mrf.mxu0
        %v3638 = vadd.f32 %v3624, %v3637
        %v3639 = vpop.f32.mrf.mxu0
        %v3640 = vadd.f32 %v3626, %v3639
        %3641 = vdwg.mxu0
        %3642 = vmatpush.bf16.msra.mxu0 %v3439
        %3643 = vmatpush.bf16.msra.mxu0 %v3438
        %3644 = vmatpush.bf16.msra.mxu0 %v3437
        %3645 = vmatpush.bf16.msra.mxu0 %v3436
        %3646 = vmatpush.bf16.msra.mxu0 %v3435
        %3647 = vmatpush.bf16.msra.mxu0 %v3434
        %3648 = vmatpush.bf16.msra.mxu0 %v3433
        %3649 = vmatpush.bf16.msra.mxu0 %v3432
        %3650 = vmatmul.bf16.gmra.mxu0 %v3483
        %v3651 = vpop.f32.mrf.mxu0
        %v3652 = vadd.f32 %v3638, %v3651
        %v3653 = vpop.f32.mrf.mxu0
        %v3654 = vadd.f32 %v3640, %v3653
        %3655 = vdwg.mxu0
        %3656 = vmatpush.bf16.msra.mxu0 %v3447
        %3657 = vmatpush.bf16.msra.mxu0 %v3446
        %3658 = vmatpush.bf16.msra.mxu0 %v3445
        %3659 = vmatpush.bf16.msra.mxu0 %v3444
        %3660 = vmatpush.bf16.msra.mxu0 %v3443
        %3661 = vmatpush.bf16.msra.mxu0 %v3442
        %3662 = vmatpush.bf16.msra.mxu0 %v3441
        %3663 = vmatpush.bf16.msra.mxu0 %v3440
        %3664 = vmatmul.bf16.gmra.mxu0 %v3484
        %v3665 = vpop.f32.mrf.mxu0
        %v3666 = vadd.f32 %v3652, %v3665
        %v3667 = vpop.f32.mrf.mxu0
        %v3668 = vadd.f32 %v3654, %v3667
        %3669 = vdwg.mxu0
        %3670 = vmatpush.bf16.msra.mxu0 %v3455
        %3671 = vmatpush.bf16.msra.mxu0 %v3454
        %3672 = vmatpush.bf16.msra.mxu0 %v3453
        %3673 = vmatpush.bf16.msra.mxu0 %v3452
        %3674 = vmatpush.bf16.msra.mxu0 %v3451
        %3675 = vmatpush.bf16.msra.mxu0 %v3450
        %3676 = vmatpush.bf16.msra.mxu0 %v3449
        %3677 = vmatpush.bf16.msra.mxu0 %v3448
        %3678 = vmatmul.bf16.gmra.mxu0 %v3485
        %v3679 = vpop.f32.mrf.mxu0
        %v3680 = vadd.f32 %v3666, %v3679
        %v3681 = vpop.f32.mrf.mxu0
        %v3682 = vadd.f32 %v3668, %v3681
        %3683 = vdwg.mxu0
        %3684 = vmatpush.bf16.msra.mxu0 %v3463
        %3685 = vmatpush.bf16.msra.mxu0 %v3462
        %3686 = vmatpush.bf16.msra.mxu0 %v3461
        %3687 = vmatpush.bf16.msra.mxu0 %v3460
        %3688 = vmatpush.bf16.msra.mxu0 %v3459
        %3689 = vmatpush.bf16.msra.mxu0 %v3458
        %3690 = vmatpush.bf16.msra.mxu0 %v3457
        %3691 = vmatpush.bf16.msra.mxu0 %v3456
        %3692 = vmatmul.bf16.gmra.mxu0 %v3486
        %v3693 = vpop.f32.mrf.mxu0
        %v3694 = vadd.f32 %v3680, %v3693
        %v3695 = vpop.f32.mrf.mxu0
        %v3696 = vadd.f32 %v3682, %v3695
        %3697 = vdwg.mxu0
        %3698 = vmatpush.bf16.msra.mxu0 %v3471
        %3699 = vmatpush.bf16.msra.mxu0 %v3470
        %3700 = vmatpush.bf16.msra.mxu0 %v3469
        %3701 = vmatpush.bf16.msra.mxu0 %v3468
        %3702 = vmatpush.bf16.msra.mxu0 %v3467
        %3703 = vmatpush.bf16.msra.mxu0 %v3466
        %3704 = vmatpush.bf16.msra.mxu0 %v3465
        %3705 = vmatpush.bf16.msra.mxu0 %v3464
        %3706 = vmatmul.bf16.gmra.mxu0 %v3487
        %v3707 = vpop.f32.mrf.mxu0
        %v3708 = vadd.f32 %v3694, %v3707
        %v3709 = vpop.f32.mrf.mxu0
        %v3710 = vadd.f32 %v3696, %v3709
        %3711 = vdwg.mxu0
        %v3712 = vld [vmem:[%s1029] sm:$0x1]
        %v3714 = vperm.slane %v3712, 0
        %v3716 = vmul.f32 %v3708, %v3714
        %v3717 = vmul.f32 %v3710, %v3714
        %v3718 = vld [vmem:[%s1032] sm:$0x1]
        %v3720 = vperm.slane %v3718, 0
        %v3722 = vadd.f32 %v3716, %v3720
        %v3723 = vadd.f32 %v3717, %v3720
        %v3724 = vadd.f32 %v1669, %v3722
        %v3725 = vadd.f32 %v1670, %v3723
        %3726 = vadd.xlane.f32.xlu0 %v3724
        %v3727 = vpop.xlane.xlu0 %3726
        %3728 = vadd.xlane.f32.xlu0 %v3725
        %v3729 = vpop.xlane.xlu0 %3728
        %v3730 = vmul.f32 %v3727, %v1624
        %v3731 = vmul.f32 %v3729, %v1624
        %v3732 = vsub.f32 %v3724, %v3730
        %v3733 = vsub.f32 %v3725, %v3731
        %v3734 = vmul.f32 %v3732, %v3732
        %v3735 = vmul.f32 %v3733, %v3733
        %3736 = vadd.xlane.f32.xlu0 %v3734
        %v3737 = vpop.xlane.xlu0 %3736
        %3738 = vadd.xlane.f32.xlu0 %v3735
        %v3739 = vpop.xlane.xlu0 %3738
        %v3740 = vmul.f32 %v3737, %v1624
        %v3741 = vmul.f32 %v3739, %v1624
        %v3742 = vadd.f32 %v3740, 1e-05
        %v3743 = vadd.f32 %v3741, 1e-05
        %v3744 = vrsqrt.pop %v3742
        %v3745 = vmul.f32 %v3744, %v3742
        %v3746 = vmul.f32 %v3745, %v3744
        %v3747 = vmul.f32 0.5, %v3746
        %v3748 = vsub.f32 1.5, %v3747
        %v3749 = vmul.f32 %v3744, %v3748
        %vm3750 = vweird.f32 %v3742
        %vm3751 = vweird.f32 %v3744
        %vm3752 = vmor %vm3750, %vm3751
        %v3753 = vsel %vm3752, %v3744, %v3749
        %v3754 = vrsqrt.pop %v3743
        %v3755 = vmul.f32 %v3754, %v3743
        %v3756 = vmul.f32 %v3755, %v3754
        %v3757 = vmul.f32 0.5, %v3756
        %v3758 = vsub.f32 1.5, %v3757
        %v3759 = vmul.f32 %v3754, %v3758
        %vm3760 = vweird.f32 %v3743
        %vm3761 = vweird.f32 %v3754
        %vm3762 = vmor %vm3760, %vm3761
        %v3763 = vsel %vm3762, %v3754, %v3759
        %v3764 = vmul.f32 %v3732, %v3753
        %v3765 = vmul.f32 %v3733, %v3763
        %v3767 = vperm.slane %v1143, 0
        %v3769 = vmul.f32 %v3764, %v3767
        %v3770 = vmul.f32 %v3765, %v3767
        %v3772 = vperm.slane %v1144, 0
        %v3774 = vadd.f32 %v3769, %v3772
        %v3775 = vadd.f32 %v3770, %v3772
        %3776 = vst [vmem:[#allocation2] sm:$0xff] %v3774
        %3777 = vst [vmem:[#allocation2 + $0x8] sm:$0xff] %v3775
        %p3778 = scmp.eq.s32.totalorder %s45, 1
        // Predicated region
        $region149: #{tpu_custom_call.1} parent=107 // pred_check
          %p3779 = pneg %p3778
        $region150: #{tpu_custom_call.1} parent=107 // pred_check_branch
          %3781 = sbr.rel (%p3779) target = $region152
        $region151: #{tpu_custom_call.1} parent=107 // pred_region
          %v3782 = vld [vmem:[#allocation6] sm:$0x1]
          %v3783 = vpack.c.bf16 %v3775, %v3774
          %v3785 = vsel %vm1391, %v3782, 0
          %3787 = vmatpush.bf16.msra.mxu0 0
          %3788 = vmatpush.bf16.msra.mxu0 0
          %3789 = vmatpush.bf16.msra.mxu0 0
          %3790 = vmatpush.bf16.msra.mxu0 0
          %3791 = vmatpush.bf16.msra.mxu0 0
          %3792 = vmatpush.bf16.msra.mxu0 0
          %3793 = vmatpush.bf16.msra.mxu0 0
          %3794 = vmatpush.bf16.msra.mxu0 %v3783
          %3795 = vmatmul.bf16.gmra.mxu0 %v3785
          %v3796 = vpop.f32.mrf.mxu0
          %v3797 = vadd.f32 0.0, %v3796
          %v3798 = vpop.f32.mrf.mxu0
          %3799 = vdwg.mxu0
          %v3800 = vpack.c.bf16 %v3797, %v3797
          %v3801 = vld [vmem:[#allocation17] sm:$0xf]
          %v3802 = vld [vmem:[#allocation17 + $0x4] sm:$0xf]
          %v3803 = vld [vmem:[#allocation17 + $0x8] sm:$0xf]
          %v3804 = vld [vmem:[#allocation17 + $0xc] sm:$0xf]
          %v3805 = vld [vmem:[#allocation17 + $0x10] sm:$0xf]
          %v3806 = vld [vmem:[#allocation17 + $0x14] sm:$0xf]
          %v3807 = vld [vmem:[#allocation17 + $0x18] sm:$0xf]
          %v3808 = vld [vmem:[#allocation17 + $0x1c] sm:$0xf]
          %v3809 = vld [vmem:[#allocation17 + $0x20] sm:$0xf]
          %v3810 = vld [vmem:[#allocation17 + $0x24] sm:$0xf]
          %v3811 = vld [vmem:[#allocation17 + $0x28] sm:$0xf]
          %v3812 = vld [vmem:[#allocation17 + $0x2c] sm:$0xf]
          %v3813 = vld [vmem:[#allocation17 + $0x30] sm:$0xf]
          %v3814 = vld [vmem:[#allocation17 + $0x34] sm:$0xf]
          %v3815 = vld [vmem:[#allocation17 + $0x38] sm:$0xf]
          %v3816 = vld [vmem:[#allocation17 + $0x3c] sm:$0xf]
          %v3817 = vld [vmem:[%s21] sm:$0x1]
          %v3819 = vperm.slane %v3817, 0
          %v3837 = vunpack.c.l.b16 %v3801
          %v3838 = vunpack.c.l.b16 %v3802
          %v3839 = vunpack.c.l.b16 %v3803
          %v3840 = vunpack.c.l.b16 %v3804
          %v3841 = vunpack.c.l.b16 %v3805
          %v3842 = vunpack.c.l.b16 %v3806
          %v3843 = vunpack.c.l.b16 %v3807
          %v3844 = vunpack.c.l.b16 %v3808
          %v3845 = vunpack.c.l.b16 %v3809
          %v3846 = vunpack.c.l.b16 %v3810
          %v3847 = vunpack.c.l.b16 %v3811
          %v3848 = vunpack.c.l.b16 %v3812
          %v3849 = vunpack.c.l.b16 %v3813
          %v3850 = vunpack.c.l.b16 %v3814
          %v3851 = vunpack.c.l.b16 %v3815
          %v3852 = vunpack.c.l.b16 %v3816
          %v3853 = vpack.c.b16 %v3838, %v3837
          %v3854 = vpack.c.b16 %v3840, %v3839
          %v3855 = vpack.c.b16 %v3842, %v3841
          %v3856 = vpack.c.b16 %v3844, %v3843
          %v3857 = vpack.c.b16 %v3846, %v3845
          %v3858 = vpack.c.b16 %v3848, %v3847
          %v3859 = vpack.c.b16 %v3850, %v3849
          %v3860 = vpack.c.b16 %v3852, %v3851
          %3869 = vmatpush.bf16.msra.mxu0 %v3860
          %3870 = vmatpush.bf16.msra.mxu0 %v3859
          %3871 = vmatpush.bf16.msra.mxu0 %v3858
          %3872 = vmatpush.bf16.msra.mxu0 %v3857
          %3873 = vmatpush.bf16.msra.mxu0 %v3856
          %3874 = vmatpush.bf16.msra.mxu0 %v3855
          %3875 = vmatpush.bf16.msra.mxu0 %v3854
          %3876 = vmatpush.bf16.msra.mxu0 %v3853
          %3877 = vmatmul.bf16.gmra.mxu0 %v3800
          %v3878 = vpop.f32.mrf.mxu0
          %v3879 = vadd.f32 %v3819, %v3878
          %v3880 = vpop.f32.mrf.mxu0
          %3881 = vdwg.mxu0
          %3882 = vst [vmem:[#allocation18] sm:$0x3] %v3879
        $region152: #{tpu_custom_call.1} parent=107 // pred_fallthru
          _
        // Predicated region
        $region153: #{tpu_custom_call.1} parent=107 // pred_check
          %p3883 = pneg %p590
        $region154: #{tpu_custom_call.1} parent=107 // pred_check_branch
          %3885 = sbr.rel (%p3883) target = $region156
        $region155: #{tpu_custom_call.1} parent=107 // pred_region
          %3887 = vsyncadd [#allocation5], 0
          %s3889 = sshll.u32 [#allocation18], 4
          %s3890 = int_to_ptr.vmem [resolvable:$true] %s3889
          %s3891 = sshll.u32 %s22, 4
          %s3892 = int_to_ptr.hbm [resolvable:$true] %s3891
          %3894 = dma.vmem_to_hbm [thread:$0]  %s3890, 32, %s3892, [#allocation5]
        $region156: #{tpu_custom_call.1} parent=107 // pred_fallthru
          _
        // Predicated region
        $region157: #{tpu_custom_call.1} parent=107 // pred_check
          %p3895 = pneg %p590
        $region158: #{tpu_custom_call.1} parent=107 // pred_check_branch
          %3897 = sbr.rel (%p3895) target = $region160
        $region159: #{tpu_custom_call.1} parent=107 // pred_region
          %3899 = dma.done [#allocation5], 32
        $region160: #{tpu_custom_call.1} parent=107 // pred_fallthru
          _
      $region108: #{tpu_custom_call.1} parent=5 // pred_fallthru
        _
      %p3900 = scmp.le.s32.totalorder 2, %s40
      // Predicated region
      $region161: #{tpu_custom_call.1} parent=5 // pred_check
        %p3901 = pneg %p3900
      $region162: #{tpu_custom_call.1} parent=5 // pred_check_branch
        %3903 = sbr.rel (%p3901) target = $region164
      $region163: #{tpu_custom_call.1} parent=5 // pred_region
        %s3904 = ssub.s32 %s40, 2
      $region164: #{tpu_custom_call.1} parent=5 // pred_fallthru
        _
    $region6: #{tpu_custom_call.1} parent=1 // loop_footer
      %s44 = sadd.s32 1, %s40
    $region7: #{tpu_custom_call.1} parent=1 // loop_footer_branch
      %39 = sbr.rel target = $region3
    $region8: #{tpu_custom_call.1} parent=1 // loop_exit
      _
    %3905 = vsyncpa [#allocation4], 1
    %s3906 = scalar_lea.sflag [#allocation4], 1
    %3907 = vsyncpa %s3906, 1
    %3908 = vsyncpa [#allocation7], 1
    %3909 = vsyncpa [#allocation10], 1
    %s3910 = scalar_lea.sflag [#allocation10], 1
    %3911 = vsyncpa %s3910, 1
    %3912 = vsyncpa [#allocation13], 1
    %s3913 = scalar_lea.sflag [#allocation13], 1
    %3914 = vsyncpa %s3913, 1
    %3915 = vsyncpa [#allocation16], 1
    %s3916 = scalar_lea.sflag [#allocation16], 1
    %3917 = vsyncpa %s3916, 1
    %3918 = vsyncpa [#allocation5], 1
    %s3919 = scalar_lea.sflag [#allocation5], 1
    %3920 = vsyncpa %s3919, 1

</llo_original>
